<compile_context>
chip_gen: v7x
topology: tpu7x:2x2x1
jax: 0.10.0
libtpu: 0.0.40
codegen_flags: <defaults>
</compile_context>

<pallas_src>
import collections
import functools
import math

import jax
import jax.numpy as jnp
from jax.experimental import pallas as pl
from jax.experimental.pallas import tpu as pltpu

MXU_DTYPE = jnp.bfloat16          # storage / MXU-operand dtype for weights
# TODO(synk): on v7x the large weights could be stored as fp8 (native MXU
# operand) with per-tensor scales for another 2x weight DMA/VMEM reduction.


def _round_up(x, m):
    return (x + m - 1) // m * m


def _pad_to(a, shape):
    return jnp.pad(a, [(0, t - s) for s, t in zip(a.shape, shape)])


def _vmem_limit_bytes():
    """Generation-aware scoped-VMEM budget: ~75% of physical per-core VMEM
    (~48 MiB on v7x, ~96 MiB on v5e/v6e), capped at 100 MiB."""
    try:
        cap = int(pltpu.get_tpu_info().vmem_capacity_bytes)
    except Exception:
        cap = 128 * 1024 * 1024
    return min(cap * 3 // 4, 100 * 1024 * 1024)


_VMEM_LIMIT = _vmem_limit_bytes()


# ----------------------------------------------------------------------------
# Probe: single-buffered (Buffered(1)) weight BlockSpecs, with safe fallback.
# Must be resolved OUTSIDE jit (called from prepare_params).
# ----------------------------------------------------------------------------
def _probe_kernel(w_ref, o_ref):
    o_ref[...] = w_ref[...] + 1.0


@functools.lru_cache(maxsize=None)
def _weight_pipeline_mode():
    try:
        mode = pl.Buffered(1)
        fn = pl.pallas_call(
            _probe_kernel,
            out_shape=jax.ShapeDtypeStruct((16, 128), jnp.float32),
            grid=(2,),
            in_specs=[pl.BlockSpec((8, 128), lambda i: (0, 0),
                                   pipeline_mode=mode)],
            out_specs=pl.BlockSpec((8, 128), lambda i: (i, 0)),
        )
        jax.block_until_ready(fn(jnp.zeros((8, 128), jnp.float32)))
        return mode
    except Exception:
        return None      # fall back to default double-buffering


def _weight_spec(shape):
    """Full-array BlockSpec with a constant index map (weights resident in
    VMEM across the whole grid); single-buffered when supported."""
    nd = len(shape)
    index_map = lambda bi: (0,) * nd
    mode = _weight_pipeline_mode()
    if mode is not None:
        return pl.BlockSpec(shape, index_map, pipeline_mode=mode)
    return pl.BlockSpec(shape, index_map)


# ----------------------------------------------------------------------------
# In-kernel helpers
# ----------------------------------------------------------------------------
def _masked_layernorm(x, g, b, dim_real, eps=1e-5):
    """LayerNorm over the last axis where only the first `dim_real` columns
    hold real data (the rest are zero padding).  g/b are zero-padded, so the
    output pad columns stay exactly zero."""
    d_pad = x.shape[-1]
    col = jax.lax.broadcasted_iota(jnp.int32, (1, d_pad), 1)
    mask = (col < dim_real).astype(jnp.float32)
    inv_n = 1.0 / float(dim_real)
    mu = jnp.sum(x, axis=-1, keepdims=True) * inv_n      # pad cols are zero
    d = (x - mu) * mask
    var = jnp.sum(d * d, axis=-1, keepdims=True) * inv_n
    return d * jax.lax.rsqrt(var + eps) * g + b


# ----------------------------------------------------------------------------
# Tiled matmul + bias (patch2embed)
# ----------------------------------------------------------------------------
def _matmul_bias_kernel(x_ref, w_ref, b_ref, o_ref, acc_ref):
    @pl.when(pl.program_id(2) == 0)
    def _():
        acc_ref[...] = jnp.zeros_like(acc_ref)

    acc_ref[...] += jnp.dot(x_ref[...], w_ref[...],
                            preferred_element_type=jnp.float32)

    @pl.when(pl.program_id(2) == pl.num_programs(2) - 1)
    def _():
        o_ref[...] = (acc_ref[...] + b_ref[...]).astype(o_ref.dtype)


def _pick_tile(dim, prefs):
    for t in prefs:
        if dim % t == 0:
            return t
    return dim


def matmul_bias(x, w, b):
    """(M, K) @ (K, N) + (1, N) -> (M, N) f32.  M/K/N multiples of 128."""
    M, K = x.shape
    N = w.shape[1]
    tm = _pick_tile(M, (512, 256, 128))
    tn = _pick_tile(N, (256, 128))
    tk = _pick_tile(K, (512, 256, 128))
    grid = (M // tm, N // tn, K // tk)
    return pl.pallas_call(
        _matmul_bias_kernel,
        out_shape=jax.ShapeDtypeStruct((M, N), jnp.float32),
        grid_spec=pltpu.PrefetchScalarGridSpec(
            num_scalar_prefetch=0,
            grid=grid,
            in_specs=[
                pl.BlockSpec((tm, tk), lambda i, j, k: (i, k)),
                pl.BlockSpec((tk, tn), lambda i, j, k: (k, j)),
                pl.BlockSpec((1, tn), lambda i, j, k: (0, j)),
            ],
            out_specs=pl.BlockSpec((tm, tn), lambda i, j, k: (i, j)),
            scratch_shapes=[pltpu.VMEM((tm, tn), jnp.float32)],
        ),
        compiler_params=pltpu.CompilerParams(
            dimension_semantics=("parallel", "parallel", "arbitrary"),
            vmem_limit_bytes=_VMEM_LIMIT),
    )(x, w, b)


# ----------------------------------------------------------------------------
# Fused pre-LN transformer encoder layer
# ----------------------------------------------------------------------------
def _encoder_kernel(num_heads, hd, seq_real, e_real, bb,
                    x_ref,
                    ln1g_ref, ln1b_ref,
                    wqkv_ref, bqkv_ref, wo_ref, bo_ref,
                    ln2g_ref, ln2b_ref,
                    w1_ref, b1_ref, w2_ref, b2_ref,
                    o_ref,
                    qkv_ref, ctx_ref):
    cdt = wqkv_ref.dtype                              # bf16 MXU operand dtype
    _, S_pad, E_pad = x_ref.shape
    Dh = num_heads * hd
    scale = 1.0 / math.sqrt(hd)

    # (bb, S_pad, E_pad) -> flat (bb*S_pad, E_pad) rows for all dense matmuls.
    x = x_ref[...].reshape(bb * S_pad, E_pad)

    # ---- multi-head self-attention (pre-LN) ---------------------------------
    h = _masked_layernorm(x, ln1g_ref[...], ln1b_ref[...], e_real)
    # Fused Q/K/V projection: one wide MXU matmul (bf16 operands, f32 acc),
    # staged through a VMEM scratch so per-head slices are plain ref loads.
    qkv_ref[...] = jnp.dot(h.astype(cdt), wqkv_ref[...],
                           preferred_element_type=jnp.float32) + bqkv_ref[...]

    key_mask = jax.lax.broadcasted_iota(jnp.int32, (1, S_pad), 1) < seq_real

    # Attention per image / per head (static, fully unrolled).  Per-head
    # context is packed into ctx_ref so the output projection is a single
    # (rows, Dh) @ (Dh, E_pad) matmul (accumulation stays inside the MXU).
    for bi in range(bb):
        r0 = bi * S_pad
        for hi in range(num_heads):
            qh = qkv_ref[pl.ds(r0, S_pad), pl.ds(hi * hd, hd)].astype(cdt)
            kh = qkv_ref[pl.ds(r0, S_pad), pl.ds(Dh + hi * hd, hd)].astype(cdt)
            vh = qkv_ref[pl.ds(r0, S_pad),
                         pl.ds(2 * Dh + hi * hd, hd)].astype(cdt)
            s = jax.lax.dot_general(qh, kh, (((1,), (1,)), ((), ())),
                                    preferred_element_type=jnp.float32) * scale
            s = jnp.where(key_mask, s, jnp.float32(-1e30))   # mask padded keys
            s = s - jnp.max(s, axis=-1, keepdims=True)
            p = jnp.exp(s)
            p = p * pl.reciprocal(jnp.sum(p, axis=-1, keepdims=True),
                                  approx=True)
            ctx_ref[pl.ds(r0, S_pad), pl.ds(hi * hd, hd)] = jnp.dot(
                p.astype(cdt), vh, preferred_element_type=jnp.float32)

    attn = jnp.dot(ctx_ref[...].astype(cdt), wo_ref[...],
                   preferred_element_type=jnp.float32) + bo_ref[...]
    x1 = x + attn

    # ---- MLP -----------------------------------------------------------------
    h2 = _masked_layernorm(x1, ln2g_ref[...], ln2b_ref[...], e_real)
    m = jnp.dot(h2.astype(cdt), w1_ref[...],
                preferred_element_type=jnp.float32) + b1_ref[...]
    # TODO(synk): torch nn.GELU defaults to exact erf GELU; tanh-approx used
    # here for guaranteed Mosaic lowering.
    m = jax.nn.gelu(m, approximate=True)
    m = jnp.dot(m.astype(cdt), w2_ref[...],
                preferred_element_type=jnp.float32) + b2_ref[...]

    # TODO(synk): residual stream could be emitted as bf16 on v5e to halve
    # per-layer activation HBM traffic (kept f32 here for numeric parity).
    o_ref[...] = (x1 + m).reshape(bb, S_pad, E_pad).astype(o_ref.dtype)


def encoder_layer(x, lp, *, num_heads, hd, seq_real, e_real, bb):
    B, S_pad, E_pad = x.shape
    Dh = num_heads * hd
    Hmlp_pad = lp["w1"].shape[1]

    kernel = functools.partial(_encoder_kernel, num_heads, hd, seq_real,
                               e_real, bb)
    return pl.pallas_call(
        kernel,
        out_shape=jax.ShapeDtypeStruct((B, S_pad, E_pad), x.dtype),
        grid_spec=pltpu.PrefetchScalarGridSpec(
            num_scalar_prefetch=0,
            grid=(B // bb,),
            in_specs=[
                pl.BlockSpec((bb, S_pad, E_pad), lambda bi: (bi, 0, 0)),
                _weight_spec((1, E_pad)), _weight_spec((1, E_pad)),    # ln1
                _weight_spec((E_pad, 3 * Dh)), _weight_spec((1, 3 * Dh)),  # qkv
                _weight_spec((Dh, E_pad)), _weight_spec((1, E_pad)),   # out proj
                _weight_spec((1, E_pad)), _weight_spec((1, E_pad)),    # ln2
                _weight_spec((E_pad, Hmlp_pad)), _weight_spec((1, Hmlp_pad)),
                _weight_spec((Hmlp_pad, E_pad)), _weight_spec((1, E_pad)),
            ],
            out_specs=pl.BlockSpec((bb, S_pad, E_pad), lambda bi: (bi, 0, 0)),
            scratch_shapes=[
                pltpu.VMEM((bb * S_pad, 3 * Dh), jnp.float32),   # qkv
                pltpu.VMEM((bb * S_pad, Dh), jnp.float32),       # packed ctx
            ],
        ),
        compiler_params=pltpu.CompilerParams(
            dimension_semantics=("parallel",),
            vmem_limit_bytes=_VMEM_LIMIT),
    )(x,
      lp["ln1_g"], lp["ln1_b"],
      lp["wqkv"], lp["bqkv"], lp["wo"], lp["bo"],
      lp["ln2_g"], lp["ln2_b"],
      lp["w1"], lp["b1"], lp["w2"], lp["b2"])


# ----------------------------------------------------------------------------
# Classification head (LayerNorm -> Linear), lane-padded output
# ----------------------------------------------------------------------------
def _head_kernel(e_real, x_ref, g_ref, b_ref, w_ref, bias_ref, o_ref):
    h = _masked_layernorm(x_ref[...], g_ref[...], b_ref[...], e_real)
    y = jnp.dot(h.astype(w_ref.dtype), w_ref[...],
                preferred_element_type=jnp.float32) + bias_ref[...]
    o_ref[...] = y.astype(o_ref.dtype)


def mlp_head(x, hp, e_real):
    Bp, _ = x.shape
    Cp = hp["w"].shape[1]
    return pl.pallas_call(
        functools.partial(_head_kernel, e_real),
        out_shape=jax.ShapeDtypeStruct((Bp, Cp), jnp.float32),
        compiler_params=pltpu.CompilerParams(vmem_limit_bytes=_VMEM_LIMIT),
    )(x, hp["ln_g"], hp["ln_b"], hp["w"], hp["b"])


# ----------------------------------------------------------------------------
# One-time parameter preparation (padding + bf16 cast), OUTSIDE the jit path
# ----------------------------------------------------------------------------
ViTConfig = collections.namedtuple(
    "ViTConfig",
    ["patch_size", "num_heads", "embed_dim", "head_dim", "seq_len",
     "num_classes"])


def prepare_params(params, image_dim, patch_size, num_heads):
    _weight_pipeline_mode()            # resolve the Buffered(1) probe eagerly

    P, E = params["patch_w"].shape
    Hmlp = params["layers"][0]["w1"].shape[1]
    num_classes = params["head"]["w"].shape[1]
    num_patches = (image_dim // patch_size) ** 2
    S = num_patches + 1
    hd = E // num_heads

    E_pad = _round_up(E, 128)
    P_pad = _round_up(P, 128)
    S_pad = _round_up(S, 8)
    Hmlp_pad = _round_up(Hmlp, 128)
    C_pad = _round_up(num_classes, 128)

    # cls token folded into positional-embedding row 0 (one-time).
    pos = _pad_to(params["pos_embedding"], (1, S_pad, E_pad))
    cls = _pad_to(params["cls_token"], (1, 1, E_pad))
    pos_cls = pos.at[:, 0:1, :].add(cls)

    prepped = {
        "patch_w": _pad_to(params["patch_w"], (P_pad, E_pad)).astype(MXU_DTYPE),
        "patch_b": _pad_to(params["patch_b"], (1, E_pad)),
        "pos_cls": pos_cls,
        "layers": [],
        "head": {
            "ln_g": _pad_to(params["head"]["ln_g"], (1, E_pad)),
            "ln_b": _pad_to(params["head"]["ln_b"], (1, E_pad)),
            "w": _pad_to(params["head"]["w"], (E_pad, C_pad)).astype(MXU_DTYPE),
            "b": _pad_to(params["head"]["b"], (1, C_pad)),
        },
    }
    for lp in params["layers"]:
        wqkv = jnp.concatenate([lp["wq"], lp["wk"], lp["wv"]], axis=1)
        bqkv = jnp.concatenate([lp["bq"], lp["bk"], lp["bv"]], axis=1)
        prepped["layers"].append({
            "ln1_g": _pad_to(lp["ln1_g"], (1, E_pad)),
            "ln1_b": _pad_to(lp["ln1_b"], (1, E_pad)),
            "wqkv": _pad_to(wqkv, (E_pad, 3 * E)).astype(MXU_DTYPE),
            "bqkv": bqkv,
            "wo": _pad_to(lp["wo"], (E, E_pad)).astype(MXU_DTYPE),
            "bo": _pad_to(lp["bo"], (1, E_pad)),
            "ln2_g": _pad_to(lp["ln2_g"], (1, E_pad)),
            "ln2_b": _pad_to(lp["ln2_b"], (1, E_pad)),
            "w1": _pad_to(lp["w1"], (E_pad, Hmlp_pad)).astype(MXU_DTYPE),
            "b1": _pad_to(lp["b1"], (1, Hmlp_pad)),
            "w2": _pad_to(lp["w2"], (Hmlp_pad, E_pad)).astype(MXU_DTYPE),
            "b2": _pad_to(lp["b2"], (1, E_pad)),
        })

    cfg = ViTConfig(patch_size=patch_size, num_heads=num_heads, embed_dim=E,
                    head_dim=hd, seq_len=S, num_classes=num_classes)
    return prepped, cfg


def _pick_bb(batch):
    # Feed the MXU larger M by processing a few images per encoder grid step,
    # but keep >=2 grid steps so both v7x TensorCores get work.
    for bb in (4, 2):
        if batch % bb == 0 and batch // bb >= 2:
            return bb
    return 1


# ----------------------------------------------------------------------------
# Full forward pass (glue in plain JAX, hot path in Pallas)
# ----------------------------------------------------------------------------
@functools.partial(jax.jit, static_argnums=(2,))
def vit_forward(x, prepped, cfg):
    B, C, Himg, Wimg = x.shape
    p = cfg.patch_size
    E = cfg.embed_dim
    S = cfg.seq_len
    num_patches = (Himg // p) * (Wimg // p)
    P = C * p * p
    P_pad, E_pad = prepped["patch_w"].shape
    S_pad = prepped["pos_cls"].shape[1]
    M = B * num_patches
    M_pad = _round_up(M, 128)
    B_pad = _round_up(B, 8)

    # PatchEmbedding: (B, C, H, W) -> (B*N, C*p*p)     [pure reshape glue]
    xp = x.reshape(B, C, Himg // p, p, Wimg // p, p)
    xp = xp.transpose(0, 2, 4, 1, 3, 5).reshape(M, P)
    xp = _pad_to(xp, (M_pad, P_pad)).astype(MXU_DTYPE)

    # patch2embed linear on MXU-shaped tiles (Pallas)
    emb = matmul_bias(xp, prepped["patch_w"], prepped["patch_b"])
    emb = emb[:M].reshape(B, num_patches, E_pad)

    # cls row (front pad) + positional embedding (cls folded into pos_cls);
    # dropout p=0.0 is the identity.
    h = jnp.pad(emb, ((0, 0), (1, S_pad - S), (0, 0)))
    h = h + prepped["pos_cls"]

    # transformer encoder stack (one fused Pallas kernel per layer)
    bb = _pick_bb(B)
    for lp in prepped["layers"]:
        h = encoder_layer(h, lp, num_heads=cfg.num_heads, hd=cfg.head_dim,
                          seq_real=S, e_real=E, bb=bb)

    # classification head on the cls token
    cls_tok = _pad_to(h[:, 0, :], (B_pad, E_pad))
    logits = mlp_head(cls_tok, prepped["head"], E)
    return logits[:B, :cfg.num_classes]


# ----------------------------------------------------------------------------
# Deterministic parameter construction (f32, PyTorch-like)
# ----------------------------------------------------------------------------
def init_params(key, image_dim, embed_dim, hidden_dim, num_channels,
                num_layers, num_classes, patch_size):
    num_patches = image_dim * image_dim // patch_size ** 2
    patch_dim = num_channels * patch_size * patch_size
    keys = iter(jax.random.split(key, 8 + 12 * num_layers))

    def w(shape, scale=0.02):
        return (scale * jax.random.normal(next(keys), shape)).astype(jnp.float32)

    params = {
        "patch_w": w((patch_dim, embed_dim)),
        "patch_b": jnp.zeros((1, embed_dim), jnp.float32),
        "cls_token": jnp.zeros((1, 1, embed_dim), jnp.float32),
        "pos_embedding": jax.random.normal(
            next(keys), (1, num_patches + 1, embed_dim)).astype(jnp.float32),
        "layers": [],
        "head": {
            "ln_g": jnp.ones((1, embed_dim), jnp.float32),
            "ln_b": jnp.zeros((1, embed_dim), jnp.float32),
            "w": w((embed_dim, num_classes)),
            "b": jnp.zeros((1, num_classes), jnp.float32),
        },
    }
    for _ in range(num_layers):
        params["layers"].append({
            "ln1_g": jnp.ones((1, embed_dim), jnp.float32),
            "ln1_b": jnp.zeros((1, embed_dim), jnp.float32),
            "wq": w((embed_dim, embed_dim)), "bq": jnp.zeros((1, embed_dim)),
            "wk": w((embed_dim, embed_dim)), "bk": jnp.zeros((1, embed_dim)),
            "wv": w((embed_dim, embed_dim)), "bv": jnp.zeros((1, embed_dim)),
            "wo": w((embed_dim, embed_dim)), "bo": jnp.zeros((1, embed_dim)),
            "ln2_g": jnp.ones((1, embed_dim), jnp.float32),
            "ln2_b": jnp.zeros((1, embed_dim), jnp.float32),
            "w1": w((embed_dim, hidden_dim)), "b1": jnp.zeros((1, hidden_dim)),
            "w2": w((hidden_dim, embed_dim)), "b2": jnp.zeros((1, embed_dim)),
        })
    return params


if __name__ == "__main__":
    image_dim = 16
    embed_dim = 32
    hidden_dim = 64
    num_channels = 4
    num_heads = 4
    num_layers = 2
    num_classes = 10
    patch_size = 4
    batch = 2

    key = jax.random.PRNGKey(0)
    k_params, k_x = jax.random.split(key)
    params = init_params(k_params, image_dim, embed_dim, hidden_dim,
                         num_channels, num_layers, num_classes, patch_size)
    x = jax.random.normal(k_x, (batch, num_channels, image_dim, image_dim),
                          dtype=jnp.float32)

    # One-time weight padding / bf16 casting, outside the jit hot path.
    prepped, cfg = prepare_params(params, image_dim, patch_size, num_heads)

    out = vit_forward(x, prepped, cfg)
    out = jax.block_until_ready(out)
    assert out.shape == (batch, num_classes)
    print("KERNEL_OK")
</pallas_src>

<mosaic_0001>
module attributes {stable_mosaic.version = 11 : i64} {
  func.func @_probe_kernel(%arg0: i32, %arg1: memref<8x128xf32, #tpu.memory_space<vmem>>, %arg2: memref<8x128xf32, #tpu.memory_space<vmem>>) attributes {dimension_semantics = [#tpu.dimension_semantics<arbitrary>], iteration_bounds = array<i64: 2>, scalar_prefetch = 0 : i64, scratch_operands = 0 : i64, tpu.core_type = #tpu.core_type<tc>, window_params = [{pipeline_mode = #tpu.pipeline_mode<synchronous>, transform_indices = @transform_0, window_bounds = array<i64: 8, 128>}, {transform_indices = @transform_1, window_bounds = array<i64: 8, 128>}]} {
    %c0 = arith.constant 0 : index
    %c0_0 = arith.constant 0 : index
    %0 = vector.load %arg1[%c0, %c0_0] : memref<8x128xf32, #tpu.memory_space<vmem>>, vector<8x128xf32>
    %cst = arith.constant 1.000000e+00 : f32
    %1 = vector.broadcast %cst : f32 to vector<8x128xf32>
    %2 = arith.addf %0, %1 : vector<8x128xf32>
    %c0_1 = arith.constant 0 : index
    %c0_2 = arith.constant 0 : index
    %3 = vector.load %arg2[%c0_1, %c0_2] : memref<8x128xf32, #tpu.memory_space<vmem>>, vector<8x128xf32>
    tpu.vector_store %arg2[%c0_1, %c0_2], %2 {strides = array<i32>} : memref<8x128xf32, #tpu.memory_space<vmem>>, vector<8x128xf32>,
    return
  }
  func.func @transform_0(%arg0: i32) -> (i32, i32) {
    %c0_i32 = arith.constant 0 : i32
    %c0_i32_0 = arith.constant 0 : i32
    %c0_i32_1 = arith.constant 0 : i32
    return %c0_i32, %c0_i32_0 : i32, i32
  }
  func.func @transform_1(%arg0: i32) -> (i32, i32) {
    %c0_i32 = arith.constant 0 : i32
    %c0_i32_0 = arith.constant 0 : i32
    return %arg0, %c0_i32 : i32, i32
  }
}

module attributes {stable_mosaic.version = 11 : i64} {
  func.func @_matmul_bias_kernel(%arg0: i32, %arg1: i32, %arg2: i32, %arg3: memref<128x128xbf16, #tpu.memory_space<vmem>>, %arg4: memref<128x128xbf16, #tpu.memory_space<vmem>>, %arg5: memref<1x128xf32, #tpu.memory_space<vmem>>, %arg6: memref<128x128xf32, #tpu.memory_space<vmem>>, %arg7: memref<128x128xf32, #tpu.memory_space<vmem>>) attributes {dimension_semantics = [#tpu.dimension_semantics<parallel>, #tpu.dimension_semantics<parallel>, #tpu.dimension_semantics<arbitrary>], iteration_bounds = array<i64: 1, 1, 1>, scalar_prefetch = 0 : i64, scratch_operands = 1 : i64, tpu.core_type = #tpu.core_type<tc>, window_params = [{transform_indices = @transform_0, window_bounds = array<i64: 128, 128>}, {transform_indices = @transform_1, window_bounds = array<i64: 128, 128>}, {transform_indices = @transform_2, window_bounds = array<i64: 1, 128>}, {transform_indices = @transform_3, window_bounds = array<i64: 128, 128>}]} {
    %c0_i32 = arith.constant 0 : i32
    %0 = arith.cmpi eq, %arg2, %c0_i32 : i32
    %1 = arith.extui %0 : i1 to i32
    %c0_i32_0 = arith.constant 0 : i32
    %2 = arith.cmpi ne, %1, %c0_i32_0 : i32
    scf.if %2 {
      %cst_10 = arith.constant 0.000000e+00 : f32
      %12 = vector.broadcast %cst_10 : f32 to vector<128x128xf32>
      %c0_11 = arith.constant 0 : index
      %c0_12 = arith.constant 0 : index
      %13 = vector.load %arg7[%c0_11, %c0_12] : memref<128x128xf32, #tpu.memory_space<vmem>>, vector<128x128xf32>
      tpu.vector_store %arg7[%c0_11, %c0_12], %12 {strides = array<i32>} : memref<128x128xf32, #tpu.memory_space<vmem>>, vector<128x128xf32>,
    } else {
    }
    %c0 = arith.constant 0 : index
    %c0_1 = arith.constant 0 : index
    %3 = vector.load %arg7[%c0, %c0_1] : memref<128x128xf32, #tpu.memory_space<vmem>>, vector<128x128xf32>
    %c0_2 = arith.constant 0 : index
    %c0_3 = arith.constant 0 : index
    %4 = vector.load %arg3[%c0_2, %c0_3] : memref<128x128xbf16, #tpu.memory_space<vmem>>, vector<128x128xbf16>
    %c0_4 = arith.constant 0 : index
    %c0_5 = arith.constant 0 : index
    %5 = vector.load %arg4[%c0_4, %c0_5] : memref<128x128xbf16, #tpu.memory_space<vmem>>, vector<128x128xbf16>
    %cst = arith.constant dense<0.000000e+00> : vector<128x128xf32>
    %6 = tpu.matmul %4, %5, %cst {dimension_numbers = #tpu.dot_dimension_numbers<[1], [0], [0], [1], [0, 0, 1, 1], [], []>} : vector<128x128xbf16>, vector<128x128xbf16>, vector<128x128xf32> -> vector<128x128xf32>
    %7 = arith.addf %3, %6 : vector<128x128xf32>
    %c0_6 = arith.constant 0 : index
    %c0_7 = arith.constant 0 : index
    %8 = vector.load %arg7[%c0_6, %c0_7] : memref<128x128xf32, #tpu.memory_space<vmem>>, vector<128x128xf32>
    tpu.vector_store %arg7[%c0_6, %c0_7], %7 {strides = array<i32>} : memref<128x128xf32, #tpu.memory_space<vmem>>, vector<128x128xf32>,
    %c0_i32_8 = arith.constant 0 : i32
    %9 = arith.cmpi eq, %arg2, %c0_i32_8 : i32
    %10 = arith.extui %9 : i1 to i32
    %c0_i32_9 = arith.constant 0 : i32
    %11 = arith.cmpi ne, %10, %c0_i32_9 : i32
    scf.if %11 {
      %c0_10 = arith.constant 0 : index
      %c0_11 = arith.constant 0 : index
      %12 = vector.load %arg7[%c0_10, %c0_11] : memref<128x128xf32, #tpu.memory_space<vmem>>, vector<128x128xf32>
      %c0_12 = arith.constant 0 : index
      %c0_13 = arith.constant 0 : index
      %13 = vector.load %arg5[%c0_12, %c0_13] : memref<1x128xf32, #tpu.memory_space<vmem>>, vector<1x128xf32>
      %14 = vector.broadcast %13 : vector<1x128xf32> to vector<128x128xf32>
      %15 = arith.addf %12, %14 : vector<128x128xf32>
      %c0_14 = arith.constant 0 : index
      %c0_15 = arith.constant 0 : index
      %16 = vector.load %arg6[%c0_14, %c0_15] : memref<128x128xf32, #tpu.memory_space<vmem>>, vector<128x128xf32>
      tpu.vector_store %arg6[%c0_14, %c0_15], %15 {strides = array<i32>} : memref<128x128xf32, #tpu.memory_space<vmem>>, vector<128x128xf32>,
    } else {
    }
    return
  }
  func.func @transform_0(%arg0: i32, %arg1: i32, %arg2: i32) -> (i32, i32) {
    %c0_i32 = arith.constant 0 : i32
    return %arg0, %arg2 : i32, i32
  }
  func.func @transform_1(%arg0: i32, %arg1: i32, %arg2: i32) -> (i32, i32) {
    %c0_i32 = arith.constant 0 : i32
    return %arg2, %arg1 : i32, i32
  }
  func.func @transform_2(%arg0: i32, %arg1: i32, %arg2: i32) -> (i32, i32) {
    %c0_i32 = arith.constant 0 : i32
    %c0_i32_0 = arith.constant 0 : i32
    return %c0_i32, %arg1 : i32, i32
  }
  func.func @transform_3(%arg0: i32, %arg1: i32, %arg2: i32) -> (i32, i32) {
    %c0_i32 = arith.constant 0 : i32
    return %arg0, %arg1 : i32, i32
  }
}

module attributes {stable_mosaic.version = 11 : i64} {
  func.func @_encoder_kernel(%arg0: i32, %arg1: memref<1x24x128xf32, #tpu.memory_space<vmem>>, %arg2: memref<1x128xf32, #tpu.memory_space<vmem>>, %arg3: memref<1x128xf32, #tpu.memory_space<vmem>>, %arg4: memref<128x96xbf16, #tpu.memory_space<vmem>>, %arg5: memref<1x96xf32, #tpu.memory_space<vmem>>, %arg6: memref<32x128xbf16, #tpu.memory_space<vmem>>, %arg7: memref<1x128xf32, #tpu.memory_space<vmem>>, %arg8: memref<1x128xf32, #tpu.memory_space<vmem>>, %arg9: memref<1x128xf32, #tpu.memory_space<vmem>>, %arg10: memref<128x128xbf16, #tpu.memory_space<vmem>>, %arg11: memref<1x128xf32, #tpu.memory_space<vmem>>, %arg12: memref<128x128xbf16, #tpu.memory_space<vmem>>, %arg13: memref<1x128xf32, #tpu.memory_space<vmem>>, %arg14: memref<1x24x128xf32, #tpu.memory_space<vmem>>, %arg15: memref<24x96xf32, #tpu.memory_space<vmem>>, %arg16: memref<24x32xf32, #tpu.memory_space<vmem>>) attributes {dimension_semantics = [#tpu.dimension_semantics<parallel>], iteration_bounds = array<i64: 2>, scalar_prefetch = 0 : i64, scratch_operands = 2 : i64, tpu.core_type = #tpu.core_type<tc>, window_params = [{transform_indices = @transform_0, window_bounds = array<i64: 1, 24, 128>}, {pipeline_mode = #tpu.pipeline_mode<synchronous>, transform_indices = @transform_1, window_bounds = array<i64: 1, 128>}, {pipeline_mode = #tpu.pipeline_mode<synchronous>, transform_indices = @transform_2, window_bounds = array<i64: 1, 128>}, {pipeline_mode = #tpu.pipeline_mode<synchronous>, transform_indices = @transform_3, window_bounds = array<i64: 128, 96>}, {pipeline_mode = #tpu.pipeline_mode<synchronous>, transform_indices = @transform_4, window_bounds = array<i64: 1, 96>}, {pipeline_mode = #tpu.pipeline_mode<synchronous>, transform_indices = @transform_5, window_bounds = array<i64: 32, 128>}, {pipeline_mode = #tpu.pipeline_mode<synchronous>, transform_indices = @transform_6, window_bounds = array<i64: 1, 128>}, {pipeline_mode = #tpu.pipeline_mode<synchronous>, transform_indices = @transform_7, window_bounds = array<i64: 1, 128>}, {pipeline_mode = #tpu.pipeline_mode<synchronous>, transform_indices = @transform_8, window_bounds = array<i64: 1, 128>}, {pipeline_mode = #tpu.pipeline_mode<synchronous>, transform_indices = @transform_9, window_bounds = array<i64: 128, 128>}, {pipeline_mode = #tpu.pipeline_mode<synchronous>, transform_indices = @transform_10, window_bounds = array<i64: 1, 128>}, {pipeline_mode = #tpu.pipeline_mode<synchronous>, transform_indices = @transform_11, window_bounds = array<i64: 128, 128>}, {pipeline_mode = #tpu.pipeline_mode<synchronous>, transform_indices = @transform_12, window_bounds = array<i64: 1, 128>}, {transform_indices = @transform_13, window_bounds = array<i64: 1, 24, 128>}]} {
    %c0 = arith.constant 0 : index
    %c0_0 = arith.constant 0 : index
    %c0_1 = arith.constant 0 : index
    %0 = vector.load %arg1[%c0, %c0_0, %c0_1] : memref<1x24x128xf32, #tpu.memory_space<vmem>>, vector<1x24x128xf32>
    %1 = vector.shape_cast %0 : vector<1x24x128xf32> to vector<24x128xf32>
    %c0_2 = arith.constant 0 : index
    %c0_3 = arith.constant 0 : index
    %2 = vector.load %arg2[%c0_2, %c0_3] : memref<1x128xf32, #tpu.memory_space<vmem>>, vector<1x128xf32>
    %c0_4 = arith.constant 0 : index
    %c0_5 = arith.constant 0 : index
    %3 = vector.load %arg3[%c0_4, %c0_5] : memref<1x128xf32, #tpu.memory_space<vmem>>, vector<1x128xf32>
    %4 = tpu.iota {dimensions = array<i32: 1>} : vector<1x128xi32>
    %c32_i32 = arith.constant 32 : i32
    %5 = vector.broadcast %c32_i32 : i32 to vector<1x128xi32>
    %6 = arith.cmpi slt, %4, %5 : vector<1x128xi32>
    %7 = arith.extui %6 : vector<1x128xi1> to vector<1x128xi32>
    %8 = arith.sitofp %7 : vector<1x128xi32> to vector<1x128xf32>
    %cst = arith.constant dense<0.000000e+00> : vector<24xf32>
    %9 = vector.multi_reduction <add>, %1, %cst [1] : vector<24x128xf32> to vector<24xf32>
    %10 = vector.shape_cast %9 : vector<24xf32> to vector<24x1xf32>
    %cst_6 = arith.constant 3.125000e-02 : f32
    %11 = vector.broadcast %cst_6 : f32 to vector<24x1xf32>
    %12 = arith.mulf %10, %11 : vector<24x1xf32>
    %13 = vector.broadcast %12 : vector<24x1xf32> to vector<24x128xf32>
    %14 = arith.subf %1, %13 : vector<24x128xf32>
    %15 = vector.broadcast %8 : vector<1x128xf32> to vector<24x128xf32>
    %16 = arith.mulf %14, %15 : vector<24x128xf32>
    %17 = arith.mulf %16, %16 : vector<24x128xf32>
    %cst_7 = arith.constant dense<0.000000e+00> : vector<24xf32>
    %18 = vector.multi_reduction <add>, %17, %cst_7 [1] : vector<24x128xf32> to vector<24xf32>
    %19 = vector.shape_cast %18 : vector<24xf32> to vector<24x1xf32>
    %cst_8 = arith.constant 3.125000e-02 : f32
    %20 = vector.broadcast %cst_8 : f32 to vector<24x1xf32>
    %21 = arith.mulf %19, %20 : vector<24x1xf32>
    %cst_9 = arith.constant 9.99999974E-6 : f32
    %22 = vector.broadcast %cst_9 : f32 to vector<24x1xf32>
    %23 = arith.addf %21, %22 : vector<24x1xf32>
    %24 = math.rsqrt %23 : vector<24x1xf32>
    %25 = vector.broadcast %24 : vector<24x1xf32> to vector<24x128xf32>
    %26 = arith.mulf %16, %25 : vector<24x128xf32>
    %27 = vector.broadcast %2 : vector<1x128xf32> to vector<24x128xf32>
    %28 = arith.mulf %26, %27 : vector<24x128xf32>
    %29 = vector.broadcast %3 : vector<1x128xf32> to vector<24x128xf32>
    %30 = arith.addf %28, %29 : vector<24x128xf32>
    %31 = arith.truncf %30 : vector<24x128xf32> to vector<24x128xbf16>
    %c0_10 = arith.constant 0 : index
    %c0_11 = arith.constant 0 : index
    %32 = vector.load %arg4[%c0_10, %c0_11] : memref<128x96xbf16, #tpu.memory_space<vmem>>, vector<128x96xbf16>
    %cst_12 = arith.constant dense<0.000000e+00> : vector<24x96xf32>
    %33 = tpu.matmul %31, %32, %cst_12 {dimension_numbers = #tpu.dot_dimension_numbers<[1], [0], [0], [1], [0, 0, 1, 1], [], []>} : vector<24x128xbf16>, vector<128x96xbf16>, vector<24x96xf32> -> vector<24x96xf32>
    %c0_13 = arith.constant 0 : index
    %c0_14 = arith.constant 0 : index
    %34 = vector.load %arg5[%c0_13, %c0_14] : memref<1x96xf32, #tpu.memory_space<vmem>>, vector<1x96xf32>
    %35 = vector.broadcast %34 : vector<1x96xf32> to vector<24x96xf32>
    %36 = arith.addf %33, %35 : vector<24x96xf32>
    %c0_15 = arith.constant 0 : index
    %c0_16 = arith.constant 0 : index
    %37 = vector.load %arg15[%c0_15, %c0_16] : memref<24x96xf32, #tpu.memory_space<vmem>>, vector<24x96xf32>
    tpu.vector_store %arg15[%c0_15, %c0_16], %36 {strides = array<i32>} : memref<24x96xf32, #tpu.memory_space<vmem>>, vector<24x96xf32>,
    %38 = tpu.iota {dimensions = array<i32: 1>} : vector<1x24xi32>
    %c17_i32 = arith.constant 17 : i32
    %39 = vector.broadcast %c17_i32 : i32 to vector<1x24xi32>
    %40 = arith.cmpi slt, %38, %39 : vector<1x24xi32>
    %c0_17 = arith.constant 0 : index
    %c0_18 = arith.constant 0 : index
    %41 = vector.load %arg15[%c0_17, %c0_18] : memref<24x96xf32, #tpu.memory_space<vmem>>, vector<24x8xf32>
    %42 = arith.truncf %41 : vector<24x8xf32> to vector<24x8xbf16>
    %c0_19 = arith.constant 0 : index
    %c32 = arith.constant 32 : index
    %43 = vector.load %arg15[%c0_19, %c32] : memref<24x96xf32, #tpu.memory_space<vmem>>, vector<24x8xf32>
    %44 = arith.truncf %43 : vector<24x8xf32> to vector<24x8xbf16>
    %c0_20 = arith.constant 0 : index
    %c64 = arith.constant 64 : index
    %45 = vector.load %arg15[%c0_20, %c64] : memref<24x96xf32, #tpu.memory_space<vmem>>, vector<24x8xf32>
    %46 = arith.truncf %45 : vector<24x8xf32> to vector<24x8xbf16>
    %cst_21 = arith.constant dense<0.000000e+00> : vector<24x24xf32>
    %47 = tpu.matmul %42, %44, %cst_21 {dimension_numbers = #tpu.dot_dimension_numbers<[1], [1], [0], [0], [0, 0, 1, 0], [], []>} : vector<24x8xbf16>, vector<24x8xbf16>, vector<24x24xf32> -> vector<24x24xf32>
    %cst_22 = arith.constant 0.353553385 : f32
    %48 = vector.broadcast %cst_22 : f32 to vector<24x24xf32>
    %49 = arith.mulf %47, %48 : vector<24x24xf32>
    %cst_23 = arith.constant -1.000000e+30 : f32
    %50 = vector.shape_cast %40 : vector<1x24xi1> to vector<1x24xi1>
    %51 = vector.broadcast %50 : vector<1x24xi1> to vector<24x24xi1>
    %52 = vector.broadcast %cst_23 : f32 to vector<24x24xf32>
    %53 = arith.select %51, %49, %52 : vector<24x24xi1>, vector<24x24xf32>
    %cst_24 = arith.constant dense<0xFF800000> : vector<24xf32>
    %54 = vector.multi_reduction <maximumf>, %53, %cst_24 [1] : vector<24x24xf32> to vector<24xf32>
    %55 = vector.shape_cast %54 : vector<24xf32> to vector<24x1xf32>
    %56 = vector.broadcast %55 : vector<24x1xf32> to vector<24x24xf32>
    %57 = arith.subf %53, %56 : vector<24x24xf32>
    %58 = math.exp %57 : vector<24x24xf32>
    %cst_25 = arith.constant dense<0.000000e+00> : vector<24xf32>
    %59 = vector.multi_reduction <add>, %58, %cst_25 [1] : vector<24x24xf32> to vector<24xf32>
    %60 = vector.shape_cast %59 : vector<24xf32> to vector<24x1xf32>
    %61 = tpu.reciprocal %60 {approx = true} : vector<24x1xf32> -> vector<24x1xf32>
    %62 = vector.broadcast %61 : vector<24x1xf32> to vector<24x24xf32>
    %63 = arith.mulf %58, %62 : vector<24x24xf32>
    %64 = arith.truncf %63 : vector<24x24xf32> to vector<24x24xbf16>
    %cst_26 = arith.constant dense<0.000000e+00> : vector<24x8xf32>
    %65 = tpu.matmul %64, %46, %cst_26 {dimension_numbers = #tpu.dot_dimension_numbers<[1], [0], [0], [1], [0, 0, 1, 1], [], []>} : vector<24x24xbf16>, vector<24x8xbf16>, vector<24x8xf32> -> vector<24x8xf32>
    %c0_27 = arith.constant 0 : index
    %c0_28 = arith.constant 0 : index
    %66 = vector.load %arg16[%c0_27, %c0_28] : memref<24x32xf32, #tpu.memory_space<vmem>>, vector<24x8xf32>
    tpu.vector_store %arg16[%c0_27, %c0_28], %65 {strides = array<i32>} : memref<24x32xf32, #tpu.memory_space<vmem>>, vector<24x8xf32>,
    %c0_29 = arith.constant 0 : index
    %c8 = arith.constant 8 : index
    %67 = vector.load %arg15[%c0_29, %c8] : memref<24x96xf32, #tpu.memory_space<vmem>>, vector<24x8xf32>
    %68 = arith.truncf %67 : vector<24x8xf32> to vector<24x8xbf16>
    %c0_30 = arith.constant 0 : index
    %c40 = arith.constant 40 : index
    %69 = vector.load %arg15[%c0_30, %c40] : memref<24x96xf32, #tpu.memory_space<vmem>>, vector<24x8xf32>
    %70 = arith.truncf %69 : vector<24x8xf32> to vector<24x8xbf16>
    %c0_31 = arith.constant 0 : index
    %c72 = arith.constant 72 : index
    %71 = vector.load %arg15[%c0_31, %c72] : memref<24x96xf32, #tpu.memory_space<vmem>>, vector<24x8xf32>
    %72 = arith.truncf %71 : vector<24x8xf32> to vector<24x8xbf16>
    %cst_32 = arith.constant dense<0.000000e+00> : vector<24x24xf32>
    %73 = tpu.matmul %68, %70, %cst_32 {dimension_numbers = #tpu.dot_dimension_numbers<[1], [1], [0], [0], [0, 0, 1, 0], [], []>} : vector<24x8xbf16>, vector<24x8xbf16>, vector<24x24xf32> -> vector<24x24xf32>
    %cst_33 = arith.constant 0.353553385 : f32
    %74 = vector.broadcast %cst_33 : f32 to vector<24x24xf32>
    %75 = arith.mulf %73, %74 : vector<24x24xf32>
    %cst_34 = arith.constant -1.000000e+30 : f32
    %76 = vector.shape_cast %40 : vector<1x24xi1> to vector<1x24xi1>
    %77 = vector.broadcast %76 : vector<1x24xi1> to vector<24x24xi1>
    %78 = vector.broadcast %cst_34 : f32 to vector<24x24xf32>
    %79 = arith.select %77, %75, %78 : vector<24x24xi1>, vector<24x24xf32>
    %cst_35 = arith.constant dense<0xFF800000> : vector<24xf32>
    %80 = vector.multi_reduction <maximumf>, %79, %cst_35 [1] : vector<24x24xf32> to vector<24xf32>
    %81 = vector.shape_cast %80 : vector<24xf32> to vector<24x1xf32>
    %82 = vector.broadcast %81 : vector<24x1xf32> to vector<24x24xf32>
    %83 = arith.subf %79, %82 : vector<24x24xf32>
    %84 = math.exp %83 : vector<24x24xf32>
    %cst_36 = arith.constant dense<0.000000e+00> : vector<24xf32>
    %85 = vector.multi_reduction <add>, %84, %cst_36 [1] : vector<24x24xf32> to vector<24xf32>
    %86 = vector.shape_cast %85 : vector<24xf32> to vector<24x1xf32>
    %87 = tpu.reciprocal %86 {approx = true} : vector<24x1xf32> -> vector<24x1xf32>
    %88 = vector.broadcast %87 : vector<24x1xf32> to vector<24x24xf32>
    %89 = arith.mulf %84, %88 : vector<24x24xf32>
    %90 = arith.truncf %89 : vector<24x24xf32> to vector<24x24xbf16>
    %cst_37 = arith.constant dense<0.000000e+00> : vector<24x8xf32>
    %91 = tpu.matmul %90, %72, %cst_37 {dimension_numbers = #tpu.dot_dimension_numbers<[1], [0], [0], [1], [0, 0, 1, 1], [], []>} : vector<24x24xbf16>, vector<24x8xbf16>, vector<24x8xf32> -> vector<24x8xf32>
    %c0_38 = arith.constant 0 : index
    %c8_39 = arith.constant 8 : index
    %92 = vector.load %arg16[%c0_38, %c8_39] : memref<24x32xf32, #tpu.memory_space<vmem>>, vector<24x8xf32>
    tpu.vector_store %arg16[%c0_38, %c8_39], %91 {strides = array<i32>} : memref<24x32xf32, #tpu.memory_space<vmem>>, vector<24x8xf32>,
    %c0_40 = arith.constant 0 : index
    %c16 = arith.constant 16 : index
    %93 = vector.load %arg15[%c0_40, %c16] : memref<24x96xf32, #tpu.memory_space<vmem>>, vector<24x8xf32>
    %94 = arith.truncf %93 : vector<24x8xf32> to vector<24x8xbf16>
    %c0_41 = arith.constant 0 : index
    %c48 = arith.constant 48 : index
    %95 = vector.load %arg15[%c0_41, %c48] : memref<24x96xf32, #tpu.memory_space<vmem>>, vector<24x8xf32>
    %96 = arith.truncf %95 : vector<24x8xf32> to vector<24x8xbf16>
    %c0_42 = arith.constant 0 : index
    %c80 = arith.constant 80 : index
    %97 = vector.load %arg15[%c0_42, %c80] : memref<24x96xf32, #tpu.memory_space<vmem>>, vector<24x8xf32>
    %98 = arith.truncf %97 : vector<24x8xf32> to vector<24x8xbf16>
    %cst_43 = arith.constant dense<0.000000e+00> : vector<24x24xf32>
    %99 = tpu.matmul %94, %96, %cst_43 {dimension_numbers = #tpu.dot_dimension_numbers<[1], [1], [0], [0], [0, 0, 1, 0], [], []>} : vector<24x8xbf16>, vector<24x8xbf16>, vector<24x24xf32> -> vector<24x24xf32>
    %cst_44 = arith.constant 0.353553385 : f32
    %100 = vector.broadcast %cst_44 : f32 to vector<24x24xf32>
    %101 = arith.mulf %99, %100 : vector<24x24xf32>
    %cst_45 = arith.constant -1.000000e+30 : f32
    %102 = vector.shape_cast %40 : vector<1x24xi1> to vector<1x24xi1>
    %103 = vector.broadcast %102 : vector<1x24xi1> to vector<24x24xi1>
    %104 = vector.broadcast %cst_45 : f32 to vector<24x24xf32>
    %105 = arith.select %103, %101, %104 : vector<24x24xi1>, vector<24x24xf32>
    %cst_46 = arith.constant dense<0xFF800000> : vector<24xf32>
    %106 = vector.multi_reduction <maximumf>, %105, %cst_46 [1] : vector<24x24xf32> to vector<24xf32>
    %107 = vector.shape_cast %106 : vector<24xf32> to vector<24x1xf32>
    %108 = vector.broadcast %107 : vector<24x1xf32> to vector<24x24xf32>
    %109 = arith.subf %105, %108 : vector<24x24xf32>
    %110 = math.exp %109 : vector<24x24xf32>
    %cst_47 = arith.constant dense<0.000000e+00> : vector<24xf32>
    %111 = vector.multi_reduction <add>, %110, %cst_47 [1] : vector<24x24xf32> to vector<24xf32>
    %112 = vector.shape_cast %111 : vector<24xf32> to vector<24x1xf32>
    %113 = tpu.reciprocal %112 {approx = true} : vector<24x1xf32> -> vector<24x1xf32>
    %114 = vector.broadcast %113 : vector<24x1xf32> to vector<24x24xf32>
    %115 = arith.mulf %110, %114 : vector<24x24xf32>
    %116 = arith.truncf %115 : vector<24x24xf32> to vector<24x24xbf16>
    %cst_48 = arith.constant dense<0.000000e+00> : vector<24x8xf32>
    %117 = tpu.matmul %116, %98, %cst_48 {dimension_numbers = #tpu.dot_dimension_numbers<[1], [0], [0], [1], [0, 0, 1, 1], [], []>} : vector<24x24xbf16>, vector<24x8xbf16>, vector<24x8xf32> -> vector<24x8xf32>
    %c0_49 = arith.constant 0 : index
    %c16_50 = arith.constant 16 : index
    %118 = vector.load %arg16[%c0_49, %c16_50] : memref<24x32xf32, #tpu.memory_space<vmem>>, vector<24x8xf32>
    tpu.vector_store %arg16[%c0_49, %c16_50], %117 {strides = array<i32>} : memref<24x32xf32, #tpu.memory_space<vmem>>, vector<24x8xf32>,
    %c0_51 = arith.constant 0 : index
    %c24 = arith.constant 24 : index
    %119 = vector.load %arg15[%c0_51, %c24] : memref<24x96xf32, #tpu.memory_space<vmem>>, vector<24x8xf32>
    %120 = arith.truncf %119 : vector<24x8xf32> to vector<24x8xbf16>
    %c0_52 = arith.constant 0 : index
    %c56 = arith.constant 56 : index
    %121 = vector.load %arg15[%c0_52, %c56] : memref<24x96xf32, #tpu.memory_space<vmem>>, vector<24x8xf32>
    %122 = arith.truncf %121 : vector<24x8xf32> to vector<24x8xbf16>
    %c0_53 = arith.constant 0 : index
    %c88 = arith.constant 88 : index
    %123 = vector.load %arg15[%c0_53, %c88] : memref<24x96xf32, #tpu.memory_space<vmem>>, vector<24x8xf32>
    %124 = arith.truncf %123 : vector<24x8xf32> to vector<24x8xbf16>
    %cst_54 = arith.constant dense<0.000000e+00> : vector<24x24xf32>
    %125 = tpu.matmul %120, %122, %cst_54 {dimension_numbers = #tpu.dot_dimension_numbers<[1], [1], [0], [0], [0, 0, 1, 0], [], []>} : vector<24x8xbf16>, vector<24x8xbf16>, vector<24x24xf32> -> vector<24x24xf32>
    %cst_55 = arith.constant 0.353553385 : f32
    %126 = vector.broadcast %cst_55 : f32 to vector<24x24xf32>
    %127 = arith.mulf %125, %126 : vector<24x24xf32>
    %cst_56 = arith.constant -1.000000e+30 : f32
    %128 = vector.shape_cast %40 : vector<1x24xi1> to vector<1x24xi1>
    %129 = vector.broadcast %128 : vector<1x24xi1> to vector<24x24xi1>
    %130 = vector.broadcast %cst_56 : f32 to vector<24x24xf32>
    %131 = arith.select %129, %127, %130 : vector<24x24xi1>, vector<24x24xf32>
    %cst_57 = arith.constant dense<0xFF800000> : vector<24xf32>
    %132 = vector.multi_reduction <maximumf>, %131, %cst_57 [1] : vector<24x24xf32> to vector<24xf32>
    %133 = vector.shape_cast %132 : vector<24xf32> to vector<24x1xf32>
    %134 = vector.broadcast %133 : vector<24x1xf32> to vector<24x24xf32>
    %135 = arith.subf %131, %134 : vector<24x24xf32>
    %136 = math.exp %135 : vector<24x24xf32>
    %cst_58 = arith.constant dense<0.000000e+00> : vector<24xf32>
    %137 = vector.multi_reduction <add>, %136, %cst_58 [1] : vector<24x24xf32> to vector<24xf32>
    %138 = vector.shape_cast %137 : vector<24xf32> to vector<24x1xf32>
    %139 = tpu.reciprocal %138 {approx = true} : vector<24x1xf32> -> vector<24x1xf32>
    %140 = vector.broadcast %139 : vector<24x1xf32> to vector<24x24xf32>
    %141 = arith.mulf %136, %140 : vector<24x24xf32>
    %142 = arith.truncf %141 : vector<24x24xf32> to vector<24x24xbf16>
    %cst_59 = arith.constant dense<0.000000e+00> : vector<24x8xf32>
    %143 = tpu.matmul %142, %124, %cst_59 {dimension_numbers = #tpu.dot_dimension_numbers<[1], [0], [0], [1], [0, 0, 1, 1], [], []>} : vector<24x24xbf16>, vector<24x8xbf16>, vector<24x8xf32> -> vector<24x8xf32>
    %c0_60 = arith.constant 0 : index
    %c24_61 = arith.constant 24 : index
    %144 = vector.load %arg16[%c0_60, %c24_61] : memref<24x32xf32, #tpu.memory_space<vmem>>, vector<24x8xf32>
    tpu.vector_store %arg16[%c0_60, %c24_61], %143 {strides = array<i32>} : memref<24x32xf32, #tpu.memory_space<vmem>>, vector<24x8xf32>,
    %c0_62 = arith.constant 0 : index
    %c0_63 = arith.constant 0 : index
    %145 = vector.load %arg16[%c0_62, %c0_63] : memref<24x32xf32, #tpu.memory_space<vmem>>, vector<24x32xf32>
    %146 = arith.truncf %145 : vector<24x32xf32> to vector<24x32xbf16>
    %c0_64 = arith.constant 0 : index
    %c0_65 = arith.constant 0 : index
    %147 = vector.load %arg6[%c0_64, %c0_65] : memref<32x128xbf16, #tpu.memory_space<vmem>>, vector<32x128xbf16>
    %cst_66 = arith.constant dense<0.000000e+00> : vector<24x128xf32>
    %148 = tpu.matmul %146, %147, %cst_66 {dimension_numbers = #tpu.dot_dimension_numbers<[1], [0], [0], [1], [0, 0, 1, 1], [], []>} : vector<24x32xbf16>, vector<32x128xbf16>, vector<24x128xf32> -> vector<24x128xf32>
    %c0_67 = arith.constant 0 : index
    %c0_68 = arith.constant 0 : index
    %149 = vector.load %arg7[%c0_67, %c0_68] : memref<1x128xf32, #tpu.memory_space<vmem>>, vector<1x128xf32>
    %150 = vector.broadcast %149 : vector<1x128xf32> to vector<24x128xf32>
    %151 = arith.addf %148, %150 : vector<24x128xf32>
    %152 = arith.addf %1, %151 : vector<24x128xf32>
    %c0_69 = arith.constant 0 : index
    %c0_70 = arith.constant 0 : index
    %153 = vector.load %arg8[%c0_69, %c0_70] : memref<1x128xf32, #tpu.memory_space<vmem>>, vector<1x128xf32>
    %c0_71 = arith.constant 0 : index
    %c0_72 = arith.constant 0 : index
    %154 = vector.load %arg9[%c0_71, %c0_72] : memref<1x128xf32, #tpu.memory_space<vmem>>, vector<1x128xf32>
    %155 = tpu.iota {dimensions = array<i32: 1>} : vector<1x128xi32>
    %c32_i32_73 = arith.constant 32 : i32
    %156 = vector.broadcast %c32_i32_73 : i32 to vector<1x128xi32>
    %157 = arith.cmpi slt, %155, %156 : vector<1x128xi32>
    %158 = arith.extui %157 : vector<1x128xi1> to vector<1x128xi32>
    %159 = arith.sitofp %158 : vector<1x128xi32> to vector<1x128xf32>
    %cst_74 = arith.constant dense<0.000000e+00> : vector<24xf32>
    %160 = vector.multi_reduction <add>, %152, %cst_74 [1] : vector<24x128xf32> to vector<24xf32>
    %161 = vector.shape_cast %160 : vector<24xf32> to vector<24x1xf32>
    %cst_75 = arith.constant 3.125000e-02 : f32
    %162 = vector.broadcast %cst_75 : f32 to vector<24x1xf32>
    %163 = arith.mulf %161, %162 : vector<24x1xf32>
    %164 = vector.broadcast %163 : vector<24x1xf32> to vector<24x128xf32>
    %165 = arith.subf %152, %164 : vector<24x128xf32>
    %166 = vector.broadcast %159 : vector<1x128xf32> to vector<24x128xf32>
    %167 = arith.mulf %165, %166 : vector<24x128xf32>
    %168 = arith.mulf %167, %167 : vector<24x128xf32>
    %cst_76 = arith.constant dense<0.000000e+00> : vector<24xf32>
    %169 = vector.multi_reduction <add>, %168, %cst_76 [1] : vector<24x128xf32> to vector<24xf32>
    %170 = vector.shape_cast %169 : vector<24xf32> to vector<24x1xf32>
    %cst_77 = arith.constant 3.125000e-02 : f32
    %171 = vector.broadcast %cst_77 : f32 to vector<24x1xf32>
    %172 = arith.mulf %170, %171 : vector<24x1xf32>
    %cst_78 = arith.constant 9.99999974E-6 : f32
    %173 = vector.broadcast %cst_78 : f32 to vector<24x1xf32>
    %174 = arith.addf %172, %173 : vector<24x1xf32>
    %175 = math.rsqrt %174 : vector<24x1xf32>
    %176 = vector.broadcast %175 : vector<24x1xf32> to vector<24x128xf32>
    %177 = arith.mulf %167, %176 : vector<24x128xf32>
    %178 = vector.broadcast %153 : vector<1x128xf32> to vector<24x128xf32>
    %179 = arith.mulf %177, %178 : vector<24x128xf32>
    %180 = vector.broadcast %154 : vector<1x128xf32> to vector<24x128xf32>
    %181 = arith.addf %179, %180 : vector<24x128xf32>
    %182 = arith.truncf %181 : vector<24x128xf32> to vector<24x128xbf16>
    %c0_79 = arith.constant 0 : index
    %c0_80 = arith.constant 0 : index
    %183 = vector.load %arg10[%c0_79, %c0_80] : memref<128x128xbf16, #tpu.memory_space<vmem>>, vector<128x128xbf16>
    %cst_81 = arith.constant dense<0.000000e+00> : vector<24x128xf32>
    %184 = tpu.matmul %182, %183, %cst_81 {dimension_numbers = #tpu.dot_dimension_numbers<[1], [0], [0], [1], [0, 0, 1, 1], [], []>} : vector<24x128xbf16>, vector<128x128xbf16>, vector<24x128xf32> -> vector<24x128xf32>
    %c0_82 = arith.constant 0 : index
    %c0_83 = arith.constant 0 : index
    %185 = vector.load %arg11[%c0_82, %c0_83] : memref<1x128xf32, #tpu.memory_space<vmem>>, vector<1x128xf32>
    %186 = vector.broadcast %185 : vector<1x128xf32> to vector<24x128xf32>
    %187 = arith.addf %184, %186 : vector<24x128xf32>
    %188 = arith.mulf %187, %187 : vector<24x128xf32>
    %189 = arith.mulf %187, %188 : vector<24x128xf32>
    %cst_84 = arith.constant 4.471500e-02 : f32
    %190 = vector.broadcast %cst_84 : f32 to vector<24x128xf32>
    %191 = arith.mulf %190, %189 : vector<24x128xf32>
    %192 = arith.addf %187, %191 : vector<24x128xf32>
    %cst_85 = arith.constant 0.797884583 : f32
    %193 = vector.broadcast %cst_85 : f32 to vector<24x128xf32>
    %194 = arith.mulf %193, %192 : vector<24x128xf32>
    %195 = math.tanh %194 : vector<24x128xf32>
    %cst_86 = arith.constant 1.000000e+00 : f32
    %196 = vector.broadcast %cst_86 : f32 to vector<24x128xf32>
    %197 = arith.addf %196, %195 : vector<24x128xf32>
    %cst_87 = arith.constant 5.000000e-01 : f32
    %198 = vector.broadcast %cst_87 : f32 to vector<24x128xf32>
    %199 = arith.mulf %198, %197 : vector<24x128xf32>
    %200 = arith.mulf %187, %199 : vector<24x128xf32>
    %201 = arith.truncf %200 : vector<24x128xf32> to vector<24x128xbf16>
    %c0_88 = arith.constant 0 : index
    %c0_89 = arith.constant 0 : index
    %202 = vector.load %arg12[%c0_88, %c0_89] : memref<128x128xbf16, #tpu.memory_space<vmem>>, vector<128x128xbf16>
    %cst_90 = arith.constant dense<0.000000e+00> : vector<24x128xf32>
    %203 = tpu.matmul %201, %202, %cst_90 {dimension_numbers = #tpu.dot_dimension_numbers<[1], [0], [0], [1], [0, 0, 1, 1], [], []>} : vector<24x128xbf16>, vector<128x128xbf16>, vector<24x128xf32> -> vector<24x128xf32>
    %c0_91 = arith.constant 0 : index
    %c0_92 = arith.constant 0 : index
    %204 = vector.load %arg13[%c0_91, %c0_92] : memref<1x128xf32, #tpu.memory_space<vmem>>, vector<1x128xf32>
    %205 = vector.broadcast %204 : vector<1x128xf32> to vector<24x128xf32>
    %206 = arith.addf %203, %205 : vector<24x128xf32>
    %207 = arith.addf %152, %206 : vector<24x128xf32>
    %208 = vector.shape_cast %207 : vector<24x128xf32> to vector<1x24x128xf32>
    %c0_93 = arith.constant 0 : index
    %c0_94 = arith.constant 0 : index
    %c0_95 = arith.constant 0 : index
    %209 = vector.load %arg14[%c0_93, %c0_94, %c0_95] : memref<1x24x128xf32, #tpu.memory_space<vmem>>, vector<1x24x128xf32>
    tpu.vector_store %arg14[%c0_93, %c0_94, %c0_95], %208 {strides = array<i32>} : memref<1x24x128xf32, #tpu.memory_space<vmem>>, vector<1x24x128xf32>,
    return
  }
  func.func @transform_0(%arg0: i32) -> (i32, i32, i32) {
    %c0_i32 = arith.constant 0 : i32
    %c0_i32_0 = arith.constant 0 : i32
    %c0_i32_1 = arith.constant 0 : i32
    return %arg0, %c0_i32, %c0_i32_0 : i32, i32, i32
  }
  func.func @transform_1(%arg0: i32) -> (i32, i32) {
    %c0_i32 = arith.constant 0 : i32
    %c0_i32_0 = arith.constant 0 : i32
    %c0_i32_1 = arith.constant 0 : i32
    return %c0_i32, %c0_i32_0 : i32, i32
  }
  func.func @transform_2(%arg0: i32) -> (i32, i32) {
    %c0_i32 = arith.constant 0 : i32
    %c0_i32_0 = arith.constant 0 : i32
    %c0_i32_1 = arith.constant 0 : i32
    return %c0_i32, %c0_i32_0 : i32, i32
  }
  func.func @transform_3(%arg0: i32) -> (i32, i32) {
    %c0_i32 = arith.constant 0 : i32
    %c0_i32_0 = arith.constant 0 : i32
    %c0_i32_1 = arith.constant 0 : i32
    return %c0_i32, %c0_i32_0 : i32, i32
  }
  func.func @transform_4(%arg0: i32) -> (i32, i32) {
    %c0_i32 = arith.constant 0 : i32
    %c0_i32_0 = arith.constant 0 : i32
    %c0_i32_1 = arith.constant 0 : i32
    return %c0_i32, %c0_i32_0 : i32, i32
  }
  func.func @transform_5(%arg0: i32) -> (i32, i32) {
    %c0_i32 = arith.constant 0 : i32
    %c0_i32_0 = arith.constant 0 : i32
    %c0_i32_1 = arith.constant 0 : i32
    return %c0_i32, %c0_i32_0 : i32, i32
  }
  func.func @transform_6(%arg0: i32) -> (i32, i32) {
    %c0_i32 = arith.constant 0 : i32
    %c0_i32_0 = arith.constant 0 : i32
    %c0_i32_1 = arith.constant 0 : i32
    return %c0_i32, %c0_i32_0 : i32, i32
  }
  func.func @transform_7(%arg0: i32) -> (i32, i32) {
    %c0_i32 = arith.constant 0 : i32
    %c0_i32_0 = arith.constant 0 : i32
    %c0_i32_1 = arith.constant 0 : i32
    return %c0_i32, %c0_i32_0 : i32, i32
  }
  func.func @transform_8(%arg0: i32) -> (i32, i32) {
    %c0_i32 = arith.constant 0 : i32
    %c0_i32_0 = arith.constant 0 : i32
    %c0_i32_1 = arith.constant 0 : i32
    return %c0_i32, %c0_i32_0 : i32, i32
  }
  func.func @transform_9(%arg0: i32) -> (i32, i32) {
    %c0_i32 = arith.constant 0 : i32
    %c0_i32_0 = arith.constant 0 : i32
    %c0_i32_1 = arith.constant 0 : i32
    return %c0_i32, %c0_i32_0 : i32, i32
  }
  func.func @transform_10(%arg0: i32) -> (i32, i32) {
    %c0_i32 = arith.constant 0 : i32
    %c0_i32_0 = arith.constant 0 : i32
    %c0_i32_1 = arith.constant 0 : i32
    return %c0_i32, %c0_i32_0 : i32, i32
  }
  func.func @transform_11(%arg0: i32) -> (i32, i32) {
    %c0_i32 = arith.constant 0 : i32
    %c0_i32_0 = arith.constant 0 : i32
    %c0_i32_1 = arith.constant 0 : i32
    return %c0_i32, %c0_i32_0 : i32, i32
  }
  func.func @transform_12(%arg0: i32) -> (i32, i32) {
    %c0_i32 = arith.constant 0 : i32
    %c0_i32_0 = arith.constant 0 : i32
    %c0_i32_1 = arith.constant 0 : i32
    return %c0_i32, %c0_i32_0 : i32, i32
  }
  func.func @transform_13(%arg0: i32) -> (i32, i32, i32) {
    %c0_i32 = arith.constant 0 : i32
    %c0_i32_0 = arith.constant 0 : i32
    %c0_i32_1 = arith.constant 0 : i32
    return %arg0, %c0_i32, %c0_i32_0 : i32, i32, i32
  }
}

module attributes {stable_mosaic.version = 11 : i64} {
  func.func @_head_kernel(%arg0: memref<8x128xf32, #tpu.memory_space<vmem>>, %arg1: memref<1x128xf32, #tpu.memory_space<vmem>>, %arg2: memref<1x128xf32, #tpu.memory_space<vmem>>, %arg3: memref<128x128xbf16, #tpu.memory_space<vmem>>, %arg4: memref<1x128xf32, #tpu.memory_space<vmem>>, %arg5: memref<8x128xf32, #tpu.memory_space<vmem>>) attributes {dimension_semantics = [], scalar_prefetch = 0 : i64, scratch_operands = 0 : i64, tpu.core_type = #tpu.core_type<tc>} {
    %c0 = arith.constant 0 : index
    %c0_0 = arith.constant 0 : index
    %0 = vector.load %arg0[%c0, %c0_0] : memref<8x128xf32, #tpu.memory_space<vmem>>, vector<8x128xf32>
    %c0_1 = arith.constant 0 : index
    %c0_2 = arith.constant 0 : index
    %1 = vector.load %arg1[%c0_1, %c0_2] : memref<1x128xf32, #tpu.memory_space<vmem>>, vector<1x128xf32>
    %c0_3 = arith.constant 0 : index
    %c0_4 = arith.constant 0 : index
    %2 = vector.load %arg2[%c0_3, %c0_4] : memref<1x128xf32, #tpu.memory_space<vmem>>, vector<1x128xf32>
    %3 = tpu.iota {dimensions = array<i32: 1>} : vector<1x128xi32>
    %c32_i32 = arith.constant 32 : i32
    %4 = vector.broadcast %c32_i32 : i32 to vector<1x128xi32>
    %5 = arith.cmpi slt, %3, %4 : vector<1x128xi32>
    %6 = arith.extui %5 : vector<1x128xi1> to vector<1x128xi32>
    %7 = arith.sitofp %6 : vector<1x128xi32> to vector<1x128xf32>
    %cst = arith.constant dense<0.000000e+00> : vector<8xf32>
    %8 = vector.multi_reduction <add>, %0, %cst [1] : vector<8x128xf32> to vector<8xf32>
    %9 = vector.shape_cast %8 : vector<8xf32> to vector<8x1xf32>
    %cst_5 = arith.constant 3.125000e-02 : f32
    %10 = vector.broadcast %cst_5 : f32 to vector<8x1xf32>
    %11 = arith.mulf %9, %10 : vector<8x1xf32>
    %12 = vector.broadcast %11 : vector<8x1xf32> to vector<8x128xf32>
    %13 = arith.subf %0, %12 : vector<8x128xf32>
    %14 = vector.broadcast %7 : vector<1x128xf32> to vector<8x128xf32>
    %15 = arith.mulf %13, %14 : vector<8x128xf32>
    %16 = arith.mulf %15, %15 : vector<8x128xf32>
    %cst_6 = arith.constant dense<0.000000e+00> : vector<8xf32>
    %17 = vector.multi_reduction <add>, %16, %cst_6 [1] : vector<8x128xf32> to vector<8xf32>
    %18 = vector.shape_cast %17 : vector<8xf32> to vector<8x1xf32>
    %cst_7 = arith.constant 3.125000e-02 : f32
    %19 = vector.broadcast %cst_7 : f32 to vector<8x1xf32>
    %20 = arith.mulf %18, %19 : vector<8x1xf32>
    %cst_8 = arith.constant 9.99999974E-6 : f32
    %21 = vector.broadcast %cst_8 : f32 to vector<8x1xf32>
    %22 = arith.addf %20, %21 : vector<8x1xf32>
    %23 = math.rsqrt %22 : vector<8x1xf32>
    %24 = vector.broadcast %23 : vector<8x1xf32> to vector<8x128xf32>
    %25 = arith.mulf %15, %24 : vector<8x128xf32>
    %26 = vector.broadcast %1 : vector<1x128xf32> to vector<8x128xf32>
    %27 = arith.mulf %25, %26 : vector<8x128xf32>
    %28 = vector.broadcast %2 : vector<1x128xf32> to vector<8x128xf32>
    %29 = arith.addf %27, %28 : vector<8x128xf32>
    %30 = arith.truncf %29 : vector<8x128xf32> to vector<8x128xbf16>
    %c0_9 = arith.constant 0 : index
    %c0_10 = arith.constant 0 : index
    %31 = vector.load %arg3[%c0_9, %c0_10] : memref<128x128xbf16, #tpu.memory_space<vmem>>, vector<128x128xbf16>
    %cst_11 = arith.constant dense<0.000000e+00> : vector<8x128xf32>
    %32 = tpu.matmul %30, %31, %cst_11 {dimension_numbers = #tpu.dot_dimension_numbers<[1], [0], [0], [1], [0, 0, 1, 1], [], []>} : vector<8x128xbf16>, vector<128x128xbf16>, vector<8x128xf32> -> vector<8x128xf32>
    %c0_12 = arith.constant 0 : index
    %c0_13 = arith.constant 0 : index
    %33 = vector.load %arg4[%c0_12, %c0_13] : memref<1x128xf32, #tpu.memory_space<vmem>>, vector<1x128xf32>
    %34 = vector.broadcast %33 : vector<1x128xf32> to vector<8x128xf32>
    %35 = arith.addf %32, %34 : vector<8x128xf32>
    %c0_14 = arith.constant 0 : index
    %c0_15 = arith.constant 0 : index
    %36 = vector.load %arg5[%c0_14, %c0_15] : memref<8x128xf32, #tpu.memory_space<vmem>>, vector<8x128xf32>
    tpu.vector_store %arg5[%c0_14, %c0_15], %35 {strides = array<i32>} : memref<8x128xf32, #tpu.memory_space<vmem>>, vector<8x128xf32>,
    return
  }
}

</mosaic_0001>

<llo_original>
// kernel: tpu_custom_call.1
$region0: #{tpu_custom_call.1}
  #allocation0 [shape = 'u32[]', space=smem, size = 0x4, offset = 0x4, fixed_abs, tag = 'smem constant byte address 0x4 - core index']
  #allocation1 [shape = 'u32[144,128]{1,0:T(1,128)}', space=vmem, size = 0x12000, scoped, tag = 'internal scratch']
  %s0 = inlined_call_operand.hbm [shape: f32[8,128], index: 0, kind: input, shape index: {}]
  %s1 = inlined_call_operand.hbm [shape: f32[16,128], index: 1, kind: output, shape index: {}]
  %s2 = sld [smem:[#allocation0]]
  $region41: #{tpu_custom_call.1} parent=0
    _
  %s4 = ssub.s32 1, %s2
  %s5 = scalar_select 0, %s4, %s2
  $region1: #{tpu_custom_call.1} parent=0
    #allocation2 [shape = 'u8[4096]{0}', space=vmem, size = 0x1000, scoped, tag = 'input window, operand 0, single buffered']
    #allocation3 [shape = 's32[2]{0}', space=sflag, size = 0x8, scoped, tag = 'scoped memory for tpu_custom_call.1']
    #allocation4 [shape = 's32[2]{0}', space=sflag, size = 0x8, scoped, tag = 'scoped memory for tpu_custom_call.1']
    #allocation5 [shape = 'u8[8192]{0}', space=vmem, size = 0x2000, scoped, tag = 'output window, operand 0']
    %6 = vsyncpa [#allocation3], 0
    %7 = vsyncpa [#allocation4], 0
    %s8 = scalar_lea.sflag [#allocation4], 1
    %9 = vsyncpa %s8, 0
    loop: start=0, step=1, limit=4
    $region2: #{tpu_custom_call.1} parent=1 // loop_pre_header
      _
    $region3: #{tpu_custom_call.1} parent=1 // loop_header
      %s11 = sphi 0, %s15
      %p12 = scmp.ge.s32.totalorder %s11, 4
      %s19 = sphi 0, %s19
      %s21 = sphi 0, %s19
      %s22 = sphi 0, %s21
      %s36 = sphi 0, %s22
      %s42 = sphi 0, %s44
      %s45 = sphi 0, %s42
      %s46 = sphi 0, %s45
      %s62 = sphi 0, %s46
    $region4: #{tpu_custom_call.1} parent=1 // loop_header_branch
      %14 = sbr.rel (%p12) target = $region8
    $region5: #{tpu_custom_call.1} parent=1 // loop_body
      %s16 = ssub.s32 %s11, 1
      %s17 = ssub.s32 %s11, 2
      %s18 = sadd.s32 %s11, 1
      %s20 = sadd.s32 %s19, 1
      %p23 = scmp.eq.s32.totalorder %s11, 1
      %p24 = scmp.ne.s32.totalorder %s19, %s21
      %p25 = scmp.eq.s32.totalorder %s11, 0
      %p26 = por %p24, %p25
      %p27 = scmp.ne.s32.totalorder %s19, %s21
      %p28 = scmp.eq.s32.totalorder %s16, 1
      %p29 = por %p27, %p28
      %p30 = scmp.ne.s32.totalorder %s21, %s22
      %p31 = scmp.eq.s32.totalorder %s16, 0
      %p32 = por %p30, %p31
      %p33 = scmp.ne.s32.totalorder %s21, %s22
      %p34 = scmp.eq.s32.totalorder %s17, 1
      %p35 = por %p33, %p34
      %p37 = scmp.ne.s32.totalorder %s22, %s36
      %p38 = scmp.eq.s32.totalorder %s17, 0
      %p39 = por %p37, %p38
      %s40 = ssub.s32 %s11, %s18
      %p41 = scmp.eq.s32.totalorder %s40, 0
      %s43 = sadd.s32 %s42, 1
      %s44 = scalar_select %p41, %s42, %s43
      %p47 = pneg %p41
      %p48 = scmp.eq.s32.totalorder %s11, 1
      %p49 = por %p47, %p48
      %p50 = scmp.ne.s32.totalorder %s42, %s45
      %p51 = scmp.eq.s32.totalorder %s11, 0
      %p52 = por %p50, %p51
      %p53 = scmp.ne.s32.totalorder %s42, %s45
      %p54 = scmp.eq.s32.totalorder %s16, 1
      %p55 = por %p53, %p54
      %p56 = scmp.ne.s32.totalorder %s45, %s46
      %p57 = scmp.eq.s32.totalorder %s16, 0
      %p58 = por %p56, %p57
      %p59 = scmp.ne.s32.totalorder %s45, %s46
      %p60 = scmp.eq.s32.totalorder %s17, 1
      %p61 = por %p59, %p60
      %p63 = scmp.ne.s32.totalorder %s46, %s62
      %p64 = scmp.eq.s32.totalorder %s17, 0
      %p65 = por %p63, %p64
      %p66 = scmp.le.s32.totalorder 1, %s11
      %p67 = scmp.lt.s32.totalorder %s11, 3
      %p68 = pnand %p66, %p67
      %p69 = pneg %p68
      // Predicated region
      $region9: #{tpu_custom_call.1} parent=5 // pred_check
        _
      $region10: #{tpu_custom_call.1} parent=5 // pred_check_branch
        %71 = sbr.rel (%p68) target = $region12
      $region11: #{tpu_custom_call.1} parent=5 // pred_region
        %s72 = ssub.s32 %s11, 1
        // Predicated region
        $region13: #{tpu_custom_call.1} parent=11 // pred_check
          %p73 = pneg %p32
        $region14: #{tpu_custom_call.1} parent=11 // pred_check_branch
          %75 = sbr.rel (%p73) target = $region16
        $region15: #{tpu_custom_call.1} parent=11 // pred_region
          %s77 = ssub.s32 128, 128
          %78 = vsyncadd [#allocation3], %s77
          %s80 = sshll.u32 [#allocation2], 4
          %s81 = int_to_ptr.vmem [resolvable:$true] %s80
          %83 = dma.hbm_to_vmem [thread:$0]  %s0, 128, %s81, [#allocation3]
        $region16: #{tpu_custom_call.1} parent=11 // pred_fallthru
          _
      $region12: #{tpu_custom_call.1} parent=5 // pred_fallthru
        _
      %p84 = scmp.lt.s32.totalorder %s11, 2
      // Predicated region
      $region17: #{tpu_custom_call.1} parent=5 // pred_check
        %p85 = pneg %p84
      $region18: #{tpu_custom_call.1} parent=5 // pred_check_branch
        %87 = sbr.rel (%p85) target = $region20
      $region19: #{tpu_custom_call.1} parent=5 // pred_region
        _
      $region20: #{tpu_custom_call.1} parent=5 // pred_fallthru
        _
      %p88 = scmp.le.s32.totalorder 1, %s11
      %p89 = scmp.lt.s32.totalorder %s11, 3
      %p90 = pnand %p88, %p89
      %p91 = pneg %p90
      // Predicated region
      $region21: #{tpu_custom_call.1} parent=5 // pred_check
        _
      $region22: #{tpu_custom_call.1} parent=5 // pred_check_branch
        %93 = sbr.rel (%p90) target = $region24
      $region23: #{tpu_custom_call.1} parent=5 // pred_region
        %s94 = ssub.s32 %s11, 1
        // Predicated region
        $region25: #{tpu_custom_call.1} parent=23 // pred_check
          %p95 = pneg %p32
        $region26: #{tpu_custom_call.1} parent=23 // pred_check_branch
          %97 = sbr.rel (%p95) target = $region28
        $region27: #{tpu_custom_call.1} parent=23 // pred_region
          %98 = dma.done [#allocation3], 128
        $region28: #{tpu_custom_call.1} parent=23 // pred_fallthru
          _
        %p99 = pneg %p32
        %p100 = pneg %p29
        %p101 = pneg %p58
        %p102 = pneg %p55
        %s103 = sand.u32 %s45, 1
        %s104 = scalar_lea.sflag [#allocation4], %s103
        %s105 = sand.u32 %s45, 1
        %s106 = smul.addr %s105, 8
        %s107 = scalar_lea.vmem [#allocation5], %s106
        %v108 = vld [vmem:[#allocation2] sm:$0xff]
        %v109 = vadd.f32 %v108, 1.0
        %110 = vst [vmem:[%s107] sm:$0xff] %v109
        %s111 = sand.u32 %s45, 1
        %s112 = scalar_lea.sflag [#allocation4], %s111
        %s113 = sand.u32 %s45, 1
        %s114 = smul.addr %s113, 8
        %s115 = scalar_lea.vmem [#allocation5], %s114
        // Predicated region
        $region29: #{tpu_custom_call.1} parent=23 // pred_check
          %p116 = pneg %p55
        $region30: #{tpu_custom_call.1} parent=23 // pred_check_branch
          %118 = sbr.rel (%p116) target = $region32
        $region31: #{tpu_custom_call.1} parent=23 // pred_region
          %s120 = ssub.s32 128, 128
          %121 = vsyncadd %s112, %s120
          %s122 = smul.addr %s16, 128
          %s123 = scalar_lea.hbm %s1, %s122
          %s125 = sshll.u32 %s115, 4
          %s126 = int_to_ptr.vmem [resolvable:$true] %s125
          %128 = dma.vmem_to_hbm [thread:$0]  %s126, 128, %s123, %s112
        $region32: #{tpu_custom_call.1} parent=23 // pred_fallthru
          _
      $region24: #{tpu_custom_call.1} parent=5 // pred_fallthru
        _
      %p129 = scmp.le.s32.totalorder 2, %s11
      // Predicated region
      $region33: #{tpu_custom_call.1} parent=5 // pred_check
        %p130 = pneg %p129
      $region34: #{tpu_custom_call.1} parent=5 // pred_check_branch
        %132 = sbr.rel (%p130) target = $region36
      $region35: #{tpu_custom_call.1} parent=5 // pred_region
        %s133 = ssub.s32 %s11, 2
        // Predicated region
        $region37: #{tpu_custom_call.1} parent=35 // pred_check
          %p134 = pneg %p61
        $region38: #{tpu_custom_call.1} parent=35 // pred_check_branch
          %136 = sbr.rel (%p134) target = $region40
        $region39: #{tpu_custom_call.1} parent=35 // pred_region
          %s137 = sand.u32 %s46, 1
          %s138 = scalar_lea.sflag [#allocation4], %s137
          %s139 = sand.u32 %s46, 1
          %s140 = smul.addr %s139, 8
          %s141 = scalar_lea.vmem [#allocation5], %s140
          %142 = dma.done %s138, 128
        $region40: #{tpu_custom_call.1} parent=35 // pred_fallthru
          _
      $region36: #{tpu_custom_call.1} parent=5 // pred_fallthru
        _
    $region6: #{tpu_custom_call.1} parent=1 // loop_footer
      %s15 = sadd.s32 1, %s11
    $region7: #{tpu_custom_call.1} parent=1 // loop_footer_branch
      %10 = sbr.rel target = $region3
    $region8: #{tpu_custom_call.1} parent=1 // loop_exit
      _
    %143 = vsyncpa [#allocation3], 1
    %s144 = scalar_lea.sflag [#allocation3], 1
    %145 = vsyncpa %s144, 1
    %146 = vsyncpa [#allocation4], 1
    %s147 = scalar_lea.sflag [#allocation4], 1
    %148 = vsyncpa %s147, 1

// kernel: vit_forward.4
$region0: #{vit_forward.4}
  #allocation0 [shape = 'u32[]', space=smem, size = 0x4, offset = 0x4, fixed_abs, tag = 'smem constant byte address 0x4 - core index']
  #allocation1 [shape = 'u32[144,128]{1,0:T(1,128)}', space=vmem, size = 0x12000, scoped, tag = 'internal scratch']
  #allocation2 [shape = 'f32[128,128]{1,0:T(8,128)}', space=vmem, size = 0x10000, scoped, tag = 'scratch operand']
  %s0 = inlined_call_operand.hbm [shape: bf16[128,128], index: 0, kind: input, shape index: {}]
  %s1 = inlined_call_operand.hbm [shape: bf16[128,128], index: 1, kind: input, shape index: {}]
  %s2 = inlined_call_operand.hbm [shape: f32[1,128], index: 2, kind: input, shape index: {}]
  %s3 = inlined_call_operand.hbm [shape: f32[128,128], index: 3, kind: output, shape index: {}]
  %s4 = sld [smem:[#allocation0]]
  $region42: #{vit_forward.4} parent=0
    _
  %s6 = ssub.s32 1, %s4
  %s7 = scalar_select 0, %s6, %s4
  $region1: #{vit_forward.4} parent=0
    #allocation3 [shape = 'u8[32768]{0}', space=vmem, size = 0x8000, scoped, tag = 'input window, operand 0, single buffered']
    #allocation4 [shape = 's32[1]{0}', space=sflag, size = 0x4, scoped, tag = 'scoped memory for vit_forward.4']
    #allocation5 [shape = 's32[1]{0}', space=sflag, size = 0x4, scoped, tag = 'scoped memory for vit_forward.4']
    #allocation6 [shape = 'u8[32768]{0}', space=vmem, size = 0x8000, scoped, tag = 'input window, operand 1, single buffered']
    #allocation7 [shape = 's32[1]{0}', space=sflag, size = 0x4, scoped, tag = 'scoped memory for vit_forward.4']
    #allocation8 [shape = 'u8[512]{0}', space=vmem, size = 0x400, scoped, tag = 'input window, operand 2, single buffered']
    #allocation9 [shape = 'u8[65536]{0}', space=vmem, size = 0x10000, scoped, tag = 'output window, operand 0, single buffered']
    %8 = vsyncpa [#allocation4], 0
    %9 = vsyncpa [#allocation7], 0
    %10 = vsyncpa [#allocation5], 0
    // Predicated region
    $region2: #{vit_forward.4} parent=1 // pred_check
      _
    $region3: #{vit_forward.4} parent=1 // pred_check_branch
      %12 = sbr.rel (0) target = $region5
    $region4: #{vit_forward.4} parent=1 // pred_region
      %s14 = ssub.s32 1024, 1024
      %15 = vsyncadd [#allocation4], %s14
      %s16 = sshll.u32 [#allocation3], 4
      %s17 = int_to_ptr.vmem [resolvable:$true] %s16
      %22 = dma.hbm_to_vmem [thread:$0]  %s0, 1024, %s17, [#allocation4], 64, 64, 4
    $region5: #{vit_forward.4} parent=1 // pred_fallthru
      _
    // Predicated region
    $region6: #{vit_forward.4} parent=1 // pred_check
      _
    $region7: #{vit_forward.4} parent=1 // pred_check_branch
      %24 = sbr.rel (0) target = $region9
    $region8: #{vit_forward.4} parent=1 // pred_region
      %s26 = ssub.s32 1024, 1024
      %27 = vsyncadd [#allocation7], %s26
      %s28 = sshll.u32 [#allocation6], 4
      %s29 = int_to_ptr.vmem [resolvable:$true] %s28
      %34 = dma.hbm_to_vmem [thread:$0]  %s1, 1024, %s29, [#allocation7], 64, 64, 4
    $region9: #{vit_forward.4} parent=1 // pred_fallthru
      _
    // Predicated region
    $region10: #{vit_forward.4} parent=1 // pred_check
      _
    $region11: #{vit_forward.4} parent=1 // pred_check_branch
      %36 = sbr.rel (0) target = $region13
    $region12: #{vit_forward.4} parent=1 // pred_region
      %s38 = ssub.s32 16, 16
      %39 = vsyncadd [#allocation7], %s38
      %s41 = sshll.u32 [#allocation8], 4
      %s42 = int_to_ptr.vmem [resolvable:$true] %s41
      %44 = dma.hbm_to_vmem [thread:$0]  %s2, 16, %s42, [#allocation7]
    $region13: #{vit_forward.4} parent=1 // pred_fallthru
      _
    // Predicated region
    $region14: #{vit_forward.4} parent=1 // pred_check
      _
    $region15: #{vit_forward.4} parent=1 // pred_check_branch
      %46 = sbr.rel (0) target = $region17
    $region16: #{vit_forward.4} parent=1 // pred_region
      %47 = dma.done [#allocation4], 1024
    $region17: #{vit_forward.4} parent=1 // pred_fallthru
      _
    // Predicated region
    $region18: #{vit_forward.4} parent=1 // pred_check
      _
    $region19: #{vit_forward.4} parent=1 // pred_check_branch
      %49 = sbr.rel (0) target = $region21
    $region20: #{vit_forward.4} parent=1 // pred_region
      %50 = dma.done [#allocation7], 1024
    $region21: #{vit_forward.4} parent=1 // pred_fallthru
      _
    // Predicated region
    $region22: #{vit_forward.4} parent=1 // pred_check
      _
    $region23: #{vit_forward.4} parent=1 // pred_check_branch
      %52 = sbr.rel (0) target = $region25
    $region24: #{vit_forward.4} parent=1 // pred_region
      %53 = dma.done [#allocation7], 16
    $region25: #{vit_forward.4} parent=1 // pred_fallthru
      _
    %p55 = scmp.eq.s32.totalorder 0, 0
    // Predicated region
    $region26: #{vit_forward.4} parent=1 // pred_check
      %p56 = pneg %p55
    $region27: #{vit_forward.4} parent=1 // pred_check_branch
      %58 = sbr.rel (%p56) target = $region29
    $region28: #{vit_forward.4} parent=1 // pred_region
      %59 = vst [vmem:[#allocation2] sm:$0xff] 0.0
      %60 = vst [vmem:[#allocation2 + $0x8] sm:$0xff] 0.0
      %61 = vst [vmem:[#allocation2 + $0x10] sm:$0xff] 0.0
      %62 = vst [vmem:[#allocation2 + $0x18] sm:$0xff] 0.0
      %63 = vst [vmem:[#allocation2 + $0x20] sm:$0xff] 0.0
      %64 = vst [vmem:[#allocation2 + $0x28] sm:$0xff] 0.0
      %65 = vst [vmem:[#allocation2 + $0x30] sm:$0xff] 0.0
      %66 = vst [vmem:[#allocation2 + $0x38] sm:$0xff] 0.0
      %67 = vst [vmem:[#allocation2 + $0x40] sm:$0xff] 0.0
      %68 = vst [vmem:[#allocation2 + $0x48] sm:$0xff] 0.0
      %69 = vst [vmem:[#allocation2 + $0x50] sm:$0xff] 0.0
      %70 = vst [vmem:[#allocation2 + $0x58] sm:$0xff] 0.0
      %71 = vst [vmem:[#allocation2 + $0x60] sm:$0xff] 0.0
      %72 = vst [vmem:[#allocation2 + $0x68] sm:$0xff] 0.0
      %73 = vst [vmem:[#allocation2 + $0x70] sm:$0xff] 0.0
      %74 = vst [vmem:[#allocation2 + $0x78] sm:$0xff] 0.0
    $region29: #{vit_forward.4} parent=1 // pred_fallthru
      _
    %v75 = vld [vmem:[#allocation2] sm:$0xff]
    %v76 = vld [vmem:[#allocation2 + $0x8] sm:$0xff]
    %v77 = vld [vmem:[#allocation2 + $0x10] sm:$0xff]
    %v78 = vld [vmem:[#allocation2 + $0x18] sm:$0xff]
    %v79 = vld [vmem:[#allocation2 + $0x20] sm:$0xff]
    %v80 = vld [vmem:[#allocation2 + $0x28] sm:$0xff]
    %v81 = vld [vmem:[#allocation2 + $0x30] sm:$0xff]
    %v82 = vld [vmem:[#allocation2 + $0x38] sm:$0xff]
    %v83 = vld [vmem:[#allocation2 + $0x40] sm:$0xff]
    %v84 = vld [vmem:[#allocation2 + $0x48] sm:$0xff]
    %v85 = vld [vmem:[#allocation2 + $0x50] sm:$0xff]
    %v86 = vld [vmem:[#allocation2 + $0x58] sm:$0xff]
    %v87 = vld [vmem:[#allocation2 + $0x60] sm:$0xff]
    %v88 = vld [vmem:[#allocation2 + $0x68] sm:$0xff]
    %v89 = vld [vmem:[#allocation2 + $0x70] sm:$0xff]
    %v90 = vld [vmem:[#allocation2 + $0x78] sm:$0xff]
    %v91 = vld [vmem:[#allocation3] sm:$0xf]
    %v92 = vld [vmem:[#allocation3 + $0x4] sm:$0xf]
    %v93 = vld [vmem:[#allocation3 + $0x8] sm:$0xf]
    %v94 = vld [vmem:[#allocation3 + $0xc] sm:$0xf]
    %v95 = vld [vmem:[#allocation3 + $0x10] sm:$0xf]
    %v96 = vld [vmem:[#allocation3 + $0x14] sm:$0xf]
    %v97 = vld [vmem:[#allocation3 + $0x18] sm:$0xf]
    %v98 = vld [vmem:[#allocation3 + $0x1c] sm:$0xf]
    %v99 = vld [vmem:[#allocation3 + $0x20] sm:$0xf]
    %v100 = vld [vmem:[#allocation3 + $0x24] sm:$0xf]
    %v101 = vld [vmem:[#allocation3 + $0x28] sm:$0xf]
    %v102 = vld [vmem:[#allocation3 + $0x2c] sm:$0xf]
    %v103 = vld [vmem:[#allocation3 + $0x30] sm:$0xf]
    %v104 = vld [vmem:[#allocation3 + $0x34] sm:$0xf]
    %v105 = vld [vmem:[#allocation3 + $0x38] sm:$0xf]
    %v106 = vld [vmem:[#allocation3 + $0x3c] sm:$0xf]
    %v107 = vld [vmem:[#allocation6] sm:$0xf]
    %v108 = vld [vmem:[#allocation6 + $0x4] sm:$0xf]
    %v109 = vld [vmem:[#allocation6 + $0x8] sm:$0xf]
    %v110 = vld [vmem:[#allocation6 + $0xc] sm:$0xf]
    %v111 = vld [vmem:[#allocation6 + $0x10] sm:$0xf]
    %v112 = vld [vmem:[#allocation6 + $0x14] sm:$0xf]
    %v113 = vld [vmem:[#allocation6 + $0x18] sm:$0xf]
    %v114 = vld [vmem:[#allocation6 + $0x1c] sm:$0xf]
    %v115 = vld [vmem:[#allocation6 + $0x20] sm:$0xf]
    %v116 = vld [vmem:[#allocation6 + $0x24] sm:$0xf]
    %v117 = vld [vmem:[#allocation6 + $0x28] sm:$0xf]
    %v118 = vld [vmem:[#allocation6 + $0x2c] sm:$0xf]
    %v119 = vld [vmem:[#allocation6 + $0x30] sm:$0xf]
    %v120 = vld [vmem:[#allocation6 + $0x34] sm:$0xf]
    %v121 = vld [vmem:[#allocation6 + $0x38] sm:$0xf]
    %v122 = vld [vmem:[#allocation6 + $0x3c] sm:$0xf]
    %v139 = vunpack.c.l.b16 %v91
    %v140 = vunpack.c.l.b16 %v92
    %v141 = vunpack.c.l.b16 %v93
    %v142 = vunpack.c.l.b16 %v94
    %v143 = vunpack.c.l.b16 %v95
    %v144 = vunpack.c.l.b16 %v96
    %v145 = vunpack.c.l.b16 %v97
    %v146 = vunpack.c.l.b16 %v98
    %v147 = vunpack.c.l.b16 %v99
    %v148 = vunpack.c.l.b16 %v100
    %v149 = vunpack.c.l.b16 %v101
    %v150 = vunpack.c.l.b16 %v102
    %v151 = vunpack.c.l.b16 %v103
    %v152 = vunpack.c.l.b16 %v104
    %v153 = vunpack.c.l.b16 %v105
    %v154 = vunpack.c.l.b16 %v106
    %v155 = vpack.c.b16 %v140, %v139
    %v156 = vpack.c.b16 %v142, %v141
    %v157 = vpack.c.b16 %v144, %v143
    %v158 = vpack.c.b16 %v146, %v145
    %v159 = vpack.c.b16 %v148, %v147
    %v160 = vpack.c.b16 %v150, %v149
    %v161 = vpack.c.b16 %v152, %v151
    %v162 = vpack.c.b16 %v154, %v153
    %v187 = vunpack.c.l.b16 %v107
    %v188 = vunpack.c.l.b16 %v108
    %v189 = vunpack.c.l.b16 %v109
    %v190 = vunpack.c.l.b16 %v110
    %v191 = vunpack.c.l.b16 %v111
    %v192 = vunpack.c.l.b16 %v112
    %v193 = vunpack.c.l.b16 %v113
    %v194 = vunpack.c.l.b16 %v114
    %v195 = vunpack.c.l.b16 %v115
    %v196 = vunpack.c.l.b16 %v116
    %v197 = vunpack.c.l.b16 %v117
    %v198 = vunpack.c.l.b16 %v118
    %v199 = vunpack.c.l.b16 %v119
    %v200 = vunpack.c.l.b16 %v120
    %v201 = vunpack.c.l.b16 %v121
    %v202 = vunpack.c.l.b16 %v122
    %v203 = vpack.c.b16 %v188, %v187
    %v204 = vpack.c.b16 %v190, %v189
    %v205 = vpack.c.b16 %v192, %v191
    %v206 = vpack.c.b16 %v194, %v193
    %v207 = vpack.c.b16 %v196, %v195
    %v208 = vpack.c.b16 %v198, %v197
    %v209 = vpack.c.b16 %v200, %v199
    %v210 = vpack.c.b16 %v202, %v201
    %219 = vmatprep.subr.bf16.mxu0 0
    %220 = vmatpush1.bf16.msra.mxu0 %v203
    %221 = vmatprep.subr.bf16.mxu0 0
    %222 = vmatpush1.bf16.msra.mxu0 %v204
    %223 = vmatprep.subr.bf16.mxu0 0
    %224 = vmatpush1.bf16.msra.mxu0 %v205
    %225 = vmatprep.subr.bf16.mxu0 0
    %226 = vmatpush1.bf16.msra.mxu0 %v206
    %227 = vmatprep.subr.bf16.mxu0 0
    %228 = vmatpush1.bf16.msra.mxu0 %v207
    %229 = vmatprep.subr.bf16.mxu0 0
    %230 = vmatpush1.bf16.msra.mxu0 %v208
    %231 = vmatprep.subr.bf16.mxu0 0
    %232 = vmatpush1.bf16.msra.mxu0 %v209
    %233 = vmatprep.subr.bf16.mxu0 0
    %234 = vmatpush1.bf16.msra.mxu0 %v210
    %235 = vmatprep.subr.bf16.mxu0 0
    %236 = vmatpush1.bf16.msra.mxu0 0
    %237 = vmatprep.subr.bf16.mxu0 0
    %238 = vmatpush1.bf16.msra.mxu0 0
    %239 = vmatprep.subr.bf16.mxu0 0
    %240 = vmatpush1.bf16.msra.mxu0 0
    %241 = vmatprep.subr.bf16.mxu0 0
    %242 = vmatpush1.bf16.msra.mxu0 0
    %243 = vmatprep.subr.bf16.mxu0 0
    %244 = vmatpush1.bf16.msra.mxu0 0
    %245 = vmatprep.subr.bf16.mxu0 0
    %246 = vmatpush1.bf16.msra.mxu0 0
    %247 = vmatprep.subr.bf16.mxu0 0
    %248 = vmatpush1.bf16.msra.mxu0 0
    %249 = vmatprep.subr.bf16.mxu0 0
    %250 = vmatpush1.bf16.msra.mxu0 0
    %251 = vmatprep.mubr.bf16.mxu0 0
    %252 = vmatmul.mubr.bf16.gmra.mrb[0].mxu0 %v155
    %v253 = vpop.f32.mrb[0].mxu0
    %v254 = vadd.f32 0.0, %v253
    %v255 = vpop.f32.mrb[0].mxu0
    %v256 = vpop.f32.mrb[0].mxu0
    %v257 = vadd.f32 0.0, %v256
    %v258 = vpop.f32.mrb[0].mxu0
    %259 = vmatprep.mubr.bf16.mxu0 0
    %260 = vmatmul.mubr.bf16.gmra.mrb[0].mxu0 %v156
    %v261 = vpop.f32.mrb[0].mxu0
    %v262 = vadd.f32 0.0, %v261
    %v263 = vpop.f32.mrb[0].mxu0
    %v264 = vpop.f32.mrb[0].mxu0
    %v265 = vadd.f32 0.0, %v264
    %v266 = vpop.f32.mrb[0].mxu0
    %267 = vmatprep.mubr.bf16.mxu0 0
    %268 = vmatmul.mubr.bf16.gmra.mrb[0].mxu0 %v157
    %v269 = vpop.f32.mrb[0].mxu0
    %v270 = vadd.f32 0.0, %v269
    %v271 = vpop.f32.mrb[0].mxu0
    %v272 = vpop.f32.mrb[0].mxu0
    %v273 = vadd.f32 0.0, %v272
    %v274 = vpop.f32.mrb[0].mxu0
    %275 = vmatprep.mubr.bf16.mxu0 0
    %276 = vmatmul.mubr.bf16.gmra.mrb[0].mxu0 %v158
    %v277 = vpop.f32.mrb[0].mxu0
    %v278 = vadd.f32 0.0, %v277
    %v279 = vpop.f32.mrb[0].mxu0
    %v280 = vpop.f32.mrb[0].mxu0
    %v281 = vadd.f32 0.0, %v280
    %v282 = vpop.f32.mrb[0].mxu0
    %283 = vmatprep.mubr.bf16.mxu0 0
    %284 = vmatmul.mubr.bf16.gmra.mrb[0].mxu0 %v159
    %v285 = vpop.f32.mrb[0].mxu0
    %v286 = vadd.f32 0.0, %v285
    %v287 = vpop.f32.mrb[0].mxu0
    %v288 = vpop.f32.mrb[0].mxu0
    %v289 = vadd.f32 0.0, %v288
    %v290 = vpop.f32.mrb[0].mxu0
    %291 = vmatprep.mubr.bf16.mxu0 0
    %292 = vmatmul.mubr.bf16.gmra.mrb[0].mxu0 %v160
    %v293 = vpop.f32.mrb[0].mxu0
    %v294 = vadd.f32 0.0, %v293
    %v295 = vpop.f32.mrb[0].mxu0
    %v296 = vpop.f32.mrb[0].mxu0
    %v297 = vadd.f32 0.0, %v296
    %v298 = vpop.f32.mrb[0].mxu0
    %299 = vmatprep.mubr.bf16.mxu0 0
    %300 = vmatmul.mubr.bf16.gmra.mrb[0].mxu0 %v161
    %v301 = vpop.f32.mrb[0].mxu0
    %v302 = vadd.f32 0.0, %v301
    %v303 = vpop.f32.mrb[0].mxu0
    %v304 = vpop.f32.mrb[0].mxu0
    %v305 = vadd.f32 0.0, %v304
    %v306 = vpop.f32.mrb[0].mxu0
    %307 = vmatprep.mubr.bf16.mxu0 0
    %308 = vmatmul.mubr.bf16.gmra.mrb[0].mxu0 %v162
    %v309 = vpop.f32.mrb[0].mxu0
    %v310 = vadd.f32 0.0, %v309
    %v311 = vpop.f32.mrb[0].mxu0
    %v312 = vpop.f32.mrb[0].mxu0
    %v313 = vadd.f32 0.0, %v312
    %v314 = vpop.f32.mrb[0].mxu0
    %315 = vdwg.mxu0
    %v316 = vadd.f32 %v75, %v254
    %v317 = vadd.f32 %v76, %v257
    %v318 = vadd.f32 %v77, %v262
    %v319 = vadd.f32 %v78, %v265
    %v320 = vadd.f32 %v79, %v270
    %v321 = vadd.f32 %v80, %v273
    %v322 = vadd.f32 %v81, %v278
    %v323 = vadd.f32 %v82, %v281
    %v324 = vadd.f32 %v83, %v286
    %v325 = vadd.f32 %v84, %v289
    %v326 = vadd.f32 %v85, %v294
    %v327 = vadd.f32 %v86, %v297
    %v328 = vadd.f32 %v87, %v302
    %v329 = vadd.f32 %v88, %v305
    %v330 = vadd.f32 %v89, %v310
    %v331 = vadd.f32 %v90, %v313
    %332 = vst [vmem:[#allocation2] sm:$0xff] %v316
    %333 = vst [vmem:[#allocation2 + $0x8] sm:$0xff] %v317
    %334 = vst [vmem:[#allocation2 + $0x10] sm:$0xff] %v318
    %335 = vst [vmem:[#allocation2 + $0x18] sm:$0xff] %v319
    %336 = vst [vmem:[#allocation2 + $0x20] sm:$0xff] %v320
    %337 = vst [vmem:[#allocation2 + $0x28] sm:$0xff] %v321
    %338 = vst [vmem:[#allocation2 + $0x30] sm:$0xff] %v322
    %339 = vst [vmem:[#allocation2 + $0x38] sm:$0xff] %v323
    %340 = vst [vmem:[#allocation2 + $0x40] sm:$0xff] %v324
    %341 = vst [vmem:[#allocation2 + $0x48] sm:$0xff] %v325
    %342 = vst [vmem:[#allocation2 + $0x50] sm:$0xff] %v326
    %343 = vst [vmem:[#allocation2 + $0x58] sm:$0xff] %v327
    %344 = vst [vmem:[#allocation2 + $0x60] sm:$0xff] %v328
    %345 = vst [vmem:[#allocation2 + $0x68] sm:$0xff] %v329
    %346 = vst [vmem:[#allocation2 + $0x70] sm:$0xff] %v330
    %347 = vst [vmem:[#allocation2 + $0x78] sm:$0xff] %v331
    // Predicated region
    $region30: #{vit_forward.4} parent=1 // pred_check
      %p348 = pneg %p55
    $region31: #{vit_forward.4} parent=1 // pred_check_branch
      %350 = sbr.rel (%p348) target = $region33
    $region32: #{vit_forward.4} parent=1 // pred_region
      %v351 = vld [vmem:[#allocation2] sm:$0xff]
      %v352 = vld [vmem:[#allocation2 + $0x8] sm:$0xff]
      %v353 = vld [vmem:[#allocation2 + $0x10] sm:$0xff]
      %v354 = vld [vmem:[#allocation2 + $0x18] sm:$0xff]
      %v355 = vld [vmem:[#allocation2 + $0x20] sm:$0xff]
      %v356 = vld [vmem:[#allocation2 + $0x28] sm:$0xff]
      %v357 = vld [vmem:[#allocation2 + $0x30] sm:$0xff]
      %v358 = vld [vmem:[#allocation2 + $0x38] sm:$0xff]
      %v359 = vld [vmem:[#allocation2 + $0x40] sm:$0xff]
      %v360 = vld [vmem:[#allocation2 + $0x48] sm:$0xff]
      %v361 = vld [vmem:[#allocation2 + $0x50] sm:$0xff]
      %v362 = vld [vmem:[#allocation2 + $0x58] sm:$0xff]
      %v363 = vld [vmem:[#allocation2 + $0x60] sm:$0xff]
      %v364 = vld [vmem:[#allocation2 + $0x68] sm:$0xff]
      %v365 = vld [vmem:[#allocation2 + $0x70] sm:$0xff]
      %v366 = vld [vmem:[#allocation2 + $0x78] sm:$0xff]
      %v367 = vld [vmem:[#allocation8] sm:$0x1]
      %v369 = vlaneseq
      %v370 = vshrl.u32 %v369, 7
      %v371 = vsub.s32 0, %v370
      %v372 = vrot.slane %v367, %v371
      %v374 = vadd.f32 %v351, %v372
      %v375 = vadd.f32 %v352, %v372
      %v376 = vadd.f32 %v353, %v372
      %v377 = vadd.f32 %v354, %v372
      %v378 = vadd.f32 %v355, %v372
      %v379 = vadd.f32 %v356, %v372
      %v380 = vadd.f32 %v357, %v372
      %v381 = vadd.f32 %v358, %v372
      %v382 = vadd.f32 %v359, %v372
      %v383 = vadd.f32 %v360, %v372
      %v384 = vadd.f32 %v361, %v372
      %v385 = vadd.f32 %v362, %v372
      %v386 = vadd.f32 %v363, %v372
      %v387 = vadd.f32 %v364, %v372
      %v388 = vadd.f32 %v365, %v372
      %v389 = vadd.f32 %v366, %v372
      %390 = vst [vmem:[#allocation9] sm:$0xff] %v374
      %391 = vst [vmem:[#allocation9 + $0x8] sm:$0xff] %v375
      %392 = vst [vmem:[#allocation9 + $0x10] sm:$0xff] %v376
      %393 = vst [vmem:[#allocation9 + $0x18] sm:$0xff] %v377
      %394 = vst [vmem:[#allocation9 + $0x20] sm:$0xff] %v378
      %395 = vst [vmem:[#allocation9 + $0x28] sm:$0xff] %v379
      %396 = vst [vmem:[#allocation9 + $0x30] sm:$0xff] %v380
      %397 = vst [vmem:[#allocation9 + $0x38] sm:$0xff] %v381
      %398 = vst [vmem:[#allocation9 + $0x40] sm:$0xff] %v382
      %399 = vst [vmem:[#allocation9 + $0x48] sm:$0xff] %v383
      %400 = vst [vmem:[#allocation9 + $0x50] sm:$0xff] %v384
      %401 = vst [vmem:[#allocation9 + $0x58] sm:$0xff] %v385
      %402 = vst [vmem:[#allocation9 + $0x60] sm:$0xff] %v386
      %403 = vst [vmem:[#allocation9 + $0x68] sm:$0xff] %v387
      %404 = vst [vmem:[#allocation9 + $0x70] sm:$0xff] %v388
      %405 = vst [vmem:[#allocation9 + $0x78] sm:$0xff] %v389
    $region33: #{vit_forward.4} parent=1 // pred_fallthru
      _
    // Predicated region
    $region34: #{vit_forward.4} parent=1 // pred_check
      _
    $region35: #{vit_forward.4} parent=1 // pred_check_branch
      %407 = sbr.rel (0) target = $region37
    $region36: #{vit_forward.4} parent=1 // pred_region
      %s409 = ssub.s32 2048, 2048
      %410 = vsyncadd [#allocation5], %s409
      %s411 = sshll.u32 [#allocation9], 4
      %s412 = int_to_ptr.vmem [resolvable:$true] %s411
      %417 = dma.vmem_to_hbm [thread:$0]  %s412, 2048, %s3, [#allocation5], 128, 128, 8
    $region37: #{vit_forward.4} parent=1 // pred_fallthru
      _
    // Predicated region
    $region38: #{vit_forward.4} parent=1 // pred_check
      _
    $region39: #{vit_forward.4} parent=1 // pred_check_branch
      %419 = sbr.rel (0) target = $region41
    $region40: #{vit_forward.4} parent=1 // pred_region
      %420 = dma.done [#allocation5], 2048
    $region41: #{vit_forward.4} parent=1 // pred_fallthru
      _
    %421 = vsyncpa [#allocation4], 1
    %422 = vsyncpa [#allocation7], 1
    %423 = vsyncpa [#allocation5], 1

// kernel: vit_forward.7
$region0: #{vit_forward.7}
  #allocation0 [shape = 'u32[]', space=smem, size = 0x4, offset = 0x4, fixed_abs, tag = 'smem constant byte address 0x4 - core index']
  #allocation1 [shape = 'u32[144,128]{1,0:T(1,128)}', space=vmem, size = 0x12000, scoped, tag = 'internal scratch']
  %s0 = inlined_call_operand.hbm [shape: f32[8,128], index: 0, kind: input, shape index: {}]
  %s1 = inlined_call_operand.hbm [shape: f32[1,128], index: 1, kind: input, shape index: {}]
  %s2 = inlined_call_operand.hbm [shape: f32[1,128], index: 2, kind: input, shape index: {}]
  %s3 = inlined_call_operand.hbm [shape: bf16[128,128], index: 3, kind: input, shape index: {}]
  %s4 = inlined_call_operand.hbm [shape: f32[1,128], index: 4, kind: input, shape index: {}]
  %s5 = inlined_call_operand.hbm [shape: f32[8,128], index: 5, kind: output, shape index: {}]
  %s6 = sld [smem:[#allocation0]]
  $region50: #{vit_forward.7} parent=0
    _
  %s8 = ssub.s32 1, %s6
  %s9 = scalar_select 0, %s8, %s6
  $region1: #{vit_forward.7} parent=0
    #allocation2 [shape = 'u8[4096]{0}', space=vmem, size = 0x1000, scoped, tag = 'input window, operand 0, single buffered']
    #allocation3 [shape = 's32[1]{0}', space=sflag, size = 0x4, scoped, tag = 'scoped memory for vit_forward.7']
    #allocation4 [shape = 's32[1]{0}', space=sflag, size = 0x4, scoped, tag = 'scoped memory for vit_forward.7']
    #allocation5 [shape = 'u8[512]{0}', space=vmem, size = 0x400, scoped, tag = 'input window, operand 1, single buffered']
    #allocation6 [shape = 's32[1]{0}', space=sflag, size = 0x4, scoped, tag = 'scoped memory for vit_forward.7']
    #allocation7 [shape = 'u8[512]{0}', space=vmem, size = 0x400, scoped, tag = 'input window, operand 2, single buffered']
    #allocation8 [shape = 'u8[32768]{0}', space=vmem, size = 0x8000, scoped, tag = 'input window, operand 3, single buffered']
    #allocation9 [shape = 's32[1]{0}', space=sflag, size = 0x4, scoped, tag = 'scoped memory for vit_forward.7']
    #allocation10 [shape = 'u8[512]{0}', space=vmem, size = 0x400, scoped, tag = 'input window, operand 4, single buffered']
    #allocation11 [shape = 'u8[4096]{0}', space=vmem, size = 0x1000, scoped, tag = 'output window, operand 0, single buffered']
    %10 = vsyncpa [#allocation3], 0
    %11 = vsyncpa [#allocation6], 0
    %12 = vsyncpa [#allocation9], 0
    %13 = vsyncpa [#allocation4], 0
    // Predicated region
    $region2: #{vit_forward.7} parent=1 // pred_check
      _
    $region3: #{vit_forward.7} parent=1 // pred_check_branch
      %15 = sbr.rel (0) target = $region5
    $region4: #{vit_forward.7} parent=1 // pred_region
      %s17 = ssub.s32 128, 128
      %18 = vsyncadd [#allocation3], %s17
      %s20 = sshll.u32 [#allocation2], 4
      %s21 = int_to_ptr.vmem [resolvable:$true] %s20
      %23 = dma.hbm_to_vmem [thread:$0]  %s0, 128, %s21, [#allocation3]
    $region5: #{vit_forward.7} parent=1 // pred_fallthru
      _
    // Predicated region
    $region6: #{vit_forward.7} parent=1 // pred_check
      _
    $region7: #{vit_forward.7} parent=1 // pred_check_branch
      %25 = sbr.rel (0) target = $region9
    $region8: #{vit_forward.7} parent=1 // pred_region
      %s27 = ssub.s32 16, 16
      %28 = vsyncadd [#allocation6], %s27
      %s30 = sshll.u32 [#allocation5], 4
      %s31 = int_to_ptr.vmem [resolvable:$true] %s30
      %33 = dma.hbm_to_vmem [thread:$0]  %s1, 16, %s31, [#allocation6]
    $region9: #{vit_forward.7} parent=1 // pred_fallthru
      _
    // Predicated region
    $region10: #{vit_forward.7} parent=1 // pred_check
      _
    $region11: #{vit_forward.7} parent=1 // pred_check_branch
      %35 = sbr.rel (0) target = $region13
    $region12: #{vit_forward.7} parent=1 // pred_region
      %s37 = ssub.s32 16, 16
      %38 = vsyncadd [#allocation6], %s37
      %s40 = sshll.u32 [#allocation7], 4
      %s41 = int_to_ptr.vmem [resolvable:$true] %s40
      %43 = dma.hbm_to_vmem [thread:$0]  %s2, 16, %s41, [#allocation6]
    $region13: #{vit_forward.7} parent=1 // pred_fallthru
      _
    // Predicated region
    $region14: #{vit_forward.7} parent=1 // pred_check
      _
    $region15: #{vit_forward.7} parent=1 // pred_check_branch
      %45 = sbr.rel (0) target = $region17
    $region16: #{vit_forward.7} parent=1 // pred_region
      %s47 = ssub.s32 1024, 1024
      %48 = vsyncadd [#allocation9], %s47
      %s49 = sshll.u32 [#allocation8], 4
      %s50 = int_to_ptr.vmem [resolvable:$true] %s49
      %55 = dma.hbm_to_vmem [thread:$0]  %s3, 1024, %s50, [#allocation9], 64, 64, 4
    $region17: #{vit_forward.7} parent=1 // pred_fallthru
      _
    // Predicated region
    $region18: #{vit_forward.7} parent=1 // pred_check
      _
    $region19: #{vit_forward.7} parent=1 // pred_check_branch
      %57 = sbr.rel (0) target = $region21
    $region20: #{vit_forward.7} parent=1 // pred_region
      %s59 = ssub.s32 16, 16
      %60 = vsyncadd [#allocation9], %s59
      %s62 = sshll.u32 [#allocation10], 4
      %s63 = int_to_ptr.vmem [resolvable:$true] %s62
      %65 = dma.hbm_to_vmem [thread:$0]  %s4, 16, %s63, [#allocation9]
    $region21: #{vit_forward.7} parent=1 // pred_fallthru
      _
    // Predicated region
    $region22: #{vit_forward.7} parent=1 // pred_check
      _
    $region23: #{vit_forward.7} parent=1 // pred_check_branch
      %67 = sbr.rel (0) target = $region25
    $region24: #{vit_forward.7} parent=1 // pred_region
      %68 = dma.done [#allocation3], 128
    $region25: #{vit_forward.7} parent=1 // pred_fallthru
      _
    // Predicated region
    $region26: #{vit_forward.7} parent=1 // pred_check
      _
    $region27: #{vit_forward.7} parent=1 // pred_check_branch
      %70 = sbr.rel (0) target = $region29
    $region28: #{vit_forward.7} parent=1 // pred_region
      %71 = dma.done [#allocation6], 16
    $region29: #{vit_forward.7} parent=1 // pred_fallthru
      _
    // Predicated region
    $region30: #{vit_forward.7} parent=1 // pred_check
      _
    $region31: #{vit_forward.7} parent=1 // pred_check_branch
      %73 = sbr.rel (0) target = $region33
    $region32: #{vit_forward.7} parent=1 // pred_region
      %74 = dma.done [#allocation6], 16
    $region33: #{vit_forward.7} parent=1 // pred_fallthru
      _
    // Predicated region
    $region34: #{vit_forward.7} parent=1 // pred_check
      _
    $region35: #{vit_forward.7} parent=1 // pred_check_branch
      %76 = sbr.rel (0) target = $region37
    $region36: #{vit_forward.7} parent=1 // pred_region
      %77 = dma.done [#allocation9], 1024
    $region37: #{vit_forward.7} parent=1 // pred_fallthru
      _
    // Predicated region
    $region38: #{vit_forward.7} parent=1 // pred_check
      _
    $region39: #{vit_forward.7} parent=1 // pred_check_branch
      %79 = sbr.rel (0) target = $region41
    $region40: #{vit_forward.7} parent=1 // pred_region
      %80 = dma.done [#allocation9], 16
    $region41: #{vit_forward.7} parent=1 // pred_fallthru
      _
    %v82 = vld [vmem:[#allocation2] sm:$0xff]
    %v83 = vld [vmem:[#allocation5] sm:$0x1]
    %v84 = vld [vmem:[#allocation7] sm:$0x1]
    %v85 = vlaneseq
    %v86 = vand.u32 %v85, 127
    %vm87 = vcmp.lt.s32.totalorder %v86, 32
    %v88 = vsel %vm87, 1, 0
    %v89 = vcvt.s32.f32 %v88
    %90 = vadd.xlane.f32.xlu0 %v82
    %v91 = vpop.xlane.xlu0 %90
    %v92 = vmul.f32 %v91, 0.03125
    %v93 = vsub.f32 %v82, %v92
    %v94 = vmul.f32 %v93, %v89
    %v95 = vmul.f32 %v94, %v94
    %96 = vadd.xlane.f32.xlu0 %v95
    %v97 = vpop.xlane.xlu0 %96
    %v98 = vmul.f32 %v97, 0.03125
    %v99 = vadd.f32 %v98, 1e-05
    %v100 = vrsqrt.pop %v99
    %v101 = vmul.f32 %v94, %v100
    %v103 = vlaneseq
    %v104 = vshrl.u32 %v103, 7
    %v105 = vsub.s32 0, %v104
    %v106 = vrot.slane %v83, %v105
    %v108 = vmul.f32 %v101, %v106
    %v110 = vlaneseq
    %v111 = vshrl.u32 %v110, 7
    %v112 = vsub.s32 0, %v111
    %v113 = vrot.slane %v84, %v112
    %v115 = vadd.f32 %v108, %v113
    %v116 = vpack.c.bf16 %v115, %v115
    %v117 = vld [vmem:[#allocation8] sm:$0xf]
    %v118 = vld [vmem:[#allocation8 + $0x4] sm:$0xf]
    %v119 = vld [vmem:[#allocation8 + $0x8] sm:$0xf]
    %v120 = vld [vmem:[#allocation8 + $0xc] sm:$0xf]
    %v121 = vld [vmem:[#allocation8 + $0x10] sm:$0xf]
    %v122 = vld [vmem:[#allocation8 + $0x14] sm:$0xf]
    %v123 = vld [vmem:[#allocation8 + $0x18] sm:$0xf]
    %v124 = vld [vmem:[#allocation8 + $0x1c] sm:$0xf]
    %v125 = vld [vmem:[#allocation8 + $0x20] sm:$0xf]
    %v126 = vld [vmem:[#allocation8 + $0x24] sm:$0xf]
    %v127 = vld [vmem:[#allocation8 + $0x28] sm:$0xf]
    %v128 = vld [vmem:[#allocation8 + $0x2c] sm:$0xf]
    %v129 = vld [vmem:[#allocation8 + $0x30] sm:$0xf]
    %v130 = vld [vmem:[#allocation8 + $0x34] sm:$0xf]
    %v131 = vld [vmem:[#allocation8 + $0x38] sm:$0xf]
    %v132 = vld [vmem:[#allocation8 + $0x3c] sm:$0xf]
    %v133 = vld [vmem:[#allocation10] sm:$0x1]
    %v135 = vlaneseq
    %v136 = vshrl.u32 %v135, 7
    %v137 = vsub.s32 0, %v136
    %v138 = vrot.slane %v133, %v137
    %v156 = vunpack.c.l.b16 %v117
    %v157 = vunpack.c.l.b16 %v118
    %v158 = vunpack.c.l.b16 %v119
    %v159 = vunpack.c.l.b16 %v120
    %v160 = vunpack.c.l.b16 %v121
    %v161 = vunpack.c.l.b16 %v122
    %v162 = vunpack.c.l.b16 %v123
    %v163 = vunpack.c.l.b16 %v124
    %v164 = vunpack.c.l.b16 %v125
    %v165 = vunpack.c.l.b16 %v126
    %v166 = vunpack.c.l.b16 %v127
    %v167 = vunpack.c.l.b16 %v128
    %v168 = vunpack.c.l.b16 %v129
    %v169 = vunpack.c.l.b16 %v130
    %v170 = vunpack.c.l.b16 %v131
    %v171 = vunpack.c.l.b16 %v132
    %v172 = vpack.c.b16 %v157, %v156
    %v173 = vpack.c.b16 %v159, %v158
    %v174 = vpack.c.b16 %v161, %v160
    %v175 = vpack.c.b16 %v163, %v162
    %v176 = vpack.c.b16 %v165, %v164
    %v177 = vpack.c.b16 %v167, %v166
    %v178 = vpack.c.b16 %v169, %v168
    %v179 = vpack.c.b16 %v171, %v170
    %188 = vmatprep.subr.bf16.mxu0 0
    %189 = vmatpush1.bf16.msra.mxu0 %v172
    %190 = vmatprep.subr.bf16.mxu0 0
    %191 = vmatpush1.bf16.msra.mxu0 %v173
    %192 = vmatprep.subr.bf16.mxu0 0
    %193 = vmatpush1.bf16.msra.mxu0 %v174
    %194 = vmatprep.subr.bf16.mxu0 0
    %195 = vmatpush1.bf16.msra.mxu0 %v175
    %196 = vmatprep.subr.bf16.mxu0 0
    %197 = vmatpush1.bf16.msra.mxu0 %v176
    %198 = vmatprep.subr.bf16.mxu0 0
    %199 = vmatpush1.bf16.msra.mxu0 %v177
    %200 = vmatprep.subr.bf16.mxu0 0
    %201 = vmatpush1.bf16.msra.mxu0 %v178
    %202 = vmatprep.subr.bf16.mxu0 0
    %203 = vmatpush1.bf16.msra.mxu0 %v179
    %204 = vmatprep.subr.bf16.mxu0 0
    %205 = vmatpush1.bf16.msra.mxu0 0
    %206 = vmatprep.subr.bf16.mxu0 0
    %207 = vmatpush1.bf16.msra.mxu0 0
    %208 = vmatprep.subr.bf16.mxu0 0
    %209 = vmatpush1.bf16.msra.mxu0 0
    %210 = vmatprep.subr.bf16.mxu0 0
    %211 = vmatpush1.bf16.msra.mxu0 0
    %212 = vmatprep.subr.bf16.mxu0 0
    %213 = vmatpush1.bf16.msra.mxu0 0
    %214 = vmatprep.subr.bf16.mxu0 0
    %215 = vmatpush1.bf16.msra.mxu0 0
    %216 = vmatprep.subr.bf16.mxu0 0
    %217 = vmatpush1.bf16.msra.mxu0 0
    %218 = vmatprep.subr.bf16.mxu0 0
    %219 = vmatpush1.bf16.msra.mxu0 0
    %220 = vmatprep.mubr.bf16.mxu0 0
    %221 = vmatmul.mubr.bf16.gmra.mrb[0].mxu0 %v116
    %v222 = vpop.f32.mrb[0].mxu0
    %v223 = vadd.f32 %v138, %v222
    %v224 = vpop.f32.mrb[0].mxu0
    %v225 = vpop.f32.mrb[0].mxu0
    %v226 = vpop.f32.mrb[0].mxu0
    %227 = vdwg.mxu0
    %228 = vst [vmem:[#allocation11] sm:$0xff] %v223
    // Predicated region
    $region42: #{vit_forward.7} parent=1 // pred_check
      _
    $region43: #{vit_forward.7} parent=1 // pred_check_branch
      %230 = sbr.rel (0) target = $region45
    $region44: #{vit_forward.7} parent=1 // pred_region
      %s232 = ssub.s32 128, 128
      %233 = vsyncadd [#allocation4], %s232
      %s235 = sshll.u32 [#allocation11], 4
      %s236 = int_to_ptr.vmem [resolvable:$true] %s235
      %238 = dma.vmem_to_hbm [thread:$0]  %s236, 128, %s5, [#allocation4]
    $region45: #{vit_forward.7} parent=1 // pred_fallthru
      _
    // Predicated region
    $region46: #{vit_forward.7} parent=1 // pred_check
      _
    $region47: #{vit_forward.7} parent=1 // pred_check_branch
      %240 = sbr.rel (0) target = $region49
    $region48: #{vit_forward.7} parent=1 // pred_region
      %241 = dma.done [#allocation4], 128
    $region49: #{vit_forward.7} parent=1 // pred_fallthru
      _
    %242 = vsyncpa [#allocation3], 1
    %243 = vsyncpa [#allocation6], 1
    %244 = vsyncpa [#allocation9], 1
    %245 = vsyncpa [#allocation4], 1

// kernel: vit_forward.5
$region0: #{vit_forward.5}
  #allocation0 [shape = 'u32[]', space=smem, size = 0x4, offset = 0x4, fixed_abs, tag = 'smem constant byte address 0x4 - core index']
  #allocation1 [shape = 'u32[144,128]{1,0:T(1,128)}', space=vmem, size = 0x12000, scoped, tag = 'internal scratch']
  #allocation2 [shape = 'f32[24,96]{1,0:T(8,128)}', space=vmem, size = 0x3000, scoped, tag = 'scratch operand']
  #allocation3 [shape = 'f32[24,32]{1,0:T(8,128)}', space=vmem, size = 0x3000, scoped, tag = 'scratch operand']
  %s0 = inlined_call_operand.hbm [shape: f32[2,24,128], index: 0, kind: input, shape index: {}]
  %s1 = inlined_call_operand.hbm [shape: f32[1,128], index: 1, kind: input, shape index: {}]
  %s2 = inlined_call_operand.hbm [shape: f32[1,128], index: 2, kind: input, shape index: {}]
  %s3 = inlined_call_operand.hbm [shape: bf16[128,96], index: 3, kind: input, shape index: {}]
  %s4 = inlined_call_operand.hbm [shape: f32[1,96], index: 4, kind: input, shape index: {}]
  %s5 = inlined_call_operand.hbm [shape: bf16[32,128], index: 5, kind: input, shape index: {}]
  %s6 = inlined_call_operand.hbm [shape: f32[1,128], index: 6, kind: input, shape index: {}]
  %s7 = inlined_call_operand.hbm [shape: f32[1,128], index: 7, kind: input, shape index: {}]
  %s8 = inlined_call_operand.hbm [shape: f32[1,128], index: 8, kind: input, shape index: {}]
  %s9 = inlined_call_operand.hbm [shape: bf16[128,128], index: 9, kind: input, shape index: {}]
  %s10 = inlined_call_operand.hbm [shape: f32[1,128], index: 10, kind: input, shape index: {}]
  %s11 = inlined_call_operand.hbm [shape: bf16[128,128], index: 11, kind: input, shape index: {}]
  %s12 = inlined_call_operand.hbm [shape: f32[1,128], index: 12, kind: input, shape index: {}]
  %s13 = inlined_call_operand.hbm [shape: f32[2,24,128], index: 13, kind: output, shape index: {}]
  %s14 = sld [smem:[#allocation0]]
  $region137: #{vit_forward.5} parent=0
    _
  %s16 = ssub.s32 1, %s14
  %s17 = scalar_select 0, %s16, %s14
  $region1: #{vit_forward.5} parent=0
    #allocation4 [shape = 'u8[24576]{0}', space=vmem, size = 0x6000, scoped, tag = 'input window, operand 0']
    #allocation5 [shape = 's32[2]{0}', space=sflag, size = 0x8, scoped, tag = 'scoped memory for vit_forward.5']
    #allocation6 [shape = 's32[2]{0}', space=sflag, size = 0x8, scoped, tag = 'scoped memory for vit_forward.5']
    #allocation7 [shape = 'u8[512]{0}', space=vmem, size = 0x400, scoped, tag = 'input window, operand 1, single buffered']
    #allocation8 [shape = 's32[1]{0}', space=sflag, size = 0x4, scoped, tag = 'scoped memory for vit_forward.5']
    #allocation9 [shape = 'u8[512]{0}', space=vmem, size = 0x400, scoped, tag = 'input window, operand 2, single buffered']
    #allocation10 [shape = 'u8[32768]{0}', space=vmem, size = 0x8000, scoped, tag = 'input window, operand 3, single buffered']
    #allocation11 [shape = 's32[1]{0}', space=sflag, size = 0x4, scoped, tag = 'scoped memory for vit_forward.5']
    #allocation12 [shape = 'u8[512]{0}', space=vmem, size = 0x400, scoped, tag = 'input window, operand 4, single buffered']
    #allocation13 [shape = 'u8[8192]{0}', space=vmem, size = 0x2000, scoped, tag = 'input window, operand 5, single buffered']
    #allocation14 [shape = 's32[1]{0}', space=sflag, size = 0x4, scoped, tag = 'scoped memory for vit_forward.5']
    #allocation15 [shape = 'u8[512]{0}', space=vmem, size = 0x400, scoped, tag = 'input window, operand 6, single buffered']
    #allocation16 [shape = 'u8[512]{0}', space=vmem, size = 0x400, scoped, tag = 'input window, operand 7, single buffered']
    #allocation17 [shape = 's32[1]{0}', space=sflag, size = 0x4, scoped, tag = 'scoped memory for vit_forward.5']
    #allocation18 [shape = 'u8[512]{0}', space=vmem, size = 0x400, scoped, tag = 'input window, operand 8, single buffered']
    #allocation19 [shape = 'u8[32768]{0}', space=vmem, size = 0x8000, scoped, tag = 'input window, operand 9, single buffered']
    #allocation20 [shape = 's32[1]{0}', space=sflag, size = 0x4, scoped, tag = 'scoped memory for vit_forward.5']
    #allocation21 [shape = 'u8[512]{0}', space=vmem, size = 0x400, scoped, tag = 'input window, operand 10, single buffered']
    #allocation22 [shape = 'u8[32768]{0}', space=vmem, size = 0x8000, scoped, tag = 'input window, operand 11, single buffered']
    #allocation23 [shape = 's32[1]{0}', space=sflag, size = 0x4, scoped, tag = 'scoped memory for vit_forward.5']
    #allocation24 [shape = 'u8[512]{0}', space=vmem, size = 0x400, scoped, tag = 'input window, operand 12, single buffered']
    #allocation25 [shape = 'u8[24576]{0}', space=vmem, size = 0x6000, scoped, tag = 'output window, operand 0']
    %18 = vsyncpa [#allocation5], 0
    %s19 = scalar_lea.sflag [#allocation5], 1
    %20 = vsyncpa %s19, 0
    %21 = vsyncpa [#allocation8], 0
    %22 = vsyncpa [#allocation11], 0
    %23 = vsyncpa [#allocation14], 0
    %24 = vsyncpa [#allocation17], 0
    %25 = vsyncpa [#allocation20], 0
    %26 = vsyncpa [#allocation23], 0
    %27 = vsyncpa [#allocation6], 0
    %s28 = scalar_lea.sflag [#allocation6], 1
    %29 = vsyncpa %s28, 0
    loop: start=0, step=1, limit=4
    $region2: #{vit_forward.5} parent=1 // loop_pre_header
      _
    $region3: #{vit_forward.5} parent=1 // loop_header
      %s31 = sphi 0, %s35
      %p32 = scmp.ge.s32.totalorder %s31, 4
      %s41 = sphi 0, %s43
      %s44 = sphi 0, %s41
      %s45 = sphi 0, %s44
      %s61 = sphi 0, %s45
      %s65 = sphi 0, %s65
      %s67 = sphi 0, %s65
      %s68 = sphi 0, %s67
      %s82 = sphi 0, %s68
      %s86 = sphi 0, %s86
      %s88 = sphi 0, %s86
      %s89 = sphi 0, %s88
      %s103 = sphi 0, %s89
      %s107 = sphi 0, %s107
      %s109 = sphi 0, %s107
      %s110 = sphi 0, %s109
      %s124 = sphi 0, %s110
      %s128 = sphi 0, %s128
      %s130 = sphi 0, %s128
      %s131 = sphi 0, %s130
      %s145 = sphi 0, %s131
      %s149 = sphi 0, %s149
      %s151 = sphi 0, %s149
      %s152 = sphi 0, %s151
      %s166 = sphi 0, %s152
      %s170 = sphi 0, %s170
      %s172 = sphi 0, %s170
      %s173 = sphi 0, %s172
      %s187 = sphi 0, %s173
      %s191 = sphi 0, %s191
      %s193 = sphi 0, %s191
      %s194 = sphi 0, %s193
      %s208 = sphi 0, %s194
      %s212 = sphi 0, %s212
      %s214 = sphi 0, %s212
      %s215 = sphi 0, %s214
      %s229 = sphi 0, %s215
      %s233 = sphi 0, %s233
      %s235 = sphi 0, %s233
      %s236 = sphi 0, %s235
      %s250 = sphi 0, %s236
      %s254 = sphi 0, %s254
      %s256 = sphi 0, %s254
      %s257 = sphi 0, %s256
      %s271 = sphi 0, %s257
      %s275 = sphi 0, %s275
      %s277 = sphi 0, %s275
      %s278 = sphi 0, %s277
      %s292 = sphi 0, %s278
      %s296 = sphi 0, %s296
      %s298 = sphi 0, %s296
      %s299 = sphi 0, %s298
      %s313 = sphi 0, %s299
      %s319 = sphi 0, %s321
      %s322 = sphi 0, %s319
      %s323 = sphi 0, %s322
      %s339 = sphi 0, %s323
    $region4: #{vit_forward.5} parent=1 // loop_header_branch
      %34 = sbr.rel (%p32) target = $region8
    $region5: #{vit_forward.5} parent=1 // loop_body
      %s36 = ssub.s32 %s31, 1
      %s37 = ssub.s32 %s31, 2
      %s38 = sadd.s32 %s31, 1
      %s39 = ssub.s32 %s31, %s38
      %p40 = scmp.eq.s32.totalorder %s39, 0
      %s42 = sadd.s32 %s41, 1
      %s43 = scalar_select %p40, %s41, %s42
      %p46 = pneg %p40
      %p47 = scmp.eq.s32.totalorder %s31, 1
      %p48 = por %p46, %p47
      %p49 = scmp.ne.s32.totalorder %s41, %s44
      %p50 = scmp.eq.s32.totalorder %s31, 0
      %p51 = por %p49, %p50
      %p52 = scmp.ne.s32.totalorder %s41, %s44
      %p53 = scmp.eq.s32.totalorder %s36, 1
      %p54 = por %p52, %p53
      %p55 = scmp.ne.s32.totalorder %s44, %s45
      %p56 = scmp.eq.s32.totalorder %s36, 0
      %p57 = por %p55, %p56
      %p58 = scmp.ne.s32.totalorder %s44, %s45
      %p59 = scmp.eq.s32.totalorder %s37, 1
      %p60 = por %p58, %p59
      %p62 = scmp.ne.s32.totalorder %s45, %s61
      %p63 = scmp.eq.s32.totalorder %s37, 0
      %p64 = por %p62, %p63
      %s66 = sadd.s32 %s65, 1
      %p69 = scmp.eq.s32.totalorder %s31, 1
      %p70 = scmp.ne.s32.totalorder %s65, %s67
      %p71 = scmp.eq.s32.totalorder %s31, 0
      %p72 = por %p70, %p71
      %p73 = scmp.ne.s32.totalorder %s65, %s67
      %p74 = scmp.eq.s32.totalorder %s36, 1
      %p75 = por %p73, %p74
      %p76 = scmp.ne.s32.totalorder %s67, %s68
      %p77 = scmp.eq.s32.totalorder %s36, 0
      %p78 = por %p76, %p77
      %p79 = scmp.ne.s32.totalorder %s67, %s68
      %p80 = scmp.eq.s32.totalorder %s37, 1
      %p81 = por %p79, %p80
      %p83 = scmp.ne.s32.totalorder %s68, %s82
      %p84 = scmp.eq.s32.totalorder %s37, 0
      %p85 = por %p83, %p84
      %s87 = sadd.s32 %s86, 1
      %p90 = scmp.eq.s32.totalorder %s31, 1
      %p91 = scmp.ne.s32.totalorder %s86, %s88
      %p92 = scmp.eq.s32.totalorder %s31, 0
      %p93 = por %p91, %p92
      %p94 = scmp.ne.s32.totalorder %s86, %s88
      %p95 = scmp.eq.s32.totalorder %s36, 1
      %p96 = por %p94, %p95
      %p97 = scmp.ne.s32.totalorder %s88, %s89
      %p98 = scmp.eq.s32.totalorder %s36, 0
      %p99 = por %p97, %p98
      %p100 = scmp.ne.s32.totalorder %s88, %s89
      %p101 = scmp.eq.s32.totalorder %s37, 1
      %p102 = por %p100, %p101
      %p104 = scmp.ne.s32.totalorder %s89, %s103
      %p105 = scmp.eq.s32.totalorder %s37, 0
      %p106 = por %p104, %p105
      %s108 = sadd.s32 %s107, 1
      %p111 = scmp.eq.s32.totalorder %s31, 1
      %p112 = scmp.ne.s32.totalorder %s107, %s109
      %p113 = scmp.eq.s32.totalorder %s31, 0
      %p114 = por %p112, %p113
      %p115 = scmp.ne.s32.totalorder %s107, %s109
      %p116 = scmp.eq.s32.totalorder %s36, 1
      %p117 = por %p115, %p116
      %p118 = scmp.ne.s32.totalorder %s109, %s110
      %p119 = scmp.eq.s32.totalorder %s36, 0
      %p120 = por %p118, %p119
      %p121 = scmp.ne.s32.totalorder %s109, %s110
      %p122 = scmp.eq.s32.totalorder %s37, 1
      %p123 = por %p121, %p122
      %p125 = scmp.ne.s32.totalorder %s110, %s124
      %p126 = scmp.eq.s32.totalorder %s37, 0
      %p127 = por %p125, %p126
      %s129 = sadd.s32 %s128, 1
      %p132 = scmp.eq.s32.totalorder %s31, 1
      %p133 = scmp.ne.s32.totalorder %s128, %s130
      %p134 = scmp.eq.s32.totalorder %s31, 0
      %p135 = por %p133, %p134
      %p136 = scmp.ne.s32.totalorder %s128, %s130
      %p137 = scmp.eq.s32.totalorder %s36, 1
      %p138 = por %p136, %p137
      %p139 = scmp.ne.s32.totalorder %s130, %s131
      %p140 = scmp.eq.s32.totalorder %s36, 0
      %p141 = por %p139, %p140
      %p142 = scmp.ne.s32.totalorder %s130, %s131
      %p143 = scmp.eq.s32.totalorder %s37, 1
      %p144 = por %p142, %p143
      %p146 = scmp.ne.s32.totalorder %s131, %s145
      %p147 = scmp.eq.s32.totalorder %s37, 0
      %p148 = por %p146, %p147
      %s150 = sadd.s32 %s149, 1
      %p153 = scmp.eq.s32.totalorder %s31, 1
      %p154 = scmp.ne.s32.totalorder %s149, %s151
      %p155 = scmp.eq.s32.totalorder %s31, 0
      %p156 = por %p154, %p155
      %p157 = scmp.ne.s32.totalorder %s149, %s151
      %p158 = scmp.eq.s32.totalorder %s36, 1
      %p159 = por %p157, %p158
      %p160 = scmp.ne.s32.totalorder %s151, %s152
      %p161 = scmp.eq.s32.totalorder %s36, 0
      %p162 = por %p160, %p161
      %p163 = scmp.ne.s32.totalorder %s151, %s152
      %p164 = scmp.eq.s32.totalorder %s37, 1
      %p165 = por %p163, %p164
      %p167 = scmp.ne.s32.totalorder %s152, %s166
      %p168 = scmp.eq.s32.totalorder %s37, 0
      %p169 = por %p167, %p168
      %s171 = sadd.s32 %s170, 1
      %p174 = scmp.eq.s32.totalorder %s31, 1
      %p175 = scmp.ne.s32.totalorder %s170, %s172
      %p176 = scmp.eq.s32.totalorder %s31, 0
      %p177 = por %p175, %p176
      %p178 = scmp.ne.s32.totalorder %s170, %s172
      %p179 = scmp.eq.s32.totalorder %s36, 1
      %p180 = por %p178, %p179
      %p181 = scmp.ne.s32.totalorder %s172, %s173
      %p182 = scmp.eq.s32.totalorder %s36, 0
      %p183 = por %p181, %p182
      %p184 = scmp.ne.s32.totalorder %s172, %s173
      %p185 = scmp.eq.s32.totalorder %s37, 1
      %p186 = por %p184, %p185
      %p188 = scmp.ne.s32.totalorder %s173, %s187
      %p189 = scmp.eq.s32.totalorder %s37, 0
      %p190 = por %p188, %p189
      %s192 = sadd.s32 %s191, 1
      %p195 = scmp.eq.s32.totalorder %s31, 1
      %p196 = scmp.ne.s32.totalorder %s191, %s193
      %p197 = scmp.eq.s32.totalorder %s31, 0
      %p198 = por %p196, %p197
      %p199 = scmp.ne.s32.totalorder %s191, %s193
      %p200 = scmp.eq.s32.totalorder %s36, 1
      %p201 = por %p199, %p200
      %p202 = scmp.ne.s32.totalorder %s193, %s194
      %p203 = scmp.eq.s32.totalorder %s36, 0
      %p204 = por %p202, %p203
      %p205 = scmp.ne.s32.totalorder %s193, %s194
      %p206 = scmp.eq.s32.totalorder %s37, 1
      %p207 = por %p205, %p206
      %p209 = scmp.ne.s32.totalorder %s194, %s208
      %p210 = scmp.eq.s32.totalorder %s37, 0
      %p211 = por %p209, %p210
      %s213 = sadd.s32 %s212, 1
      %p216 = scmp.eq.s32.totalorder %s31, 1
      %p217 = scmp.ne.s32.totalorder %s212, %s214
      %p218 = scmp.eq.s32.totalorder %s31, 0
      %p219 = por %p217, %p218
      %p220 = scmp.ne.s32.totalorder %s212, %s214
      %p221 = scmp.eq.s32.totalorder %s36, 1
      %p222 = por %p220, %p221
      %p223 = scmp.ne.s32.totalorder %s214, %s215
      %p224 = scmp.eq.s32.totalorder %s36, 0
      %p225 = por %p223, %p224
      %p226 = scmp.ne.s32.totalorder %s214, %s215
      %p227 = scmp.eq.s32.totalorder %s37, 1
      %p228 = por %p226, %p227
      %p230 = scmp.ne.s32.totalorder %s215, %s229
      %p231 = scmp.eq.s32.totalorder %s37, 0
      %p232 = por %p230, %p231
      %s234 = sadd.s32 %s233, 1
      %p237 = scmp.eq.s32.totalorder %s31, 1
      %p238 = scmp.ne.s32.totalorder %s233, %s235
      %p239 = scmp.eq.s32.totalorder %s31, 0
      %p240 = por %p238, %p239
      %p241 = scmp.ne.s32.totalorder %s233, %s235
      %p242 = scmp.eq.s32.totalorder %s36, 1
      %p243 = por %p241, %p242
      %p244 = scmp.ne.s32.totalorder %s235, %s236
      %p245 = scmp.eq.s32.totalorder %s36, 0
      %p246 = por %p244, %p245
      %p247 = scmp.ne.s32.totalorder %s235, %s236
      %p248 = scmp.eq.s32.totalorder %s37, 1
      %p249 = por %p247, %p248
      %p251 = scmp.ne.s32.totalorder %s236, %s250
      %p252 = scmp.eq.s32.totalorder %s37, 0
      %p253 = por %p251, %p252
      %s255 = sadd.s32 %s254, 1
      %p258 = scmp.eq.s32.totalorder %s31, 1
      %p259 = scmp.ne.s32.totalorder %s254, %s256
      %p260 = scmp.eq.s32.totalorder %s31, 0
      %p261 = por %p259, %p260
      %p262 = scmp.ne.s32.totalorder %s254, %s256
      %p263 = scmp.eq.s32.totalorder %s36, 1
      %p264 = por %p262, %p263
      %p265 = scmp.ne.s32.totalorder %s256, %s257
      %p266 = scmp.eq.s32.totalorder %s36, 0
      %p267 = por %p265, %p266
      %p268 = scmp.ne.s32.totalorder %s256, %s257
      %p269 = scmp.eq.s32.totalorder %s37, 1
      %p270 = por %p268, %p269
      %p272 = scmp.ne.s32.totalorder %s257, %s271
      %p273 = scmp.eq.s32.totalorder %s37, 0
      %p274 = por %p272, %p273
      %s276 = sadd.s32 %s275, 1
      %p279 = scmp.eq.s32.totalorder %s31, 1
      %p280 = scmp.ne.s32.totalorder %s275, %s277
      %p281 = scmp.eq.s32.totalorder %s31, 0
      %p282 = por %p280, %p281
      %p283 = scmp.ne.s32.totalorder %s275, %s277
      %p284 = scmp.eq.s32.totalorder %s36, 1
      %p285 = por %p283, %p284
      %p286 = scmp.ne.s32.totalorder %s277, %s278
      %p287 = scmp.eq.s32.totalorder %s36, 0
      %p288 = por %p286, %p287
      %p289 = scmp.ne.s32.totalorder %s277, %s278
      %p290 = scmp.eq.s32.totalorder %s37, 1
      %p291 = por %p289, %p290
      %p293 = scmp.ne.s32.totalorder %s278, %s292
      %p294 = scmp.eq.s32.totalorder %s37, 0
      %p295 = por %p293, %p294
      %s297 = sadd.s32 %s296, 1
      %p300 = scmp.eq.s32.totalorder %s31, 1
      %p301 = scmp.ne.s32.totalorder %s296, %s298
      %p302 = scmp.eq.s32.totalorder %s31, 0
      %p303 = por %p301, %p302
      %p304 = scmp.ne.s32.totalorder %s296, %s298
      %p305 = scmp.eq.s32.totalorder %s36, 1
      %p306 = por %p304, %p305
      %p307 = scmp.ne.s32.totalorder %s298, %s299
      %p308 = scmp.eq.s32.totalorder %s36, 0
      %p309 = por %p307, %p308
      %p310 = scmp.ne.s32.totalorder %s298, %s299
      %p311 = scmp.eq.s32.totalorder %s37, 1
      %p312 = por %p310, %p311
      %p314 = scmp.ne.s32.totalorder %s299, %s313
      %p315 = scmp.eq.s32.totalorder %s37, 0
      %p316 = por %p314, %p315
      %s317 = ssub.s32 %s31, %s38
      %p318 = scmp.eq.s32.totalorder %s317, 0
      %s320 = sadd.s32 %s319, 1
      %s321 = scalar_select %p318, %s319, %s320
      %p324 = pneg %p318
      %p325 = scmp.eq.s32.totalorder %s31, 1
      %p326 = por %p324, %p325
      %p327 = scmp.ne.s32.totalorder %s319, %s322
      %p328 = scmp.eq.s32.totalorder %s31, 0
      %p329 = por %p327, %p328
      %p330 = scmp.ne.s32.totalorder %s319, %s322
      %p331 = scmp.eq.s32.totalorder %s36, 1
      %p332 = por %p330, %p331
      %p333 = scmp.ne.s32.totalorder %s322, %s323
      %p334 = scmp.eq.s32.totalorder %s36, 0
      %p335 = por %p333, %p334
      %p336 = scmp.ne.s32.totalorder %s322, %s323
      %p337 = scmp.eq.s32.totalorder %s37, 1
      %p338 = por %p336, %p337
      %p340 = scmp.ne.s32.totalorder %s323, %s339
      %p341 = scmp.eq.s32.totalorder %s37, 0
      %p342 = por %p340, %p341
      %p343 = scmp.le.s32.totalorder 1, %s31
      %p344 = scmp.lt.s32.totalorder %s31, 3
      %p345 = pnand %p343, %p344
      %p346 = pneg %p345
      // Predicated region
      $region9: #{vit_forward.5} parent=5 // pred_check
        _
      $region10: #{vit_forward.5} parent=5 // pred_check_branch
        %348 = sbr.rel (%p345) target = $region12
      $region11: #{vit_forward.5} parent=5 // pred_region
        %s349 = ssub.s32 %s31, 1
        // Predicated region
        $region13: #{vit_forward.5} parent=11 // pred_check
          %p350 = pneg %p78
        $region14: #{vit_forward.5} parent=11 // pred_check_branch
          %352 = sbr.rel (%p350) target = $region16
        $region15: #{vit_forward.5} parent=11 // pred_region
          %s354 = ssub.s32 16, 16
          %355 = vsyncadd [#allocation8], %s354
          %s357 = sshll.u32 [#allocation7], 4
          %s358 = int_to_ptr.vmem [resolvable:$true] %s357
          %360 = dma.hbm_to_vmem [thread:$0]  %s1, 16, %s358, [#allocation8]
        $region16: #{vit_forward.5} parent=11 // pred_fallthru
          _
        // Predicated region
        $region17: #{vit_forward.5} parent=11 // pred_check
          %p361 = pneg %p99
        $region18: #{vit_forward.5} parent=11 // pred_check_branch
          %363 = sbr.rel (%p361) target = $region20
        $region19: #{vit_forward.5} parent=11 // pred_region
          %s365 = ssub.s32 16, 16
          %366 = vsyncadd [#allocation8], %s365
          %s368 = sshll.u32 [#allocation9], 4
          %s369 = int_to_ptr.vmem [resolvable:$true] %s368
          %371 = dma.hbm_to_vmem [thread:$0]  %s2, 16, %s369, [#allocation8]
        $region20: #{vit_forward.5} parent=11 // pred_fallthru
          _
        // Predicated region
        $region21: #{vit_forward.5} parent=11 // pred_check
          %p372 = pneg %p120
        $region22: #{vit_forward.5} parent=11 // pred_check_branch
          %374 = sbr.rel (%p372) target = $region24
        $region23: #{vit_forward.5} parent=11 // pred_region
          %s376 = ssub.s32 1024, 1024
          %377 = vsyncadd [#allocation11], %s376
          %s378 = sshll.u32 [#allocation10], 4
          %s379 = int_to_ptr.vmem [resolvable:$true] %s378
          %384 = dma.hbm_to_vmem [thread:$0]  %s3, 1024, %s379, [#allocation11], 64, 64, 4
        $region24: #{vit_forward.5} parent=11 // pred_fallthru
          _
        // Predicated region
        $region25: #{vit_forward.5} parent=11 // pred_check
          %p385 = pneg %p141
        $region26: #{vit_forward.5} parent=11 // pred_check_branch
          %387 = sbr.rel (%p385) target = $region28
        $region27: #{vit_forward.5} parent=11 // pred_region
          %s389 = ssub.s32 16, 16
          %390 = vsyncadd [#allocation11], %s389
          %s392 = sshll.u32 [#allocation12], 4
          %s393 = int_to_ptr.vmem [resolvable:$true] %s392
          %395 = dma.hbm_to_vmem [thread:$0]  %s4, 16, %s393, [#allocation11]
        $region28: #{vit_forward.5} parent=11 // pred_fallthru
          _
        // Predicated region
        $region29: #{vit_forward.5} parent=11 // pred_check
          %p396 = pneg %p162
        $region30: #{vit_forward.5} parent=11 // pred_check_branch
          %398 = sbr.rel (%p396) target = $region32
        $region31: #{vit_forward.5} parent=11 // pred_region
          %s400 = ssub.s32 256, 256
          %401 = vsyncadd [#allocation14], %s400
          %s402 = sshll.u32 [#allocation13], 4
          %s403 = int_to_ptr.vmem [resolvable:$true] %s402
          %408 = dma.hbm_to_vmem [thread:$0]  %s5, 256, %s403, [#allocation14], 64, 64, 4
        $region32: #{vit_forward.5} parent=11 // pred_fallthru
          _
        // Predicated region
        $region33: #{vit_forward.5} parent=11 // pred_check
          %p409 = pneg %p183
        $region34: #{vit_forward.5} parent=11 // pred_check_branch
          %411 = sbr.rel (%p409) target = $region36
        $region35: #{vit_forward.5} parent=11 // pred_region
          %s413 = ssub.s32 16, 16
          %414 = vsyncadd [#allocation14], %s413
          %s416 = sshll.u32 [#allocation15], 4
          %s417 = int_to_ptr.vmem [resolvable:$true] %s416
          %419 = dma.hbm_to_vmem [thread:$0]  %s6, 16, %s417, [#allocation14]
        $region36: #{vit_forward.5} parent=11 // pred_fallthru
          _
        // Predicated region
        $region37: #{vit_forward.5} parent=11 // pred_check
          %p420 = pneg %p204
        $region38: #{vit_forward.5} parent=11 // pred_check_branch
          %422 = sbr.rel (%p420) target = $region40
        $region39: #{vit_forward.5} parent=11 // pred_region
          %s424 = ssub.s32 16, 16
          %425 = vsyncadd [#allocation17], %s424
          %s427 = sshll.u32 [#allocation16], 4
          %s428 = int_to_ptr.vmem [resolvable:$true] %s427
          %430 = dma.hbm_to_vmem [thread:$0]  %s7, 16, %s428, [#allocation17]
        $region40: #{vit_forward.5} parent=11 // pred_fallthru
          _
        // Predicated region
        $region41: #{vit_forward.5} parent=11 // pred_check
          %p431 = pneg %p225
        $region42: #{vit_forward.5} parent=11 // pred_check_branch
          %433 = sbr.rel (%p431) target = $region44
        $region43: #{vit_forward.5} parent=11 // pred_region
          %s435 = ssub.s32 16, 16
          %436 = vsyncadd [#allocation17], %s435
          %s438 = sshll.u32 [#allocation18], 4
          %s439 = int_to_ptr.vmem [resolvable:$true] %s438
          %441 = dma.hbm_to_vmem [thread:$0]  %s8, 16, %s439, [#allocation17]
        $region44: #{vit_forward.5} parent=11 // pred_fallthru
          _
        // Predicated region
        $region45: #{vit_forward.5} parent=11 // pred_check
          %p442 = pneg %p246
        $region46: #{vit_forward.5} parent=11 // pred_check_branch
          %444 = sbr.rel (%p442) target = $region48
        $region47: #{vit_forward.5} parent=11 // pred_region
          %s446 = ssub.s32 1024, 1024
          %447 = vsyncadd [#allocation20], %s446
          %s448 = sshll.u32 [#allocation19], 4
          %s449 = int_to_ptr.vmem [resolvable:$true] %s448
          %454 = dma.hbm_to_vmem [thread:$0]  %s9, 1024, %s449, [#allocation20], 64, 64, 4
        $region48: #{vit_forward.5} parent=11 // pred_fallthru
          _
        // Predicated region
        $region49: #{vit_forward.5} parent=11 // pred_check
          %p455 = pneg %p267
        $region50: #{vit_forward.5} parent=11 // pred_check_branch
          %457 = sbr.rel (%p455) target = $region52
        $region51: #{vit_forward.5} parent=11 // pred_region
          %s459 = ssub.s32 16, 16
          %460 = vsyncadd [#allocation20], %s459
          %s462 = sshll.u32 [#allocation21], 4
          %s463 = int_to_ptr.vmem [resolvable:$true] %s462
          %465 = dma.hbm_to_vmem [thread:$0]  %s10, 16, %s463, [#allocation20]
        $region52: #{vit_forward.5} parent=11 // pred_fallthru
          _
        // Predicated region
        $region53: #{vit_forward.5} parent=11 // pred_check
          %p466 = pneg %p288
        $region54: #{vit_forward.5} parent=11 // pred_check_branch
          %468 = sbr.rel (%p466) target = $region56
        $region55: #{vit_forward.5} parent=11 // pred_region
          %s470 = ssub.s32 1024, 1024
          %471 = vsyncadd [#allocation23], %s470
          %s472 = sshll.u32 [#allocation22], 4
          %s473 = int_to_ptr.vmem [resolvable:$true] %s472
          %478 = dma.hbm_to_vmem [thread:$0]  %s11, 1024, %s473, [#allocation23], 64, 64, 4
        $region56: #{vit_forward.5} parent=11 // pred_fallthru
          _
        // Predicated region
        $region57: #{vit_forward.5} parent=11 // pred_check
          %p479 = pneg %p309
        $region58: #{vit_forward.5} parent=11 // pred_check_branch
          %481 = sbr.rel (%p479) target = $region60
        $region59: #{vit_forward.5} parent=11 // pred_region
          %s483 = ssub.s32 16, 16
          %484 = vsyncadd [#allocation23], %s483
          %s486 = sshll.u32 [#allocation24], 4
          %s487 = int_to_ptr.vmem [resolvable:$true] %s486
          %489 = dma.hbm_to_vmem [thread:$0]  %s12, 16, %s487, [#allocation23]
        $region60: #{vit_forward.5} parent=11 // pred_fallthru
          _
      $region12: #{vit_forward.5} parent=5 // pred_fallthru
        _
      %p490 = scmp.lt.s32.totalorder %s31, 2
      // Predicated region
      $region61: #{vit_forward.5} parent=5 // pred_check
        %p491 = pneg %p490
      $region62: #{vit_forward.5} parent=5 // pred_check_branch
        %493 = sbr.rel (%p491) target = $region64
      $region63: #{vit_forward.5} parent=5 // pred_region
        // Predicated region
        $region65: #{vit_forward.5} parent=63 // pred_check
          %p494 = pneg %p51
        $region66: #{vit_forward.5} parent=63 // pred_check_branch
          %496 = sbr.rel (%p494) target = $region68
        $region67: #{vit_forward.5} parent=63 // pred_region
          %s497 = sand.u32 %s41, 1
          %s498 = scalar_lea.sflag [#allocation5], %s497
          %s499 = sand.u32 %s41, 1
          %s500 = smul.addr %s499, 24
          %s501 = scalar_lea.vmem [#allocation4], %s500
          %s503 = ssub.s32 384, 384
          %504 = vsyncadd %s498, %s503
          %s505 = smul.addr %s31, 3
          %s506 = smul.addr %s505, 128
          %s507 = scalar_lea.hbm %s0, %s506
          %s508 = sshll.u32 %s501, 4
          %s509 = int_to_ptr.vmem [resolvable:$true] %s508
          %514 = dma.hbm_to_vmem [thread:$0]  %s507, 384, %s509, %s498, 128, 128, 8
        $region68: #{vit_forward.5} parent=63 // pred_fallthru
          _
      $region64: #{vit_forward.5} parent=5 // pred_fallthru
        _
      %p515 = scmp.le.s32.totalorder 1, %s31
      %p516 = scmp.lt.s32.totalorder %s31, 3
      %p517 = pnand %p515, %p516
      %p518 = pneg %p517
      // Predicated region
      $region69: #{vit_forward.5} parent=5 // pred_check
        _
      $region70: #{vit_forward.5} parent=5 // pred_check_branch
        %520 = sbr.rel (%p517) target = $region72
      $region71: #{vit_forward.5} parent=5 // pred_region
        %s521 = ssub.s32 %s31, 1
        %s522 = sand.u32 %s44, 1
        %s523 = scalar_lea.sflag [#allocation5], %s522
        %s524 = sand.u32 %s44, 1
        %s525 = smul.addr %s524, 24
        %s526 = scalar_lea.vmem [#allocation4], %s525
        // Predicated region
        $region73: #{vit_forward.5} parent=71 // pred_check
          %p527 = pneg %p57
        $region74: #{vit_forward.5} parent=71 // pred_check_branch
          %529 = sbr.rel (%p527) target = $region76
        $region75: #{vit_forward.5} parent=71 // pred_region
          %530 = dma.done %s523, 384
        $region76: #{vit_forward.5} parent=71 // pred_fallthru
          _
        // Predicated region
        $region77: #{vit_forward.5} parent=71 // pred_check
          %p531 = pneg %p78
        $region78: #{vit_forward.5} parent=71 // pred_check_branch
          %533 = sbr.rel (%p531) target = $region80
        $region79: #{vit_forward.5} parent=71 // pred_region
          %534 = dma.done [#allocation8], 16
        $region80: #{vit_forward.5} parent=71 // pred_fallthru
          _
        // Predicated region
        $region81: #{vit_forward.5} parent=71 // pred_check
          %p535 = pneg %p99
        $region82: #{vit_forward.5} parent=71 // pred_check_branch
          %537 = sbr.rel (%p535) target = $region84
        $region83: #{vit_forward.5} parent=71 // pred_region
          %538 = dma.done [#allocation8], 16
        $region84: #{vit_forward.5} parent=71 // pred_fallthru
          _
        // Predicated region
        $region85: #{vit_forward.5} parent=71 // pred_check
          %p539 = pneg %p120
        $region86: #{vit_forward.5} parent=71 // pred_check_branch
          %541 = sbr.rel (%p539) target = $region88
        $region87: #{vit_forward.5} parent=71 // pred_region
          %542 = dma.done [#allocation11], 1024
        $region88: #{vit_forward.5} parent=71 // pred_fallthru
          _
        // Predicated region
        $region89: #{vit_forward.5} parent=71 // pred_check
          %p543 = pneg %p141
        $region90: #{vit_forward.5} parent=71 // pred_check_branch
          %545 = sbr.rel (%p543) target = $region92
        $region91: #{vit_forward.5} parent=71 // pred_region
          %546 = dma.done [#allocation11], 16
        $region92: #{vit_forward.5} parent=71 // pred_fallthru
          _
        // Predicated region
        $region93: #{vit_forward.5} parent=71 // pred_check
          %p547 = pneg %p162
        $region94: #{vit_forward.5} parent=71 // pred_check_branch
          %549 = sbr.rel (%p547) target = $region96
        $region95: #{vit_forward.5} parent=71 // pred_region
          %550 = dma.done [#allocation14], 256
        $region96: #{vit_forward.5} parent=71 // pred_fallthru
          _
        // Predicated region
        $region97: #{vit_forward.5} parent=71 // pred_check
          %p551 = pneg %p183
        $region98: #{vit_forward.5} parent=71 // pred_check_branch
          %553 = sbr.rel (%p551) target = $region100
        $region99: #{vit_forward.5} parent=71 // pred_region
          %554 = dma.done [#allocation14], 16
        $region100: #{vit_forward.5} parent=71 // pred_fallthru
          _
        // Predicated region
        $region101: #{vit_forward.5} parent=71 // pred_check
          %p555 = pneg %p204
        $region102: #{vit_forward.5} parent=71 // pred_check_branch
          %557 = sbr.rel (%p555) target = $region104
        $region103: #{vit_forward.5} parent=71 // pred_region
          %558 = dma.done [#allocation17], 16
        $region104: #{vit_forward.5} parent=71 // pred_fallthru
          _
        // Predicated region
        $region105: #{vit_forward.5} parent=71 // pred_check
          %p559 = pneg %p225
        $region106: #{vit_forward.5} parent=71 // pred_check_branch
          %561 = sbr.rel (%p559) target = $region108
        $region107: #{vit_forward.5} parent=71 // pred_region
          %562 = dma.done [#allocation17], 16
        $region108: #{vit_forward.5} parent=71 // pred_fallthru
          _
        // Predicated region
        $region109: #{vit_forward.5} parent=71 // pred_check
          %p563 = pneg %p246
        $region110: #{vit_forward.5} parent=71 // pred_check_branch
          %565 = sbr.rel (%p563) target = $region112
        $region111: #{vit_forward.5} parent=71 // pred_region
          %566 = dma.done [#allocation20], 1024
        $region112: #{vit_forward.5} parent=71 // pred_fallthru
          _
        // Predicated region
        $region113: #{vit_forward.5} parent=71 // pred_check
          %p567 = pneg %p267
        $region114: #{vit_forward.5} parent=71 // pred_check_branch
          %569 = sbr.rel (%p567) target = $region116
        $region115: #{vit_forward.5} parent=71 // pred_region
          %570 = dma.done [#allocation20], 16
        $region116: #{vit_forward.5} parent=71 // pred_fallthru
          _
        // Predicated region
        $region117: #{vit_forward.5} parent=71 // pred_check
          %p571 = pneg %p288
        $region118: #{vit_forward.5} parent=71 // pred_check_branch
          %573 = sbr.rel (%p571) target = $region120
        $region119: #{vit_forward.5} parent=71 // pred_region
          %574 = dma.done [#allocation23], 1024
        $region120: #{vit_forward.5} parent=71 // pred_fallthru
          _
        // Predicated region
        $region121: #{vit_forward.5} parent=71 // pred_check
          %p575 = pneg %p309
        $region122: #{vit_forward.5} parent=71 // pred_check_branch
          %577 = sbr.rel (%p575) target = $region124
        $region123: #{vit_forward.5} parent=71 // pred_region
          %578 = dma.done [#allocation23], 16
        $region124: #{vit_forward.5} parent=71 // pred_fallthru
          _
        %s579 = sand.u32 %s44, 1
        %s580 = scalar_lea.sflag [#allocation5], %s579
        %s581 = sand.u32 %s44, 1
        %s582 = smul.addr %s581, 24
        %s583 = scalar_lea.vmem [#allocation4], %s582
        %p584 = pneg %p57
        %p585 = pneg %p54
        %p586 = pneg %p78
        %p587 = pneg %p75
        %p588 = pneg %p99
        %p589 = pneg %p96
        %p590 = pneg %p120
        %p591 = pneg %p117
        %p592 = pneg %p141
        %p593 = pneg %p138
        %p594 = pneg %p162
        %p595 = pneg %p159
        %p596 = pneg %p183
        %p597 = pneg %p180
        %p598 = pneg %p204
        %p599 = pneg %p201
        %p600 = pneg %p225
        %p601 = pneg %p222
        %p602 = pneg %p246
        %p603 = pneg %p243
        %p604 = pneg %p267
        %p605 = pneg %p264
        %p606 = pneg %p288
        %p607 = pneg %p285
        %p608 = pneg %p309
        %p609 = pneg %p306
        %p610 = pneg %p335
        %p611 = pneg %p332
        %s612 = sand.u32 %s322, 1
        %s613 = scalar_lea.sflag [#allocation6], %s612
        %s614 = sand.u32 %s322, 1
        %s615 = smul.addr %s614, 24
        %s616 = scalar_lea.vmem [#allocation25], %s615
        %v618 = vld [vmem:[%s526] sm:$0xff]
        %v619 = vld [vmem:[%s526 + $0x8] sm:$0xff]
        %v620 = vld [vmem:[%s526 + $0x10] sm:$0xff]
        %v621 = vld [vmem:[#allocation7] sm:$0x1]
        %v622 = vld [vmem:[#allocation9] sm:$0x1]
        %v623 = vlaneseq
        %v624 = vand.u32 %v623, 127
        %vm625 = vcmp.lt.s32.totalorder %v624, 32
        %v626 = vsel %vm625, 1, 0
        %v627 = vcvt.s32.f32 %v626
        %628 = vadd.xlane.f32.xlu0 %v618
        %v629 = vpop.xlane.xlu0 %628
        %630 = vadd.xlane.f32.xlu0 %v619
        %v631 = vpop.xlane.xlu0 %630
        %632 = vadd.xlane.f32.xlu0 %v620
        %v633 = vpop.xlane.xlu0 %632
        %v634 = vmul.f32 %v629, 0.03125
        %v635 = vmul.f32 %v631, 0.03125
        %v636 = vmul.f32 %v633, 0.03125
        %v637 = vsub.f32 %v618, %v634
        %v638 = vsub.f32 %v619, %v635
        %v639 = vsub.f32 %v620, %v636
        %v640 = vmul.f32 %v637, %v627
        %v641 = vmul.f32 %v638, %v627
        %v642 = vmul.f32 %v639, %v627
        %v643 = vmul.f32 %v640, %v640
        %v644 = vmul.f32 %v641, %v641
        %v645 = vmul.f32 %v642, %v642
        %646 = vadd.xlane.f32.xlu0 %v643
        %v647 = vpop.xlane.xlu0 %646
        %648 = vadd.xlane.f32.xlu0 %v644
        %v649 = vpop.xlane.xlu0 %648
        %650 = vadd.xlane.f32.xlu0 %v645
        %v651 = vpop.xlane.xlu0 %650
        %v652 = vmul.f32 %v647, 0.03125
        %v653 = vmul.f32 %v649, 0.03125
        %v654 = vmul.f32 %v651, 0.03125
        %v655 = vadd.f32 %v652, 1e-05
        %v656 = vadd.f32 %v653, 1e-05
        %v657 = vadd.f32 %v654, 1e-05
        %v658 = vrsqrt.pop %v655
        %v659 = vrsqrt.pop %v656
        %v660 = vrsqrt.pop %v657
        %v661 = vmul.f32 %v640, %v658
        %v662 = vmul.f32 %v641, %v659
        %v663 = vmul.f32 %v642, %v660
        %v665 = vlaneseq
        %v666 = vshrl.u32 %v665, 7
        %v667 = vsub.s32 0, %v666
        %v668 = vrot.slane %v621, %v667
        %v670 = vmul.f32 %v661, %v668
        %v671 = vmul.f32 %v662, %v668
        %v672 = vmul.f32 %v663, %v668
        %v674 = vlaneseq
        %v675 = vshrl.u32 %v674, 7
        %v676 = vsub.s32 0, %v675
        %v677 = vrot.slane %v622, %v676
        %v679 = vadd.f32 %v670, %v677
        %v680 = vadd.f32 %v671, %v677
        %v681 = vadd.f32 %v672, %v677
        %v682 = vpack.c.bf16 %v680, %v679
        %v683 = vpack.c.bf16 %v681, %v681
        %v684 = vld [vmem:[#allocation10] sm:$0xf]
        %v685 = vld [vmem:[#allocation10 + $0x4] sm:$0xf]
        %v686 = vld [vmem:[#allocation10 + $0x8] sm:$0xf]
        %v687 = vld [vmem:[#allocation10 + $0xc] sm:$0xf]
        %v688 = vld [vmem:[#allocation10 + $0x10] sm:$0xf]
        %v689 = vld [vmem:[#allocation10 + $0x14] sm:$0xf]
        %v690 = vld [vmem:[#allocation10 + $0x18] sm:$0xf]
        %v691 = vld [vmem:[#allocation10 + $0x1c] sm:$0xf]
        %v692 = vld [vmem:[#allocation10 + $0x20] sm:$0xf]
        %v693 = vld [vmem:[#allocation10 + $0x24] sm:$0xf]
        %v694 = vld [vmem:[#allocation10 + $0x28] sm:$0xf]
        %v695 = vld [vmem:[#allocation10 + $0x2c] sm:$0xf]
        %v696 = vld [vmem:[#allocation10 + $0x30] sm:$0xf]
        %v697 = vld [vmem:[#allocation10 + $0x34] sm:$0xf]
        %v698 = vld [vmem:[#allocation10 + $0x38] sm:$0xf]
        %v699 = vld [vmem:[#allocation10 + $0x3c] sm:$0xf]
        %v700 = vld [vmem:[#allocation12] sm:$0x1]
        %v702 = vlaneseq
        %v703 = vshrl.u32 %v702, 7
        %v704 = vsub.s32 0, %v703
        %v705 = vrot.slane %v700, %v704
        %v723 = vunpack.c.l.b16 %v684
        %v724 = vunpack.c.l.b16 %v685
        %v725 = vunpack.c.l.b16 %v686
        %v726 = vunpack.c.l.b16 %v687
        %v727 = vunpack.c.l.b16 %v688
        %v728 = vunpack.c.l.b16 %v689
        %v729 = vunpack.c.l.b16 %v690
        %v730 = vunpack.c.l.b16 %v691
        %v731 = vunpack.c.l.b16 %v692
        %v732 = vunpack.c.l.b16 %v693
        %v733 = vunpack.c.l.b16 %v694
        %v734 = vunpack.c.l.b16 %v695
        %v735 = vunpack.c.l.b16 %v696
        %v736 = vunpack.c.l.b16 %v697
        %v737 = vunpack.c.l.b16 %v698
        %v738 = vunpack.c.l.b16 %v699
        %v739 = vpack.c.b16 %v724, %v723
        %v740 = vpack.c.b16 %v726, %v725
        %v741 = vpack.c.b16 %v728, %v727
        %v742 = vpack.c.b16 %v730, %v729
        %v743 = vpack.c.b16 %v732, %v731
        %v744 = vpack.c.b16 %v734, %v733
        %v745 = vpack.c.b16 %v736, %v735
        %v746 = vpack.c.b16 %v738, %v737
        %755 = vmatprep.subr.bf16.mxu0 0
        %756 = vmatpush1.bf16.msra.mxu0 %v739
        %757 = vmatprep.subr.bf16.mxu0 0
        %758 = vmatpush1.bf16.msra.mxu0 %v740
        %759 = vmatprep.subr.bf16.mxu0 0
        %760 = vmatpush1.bf16.msra.mxu0 %v741
        %761 = vmatprep.subr.bf16.mxu0 0
        %762 = vmatpush1.bf16.msra.mxu0 %v742
        %763 = vmatprep.subr.bf16.mxu0 0
        %764 = vmatpush1.bf16.msra.mxu0 %v743
        %765 = vmatprep.subr.bf16.mxu0 0
        %766 = vmatpush1.bf16.msra.mxu0 %v744
        %767 = vmatprep.subr.bf16.mxu0 0
        %768 = vmatpush1.bf16.msra.mxu0 %v745
        %769 = vmatprep.subr.bf16.mxu0 0
        %770 = vmatpush1.bf16.msra.mxu0 %v746
        %771 = vmatprep.subr.bf16.mxu0 0
        %772 = vmatpush1.bf16.msra.mxu0 0
        %773 = vmatprep.subr.bf16.mxu0 0
        %774 = vmatpush1.bf16.msra.mxu0 0
        %775 = vmatprep.subr.bf16.mxu0 0
        %776 = vmatpush1.bf16.msra.mxu0 0
        %777 = vmatprep.subr.bf16.mxu0 0
        %778 = vmatpush1.bf16.msra.mxu0 0
        %779 = vmatprep.subr.bf16.mxu0 0
        %780 = vmatpush1.bf16.msra.mxu0 0
        %781 = vmatprep.subr.bf16.mxu0 0
        %782 = vmatpush1.bf16.msra.mxu0 0
        %783 = vmatprep.subr.bf16.mxu0 0
        %784 = vmatpush1.bf16.msra.mxu0 0
        %785 = vmatprep.subr.bf16.mxu0 0
        %786 = vmatpush1.bf16.msra.mxu0 0
        %787 = vmatprep.mubr.bf16.mxu0 0
        %788 = vmatmul.mubr.bf16.gmra.mrb[0].mxu0 %v682
        %v789 = vpop.f32.mrb[0].mxu0
        %v790 = vadd.f32 %v705, %v789
        %v791 = vpop.f32.mrb[0].mxu0
        %v792 = vpop.f32.mrb[0].mxu0
        %v793 = vadd.f32 %v705, %v792
        %v794 = vpop.f32.mrb[0].mxu0
        %795 = vmatprep.mubr.bf16.mxu0 0
        %796 = vmatmul.mubr.bf16.gmra.mrb[0].mxu0 %v683
        %v797 = vpop.f32.mrb[0].mxu0
        %v798 = vadd.f32 %v705, %v797
        %v799 = vpop.f32.mrb[0].mxu0
        %v800 = vpop.f32.mrb[0].mxu0
        %v801 = vpop.f32.mrb[0].mxu0
        %802 = vdwg.mxu0
        %vm803 = vcmask 785408
        %804 = vst.msk [vmem:[#allocation2] sm:$0xff] %vm803, %v790
        %805 = vst.msk [vmem:[#allocation2 + $0x8] sm:$0xff] %vm803, %v793
        %806 = vst.msk [vmem:[#allocation2 + $0x10] sm:$0xff] %vm803, %v798
        %vm807 = vcmp.lt.s32.totalorder %v624, 17
        %v808 = vld [vmem:[#allocation2] sm:$0xff]
        %v809 = vld [vmem:[#allocation2 + $0x8] sm:$0xff]
        %v810 = vld [vmem:[#allocation2 + $0x10] sm:$0xff]
        %v811 = vpack.c.bf16 %v809, %v808
        %v812 = vpack.c.bf16 %v810, %v810
        %815 = vrot.lane.b32.xlu0 %v811, 96
        %v816 = vpop.permute.xlu0 %815
        %817 = vrot.lane.b32.xlu0 %v812, 96
        %v818 = vpop.permute.xlu0 %817
        %vm819 = vcmask 64512
        %v821 = vsel %vm819, %v811, 0
        %v824 = vsel %vm819, %v812, 0
        %v827 = vsel %vm819, %v816, 0
        %v830 = vsel %vm819, %v818, 0
        %832 = vmatprep.subr.bf16.mxu0 0
        %833 = vmatpush1.bf16.xpose.msra.mxu0 %v827
        %834 = vmatprep.subr.bf16.mxu0 0
        %835 = vmatpush1.bf16.xpose.msra.mxu0 %v830
        %836 = vmatprep.subr.bf16.mxu0 0
        %837 = vmatpush1.bf16.xpose.msra.mxu0 0
        %838 = vmatprep.subr.bf16.mxu0 0
        %839 = vmatpush1.bf16.xpose.msra.mxu0 0
        %840 = vmatprep.subr.bf16.mxu0 0
        %841 = vmatpush1.bf16.xpose.msra.mxu0 0
        %842 = vmatprep.subr.bf16.mxu0 0
        %843 = vmatpush1.bf16.xpose.msra.mxu0 0
        %844 = vmatprep.subr.bf16.mxu0 0
        %845 = vmatpush1.bf16.xpose.msra.mxu0 0
        %846 = vmatprep.subr.bf16.mxu0 0
        %847 = vmatpush1.bf16.xpose.msra.mxu0 0
        %848 = vmatprep.subr.bf16.mxu0 0
        %849 = vmatpush1.bf16.xpose.msra.mxu0 0
        %850 = vmatprep.subr.bf16.mxu0 0
        %851 = vmatpush1.bf16.xpose.msra.mxu0 0
        %852 = vmatprep.subr.bf16.mxu0 0
        %853 = vmatpush1.bf16.xpose.msra.mxu0 0
        %854 = vmatprep.subr.bf16.mxu0 0
        %855 = vmatpush1.bf16.xpose.msra.mxu0 0
        %856 = vmatprep.subr.bf16.mxu0 0
        %857 = vmatpush1.bf16.xpose.msra.mxu0 0
        %858 = vmatprep.subr.bf16.mxu0 0
        %859 = vmatpush1.bf16.xpose.msra.mxu0 0
        %860 = vmatprep.subr.bf16.mxu0 0
        %861 = vmatpush1.bf16.xpose.msra.mxu0 0
        %862 = vmatprep.subr.bf16.mxu0 0
        %863 = vmatpush1.bf16.xpose.msra.mxu0 0
        %864 = vmatprep.mubr.bf16.mxu0 0
        %865 = vmatmul.mubr.bf16.gmra.mrb[0].mxu0 %v821
        %v866 = vpop.f32.mrb[0].mxu0
        %v867 = vadd.f32 0.0, %v866
        %v868 = vpop.f32.mrb[0].mxu0
        %v869 = vpop.f32.mrb[0].mxu0
        %v870 = vadd.f32 0.0, %v869
        %v871 = vpop.f32.mrb[0].mxu0
        %872 = vmatprep.mubr.bf16.mxu0 0
        %873 = vmatmul.mubr.bf16.gmra.mrb[0].mxu0 %v824
        %v874 = vpop.f32.mrb[0].mxu0
        %v875 = vadd.f32 0.0, %v874
        %v876 = vpop.f32.mrb[0].mxu0
        %v877 = vpop.f32.mrb[0].mxu0
        %v878 = vpop.f32.mrb[0].mxu0
        %879 = vdwg.mxu0
        %v880 = vmul.f32 %v867, 0.35355338
        %v881 = vmul.f32 %v870, 0.35355338
        %v882 = vmul.f32 %v875, 0.35355338
        %v883 = vsel %vm807, 1, 0
        %vm884 = vcmp.eq.s32.totalorder %v883, 1
        %v885 = vsel %vm884, %v880, -1e+30
        %v886 = vsel %vm884, %v881, -1e+30
        %v887 = vsel %vm884, %v882, -1e+30
        %vm888 = vcmask 195584
        %v889 = vsel %vm888, %v885, -inf
        %890 = vmax.xlane.f32.xlu0 %v889
        %v891 = vpop.xlane.xlu0 %890
        %v892 = vsel %vm888, %v886, -inf
        %893 = vmax.xlane.f32.xlu0 %v892
        %v894 = vpop.xlane.xlu0 %893
        %v895 = vsel %vm888, %v887, -inf
        %896 = vmax.xlane.f32.xlu0 %v895
        %v897 = vpop.xlane.xlu0 %896
        %v898 = vsub.f32 %v885, %v891
        %v899 = vsub.f32 %v886, %v894
        %v900 = vsub.f32 %v887, %v897
        %v901 = vmul.f32 %v898, 1.442695
        %v902 = vpow.pop %v901
        %v903 = vmul.f32 %v899, 1.442695
        %v904 = vpow.pop %v903
        %v905 = vmul.f32 %v900, 1.442695
        %v906 = vpow.pop %v905
        %v907 = vsel %vm888, %v902, 0.0
        %908 = vadd.xlane.f32.xlu0 %v907
        %v909 = vpop.xlane.xlu0 %908
        %v910 = vsel %vm888, %v904, 0.0
        %911 = vadd.xlane.f32.xlu0 %v910
        %v912 = vpop.xlane.xlu0 %911
        %v913 = vsel %vm888, %v906, 0.0
        %914 = vadd.xlane.f32.xlu0 %v913
        %v915 = vpop.xlane.xlu0 %914
        %v916 = vrcp.pop %v909
        %v917 = vrcp.pop %v912
        %v918 = vrcp.pop %v915
        %v919 = vmul.f32 %v902, %v916
        %v920 = vmul.f32 %v904, %v917
        %v921 = vmul.f32 %v906, %v918
        %v922 = vpack.c.bf16 %v920, %v919
        %v923 = vpack.c.bf16 %v921, %v921
        %924 = vrot.lane.b32.xlu0 %v811, 64
        %v925 = vpop.permute.xlu0 %924
        %926 = vrot.lane.b32.xlu0 %v812, 64
        %v927 = vpop.permute.xlu0 %926
        %v930 = vsel %vm888, %v922, 0
        %v933 = vsel %vm888, %v923, 0
        %vm935 = vcmask 1043456
        %v937 = vsel %vm935, %v927, 0
        %939 = vmatprep.subr.bf16.mxu0 0
        %940 = vmatpush1.bf16.msra.mxu0 %v925
        %941 = vmatprep.subr.bf16.mxu0 0
        %942 = vmatpush1.bf16.msra.mxu0 %v937
        %943 = vmatprep.subr.bf16.mxu0 0
        %944 = vmatpush1.bf16.msra.mxu0 0
        %945 = vmatprep.subr.bf16.mxu0 0
        %946 = vmatpush1.bf16.msra.mxu0 0
        %947 = vmatprep.subr.bf16.mxu0 0
        %948 = vmatpush1.bf16.msra.mxu0 0
        %949 = vmatprep.subr.bf16.mxu0 0
        %950 = vmatpush1.bf16.msra.mxu0 0
        %951 = vmatprep.subr.bf16.mxu0 0
        %952 = vmatpush1.bf16.msra.mxu0 0
        %953 = vmatprep.subr.bf16.mxu0 0
        %954 = vmatpush1.bf16.msra.mxu0 0
        %955 = vmatprep.subr.bf16.mxu0 0
        %956 = vmatpush1.bf16.msra.mxu0 0
        %957 = vmatprep.subr.bf16.mxu0 0
        %958 = vmatpush1.bf16.msra.mxu0 0
        %959 = vmatprep.subr.bf16.mxu0 0
        %960 = vmatpush1.bf16.msra.mxu0 0
        %961 = vmatprep.subr.bf16.mxu0 0
        %962 = vmatpush1.bf16.msra.mxu0 0
        %963 = vmatprep.subr.bf16.mxu0 0
        %964 = vmatpush1.bf16.msra.mxu0 0
        %965 = vmatprep.subr.bf16.mxu0 0
        %966 = vmatpush1.bf16.msra.mxu0 0
        %967 = vmatprep.subr.bf16.mxu0 0
        %968 = vmatpush1.bf16.msra.mxu0 0
        %969 = vmatprep.subr.bf16.mxu0 0
        %970 = vmatpush1.bf16.msra.mxu0 0
        %971 = vmatprep.mubr.bf16.mxu0 0
        %972 = vmatmul.mubr.bf16.gmra.mrb[0].mxu0 %v930
        %v973 = vpop.f32.mrb[0].mxu0
        %v974 = vadd.f32 0.0, %v973
        %v975 = vpop.f32.mrb[0].mxu0
        %v976 = vpop.f32.mrb[0].mxu0
        %v977 = vadd.f32 0.0, %v976
        %v978 = vpop.f32.mrb[0].mxu0
        %979 = vmatprep.mubr.bf16.mxu0 0
        %980 = vmatmul.mubr.bf16.gmra.mrb[0].mxu0 %v933
        %v981 = vpop.f32.mrb[0].mxu0
        %v982 = vadd.f32 0.0, %v981
        %v983 = vpop.f32.mrb[0].mxu0
        %v984 = vpop.f32.mrb[0].mxu0
        %v985 = vpop.f32.mrb[0].mxu0
        %986 = vdwg.mxu0
        %987 = vst.msk [vmem:[#allocation3] sm:$0xff] %vm819, %v974
        %988 = vst.msk [vmem:[#allocation3 + $0x8] sm:$0xff] %vm819, %v977
        %989 = vst.msk [vmem:[#allocation3 + $0x10] sm:$0xff] %vm819, %v982
        %v990 = vld [vmem:[#allocation2] sm:$0xff]
        %v991 = vld [vmem:[#allocation2 + $0x8] sm:$0xff]
        %v992 = vld [vmem:[#allocation2 + $0x10] sm:$0xff]
        %v993 = vpack.c.bf16 %v991, %v990
        %v994 = vpack.c.bf16 %v992, %v992
        %997 = vrot.lane.b32.xlu0 %v993, 120
        %v998 = vpop.permute.xlu0 %997
        %999 = vrot.lane.b32.xlu0 %v994, 120
        %v1000 = vpop.permute.xlu0 %999
        %1001 = vrot.lane.b32.xlu0 %v993, 88
        %v1002 = vpop.permute.xlu0 %1001
        %1003 = vrot.lane.b32.xlu0 %v994, 88
        %v1004 = vpop.permute.xlu0 %1003
        %v1006 = vsel %vm819, %v998, 0
        %v1009 = vsel %vm819, %v1000, 0
        %v1012 = vsel %vm819, %v1002, 0
        %v1015 = vsel %vm819, %v1004, 0
        %1017 = vmatprep.subr.bf16.mxu0 0
        %1018 = vmatpush1.bf16.xpose.msra.mxu0 %v1012
        %1019 = vmatprep.subr.bf16.mxu0 0
        %1020 = vmatpush1.bf16.xpose.msra.mxu0 %v1015
        %1021 = vmatprep.subr.bf16.mxu0 0
        %1022 = vmatpush1.bf16.xpose.msra.mxu0 0
        %1023 = vmatprep.subr.bf16.mxu0 0
        %1024 = vmatpush1.bf16.xpose.msra.mxu0 0
        %1025 = vmatprep.subr.bf16.mxu0 0
        %1026 = vmatpush1.bf16.xpose.msra.mxu0 0
        %1027 = vmatprep.subr.bf16.mxu0 0
        %1028 = vmatpush1.bf16.xpose.msra.mxu0 0
        %1029 = vmatprep.subr.bf16.mxu0 0
        %1030 = vmatpush1.bf16.xpose.msra.mxu0 0
        %1031 = vmatprep.subr.bf16.mxu0 0
        %1032 = vmatpush1.bf16.xpose.msra.mxu0 0
        %1033 = vmatprep.subr.bf16.mxu0 0
        %1034 = vmatpush1.bf16.xpose.msra.mxu0 0
        %1035 = vmatprep.subr.bf16.mxu0 0
        %1036 = vmatpush1.bf16.xpose.msra.mxu0 0
        %1037 = vmatprep.subr.bf16.mxu0 0
        %1038 = vmatpush1.bf16.xpose.msra.mxu0 0
        %1039 = vmatprep.subr.bf16.mxu0 0
        %1040 = vmatpush1.bf16.xpose.msra.mxu0 0
        %1041 = vmatprep.subr.bf16.mxu0 0
        %1042 = vmatpush1.bf16.xpose.msra.mxu0 0
        %1043 = vmatprep.subr.bf16.mxu0 0
        %1044 = vmatpush1.bf16.xpose.msra.mxu0 0
        %1045 = vmatprep.subr.bf16.mxu0 0
        %1046 = vmatpush1.bf16.xpose.msra.mxu0 0
        %1047 = vmatprep.subr.bf16.mxu0 0
        %1048 = vmatpush1.bf16.xpose.msra.mxu0 0
        %1049 = vmatprep.mubr.bf16.mxu0 0
        %1050 = vmatmul.mubr.bf16.gmra.mrb[0].mxu0 %v1006
        %v1051 = vpop.f32.mrb[0].mxu0
        %v1052 = vadd.f32 0.0, %v1051
        %v1053 = vpop.f32.mrb[0].mxu0
        %v1054 = vpop.f32.mrb[0].mxu0
        %v1055 = vadd.f32 0.0, %v1054
        %v1056 = vpop.f32.mrb[0].mxu0
        %1057 = vmatprep.mubr.bf16.mxu0 0
        %1058 = vmatmul.mubr.bf16.gmra.mrb[0].mxu0 %v1009
        %v1059 = vpop.f32.mrb[0].mxu0
        %v1060 = vadd.f32 0.0, %v1059
        %v1061 = vpop.f32.mrb[0].mxu0
        %v1062 = vpop.f32.mrb[0].mxu0
        %v1063 = vpop.f32.mrb[0].mxu0
        %1064 = vdwg.mxu0
        %v1065 = vmul.f32 %v1052, 0.35355338
        %v1066 = vmul.f32 %v1055, 0.35355338
        %v1067 = vmul.f32 %v1060, 0.35355338
        %v1068 = vsel %vm884, %v1065, -1e+30
        %v1069 = vsel %vm884, %v1066, -1e+30
        %v1070 = vsel %vm884, %v1067, -1e+30
        %v1071 = vsel %vm888, %v1068, -inf
        %1072 = vmax.xlane.f32.xlu0 %v1071
        %v1073 = vpop.xlane.xlu0 %1072
        %v1074 = vsel %vm888, %v1069, -inf
        %1075 = vmax.xlane.f32.xlu0 %v1074
        %v1076 = vpop.xlane.xlu0 %1075
        %v1077 = vsel %vm888, %v1070, -inf
        %1078 = vmax.xlane.f32.xlu0 %v1077
        %v1079 = vpop.xlane.xlu0 %1078
        %v1080 = vsub.f32 %v1068, %v1073
        %v1081 = vsub.f32 %v1069, %v1076
        %v1082 = vsub.f32 %v1070, %v1079
        %v1083 = vmul.f32 %v1080, 1.442695
        %v1084 = vpow.pop %v1083
        %v1085 = vmul.f32 %v1081, 1.442695
        %v1086 = vpow.pop %v1085
        %v1087 = vmul.f32 %v1082, 1.442695
        %v1088 = vpow.pop %v1087
        %v1089 = vsel %vm888, %v1084, 0.0
        %1090 = vadd.xlane.f32.xlu0 %v1089
        %v1091 = vpop.xlane.xlu0 %1090
        %v1092 = vsel %vm888, %v1086, 0.0
        %1093 = vadd.xlane.f32.xlu0 %v1092
        %v1094 = vpop.xlane.xlu0 %1093
        %v1095 = vsel %vm888, %v1088, 0.0
        %1096 = vadd.xlane.f32.xlu0 %v1095
        %v1097 = vpop.xlane.xlu0 %1096
        %v1098 = vrcp.pop %v1091
        %v1099 = vrcp.pop %v1094
        %v1100 = vrcp.pop %v1097
        %v1101 = vmul.f32 %v1084, %v1098
        %v1102 = vmul.f32 %v1086, %v1099
        %v1103 = vmul.f32 %v1088, %v1100
        %v1104 = vpack.c.bf16 %v1102, %v1101
        %v1105 = vpack.c.bf16 %v1103, %v1103
        %1106 = vrot.lane.b32.xlu0 %v993, 56
        %v1107 = vpop.permute.xlu0 %1106
        %1108 = vrot.lane.b32.xlu0 %v994, 56
        %v1109 = vpop.permute.xlu0 %1108
        %v1112 = vsel %vm888, %v1104, 0
        %v1115 = vsel %vm888, %v1105, 0
        %v1118 = vsel %vm935, %v1109, 0
        %1120 = vmatprep.subr.bf16.mxu0 0
        %1121 = vmatpush1.bf16.msra.mxu0 %v1107
        %1122 = vmatprep.subr.bf16.mxu0 0
        %1123 = vmatpush1.bf16.msra.mxu0 %v1118
        %1124 = vmatprep.subr.bf16.mxu0 0
        %1125 = vmatpush1.bf16.msra.mxu0 0
        %1126 = vmatprep.subr.bf16.mxu0 0
        %1127 = vmatpush1.bf16.msra.mxu0 0
        %1128 = vmatprep.subr.bf16.mxu0 0
        %1129 = vmatpush1.bf16.msra.mxu0 0
        %1130 = vmatprep.subr.bf16.mxu0 0
        %1131 = vmatpush1.bf16.msra.mxu0 0
        %1132 = vmatprep.subr.bf16.mxu0 0
        %1133 = vmatpush1.bf16.msra.mxu0 0
        %1134 = vmatprep.subr.bf16.mxu0 0
        %1135 = vmatpush1.bf16.msra.mxu0 0
        %1136 = vmatprep.subr.bf16.mxu0 0
        %1137 = vmatpush1.bf16.msra.mxu0 0
        %1138 = vmatprep.subr.bf16.mxu0 0
        %1139 = vmatpush1.bf16.msra.mxu0 0
        %1140 = vmatprep.subr.bf16.mxu0 0
        %1141 = vmatpush1.bf16.msra.mxu0 0
        %1142 = vmatprep.subr.bf16.mxu0 0
        %1143 = vmatpush1.bf16.msra.mxu0 0
        %1144 = vmatprep.subr.bf16.mxu0 0
        %1145 = vmatpush1.bf16.msra.mxu0 0
        %1146 = vmatprep.subr.bf16.mxu0 0
        %1147 = vmatpush1.bf16.msra.mxu0 0
        %1148 = vmatprep.subr.bf16.mxu0 0
        %1149 = vmatpush1.bf16.msra.mxu0 0
        %1150 = vmatprep.subr.bf16.mxu0 0
        %1151 = vmatpush1.bf16.msra.mxu0 0
        %1152 = vmatprep.mubr.bf16.mxu0 0
        %1153 = vmatmul.mubr.bf16.gmra.mrb[0].mxu0 %v1112
        %v1154 = vpop.f32.mrb[0].mxu0
        %v1155 = vadd.f32 0.0, %v1154
        %v1156 = vpop.f32.mrb[0].mxu0
        %v1157 = vpop.f32.mrb[0].mxu0
        %v1158 = vadd.f32 0.0, %v1157
        %v1159 = vpop.f32.mrb[0].mxu0
        %1160 = vmatprep.mubr.bf16.mxu0 0
        %1161 = vmatmul.mubr.bf16.gmra.mrb[0].mxu0 %v1115
        %v1162 = vpop.f32.mrb[0].mxu0
        %v1163 = vadd.f32 0.0, %v1162
        %v1164 = vpop.f32.mrb[0].mxu0
        %v1165 = vpop.f32.mrb[0].mxu0
        %v1166 = vpop.f32.mrb[0].mxu0
        %1167 = vdwg.mxu0
        %1171 = vrot.lane.b32.xlu0 %v1155, 8
        %v1172 = vpop.permute.xlu0 %1171
        %1173 = vrot.lane.b32.xlu0 %v1158, 8
        %v1174 = vpop.permute.xlu0 %1173
        %1175 = vrot.lane.b32.xlu0 %v1163, 8
        %v1176 = vpop.permute.xlu0 %1175
        %vm1180 = vcmask 130112
        %1181 = vst.msk [vmem:[#allocation3] sm:$0xff] %vm1180, %v1172
        %1182 = vst.msk [vmem:[#allocation3 + $0x8] sm:$0xff] %vm1180, %v1174
        %1183 = vst.msk [vmem:[#allocation3 + $0x10] sm:$0xff] %vm1180, %v1176
        %v1184 = vld [vmem:[#allocation2] sm:$0xff]
        %v1185 = vld [vmem:[#allocation2 + $0x8] sm:$0xff]
        %v1186 = vld [vmem:[#allocation2 + $0x10] sm:$0xff]
        %v1187 = vpack.c.bf16 %v1185, %v1184
        %v1188 = vpack.c.bf16 %v1186, %v1186
        %1191 = vrot.lane.b32.xlu0 %v1187, 112
        %v1192 = vpop.permute.xlu0 %1191
        %1193 = vrot.lane.b32.xlu0 %v1188, 112
        %v1194 = vpop.permute.xlu0 %1193
        %1195 = vrot.lane.b32.xlu0 %v1187, 80
        %v1196 = vpop.permute.xlu0 %1195
        %1197 = vrot.lane.b32.xlu0 %v1188, 80
        %v1198 = vpop.permute.xlu0 %1197
        %v1200 = vsel %vm819, %v1192, 0
        %v1203 = vsel %vm819, %v1194, 0
        %v1206 = vsel %vm819, %v1196, 0
        %v1209 = vsel %vm819, %v1198, 0
        %1211 = vmatprep.subr.bf16.mxu0 0
        %1212 = vmatpush1.bf16.xpose.msra.mxu0 %v1206
        %1213 = vmatprep.subr.bf16.mxu0 0
        %1214 = vmatpush1.bf16.xpose.msra.mxu0 %v1209
        %1215 = vmatprep.subr.bf16.mxu0 0
        %1216 = vmatpush1.bf16.xpose.msra.mxu0 0
        %1217 = vmatprep.subr.bf16.mxu0 0
        %1218 = vmatpush1.bf16.xpose.msra.mxu0 0
        %1219 = vmatprep.subr.bf16.mxu0 0
        %1220 = vmatpush1.bf16.xpose.msra.mxu0 0
        %1221 = vmatprep.subr.bf16.mxu0 0
        %1222 = vmatpush1.bf16.xpose.msra.mxu0 0
        %1223 = vmatprep.subr.bf16.mxu0 0
        %1224 = vmatpush1.bf16.xpose.msra.mxu0 0
        %1225 = vmatprep.subr.bf16.mxu0 0
        %1226 = vmatpush1.bf16.xpose.msra.mxu0 0
        %1227 = vmatprep.subr.bf16.mxu0 0
        %1228 = vmatpush1.bf16.xpose.msra.mxu0 0
        %1229 = vmatprep.subr.bf16.mxu0 0
        %1230 = vmatpush1.bf16.xpose.msra.mxu0 0
        %1231 = vmatprep.subr.bf16.mxu0 0
        %1232 = vmatpush1.bf16.xpose.msra.mxu0 0
        %1233 = vmatprep.subr.bf16.mxu0 0
        %1234 = vmatpush1.bf16.xpose.msra.mxu0 0
        %1235 = vmatprep.subr.bf16.mxu0 0
        %1236 = vmatpush1.bf16.xpose.msra.mxu0 0
        %1237 = vmatprep.subr.bf16.mxu0 0
        %1238 = vmatpush1.bf16.xpose.msra.mxu0 0
        %1239 = vmatprep.subr.bf16.mxu0 0
        %1240 = vmatpush1.bf16.xpose.msra.mxu0 0
        %1241 = vmatprep.subr.bf16.mxu0 0
        %1242 = vmatpush1.bf16.xpose.msra.mxu0 0
        %1243 = vmatprep.mubr.bf16.mxu0 0
        %1244 = vmatmul.mubr.bf16.gmra.mrb[0].mxu0 %v1200
        %v1245 = vpop.f32.mrb[0].mxu0
        %v1246 = vadd.f32 0.0, %v1245
        %v1247 = vpop.f32.mrb[0].mxu0
        %v1248 = vpop.f32.mrb[0].mxu0
        %v1249 = vadd.f32 0.0, %v1248
        %v1250 = vpop.f32.mrb[0].mxu0
        %1251 = vmatprep.mubr.bf16.mxu0 0
        %1252 = vmatmul.mubr.bf16.gmra.mrb[0].mxu0 %v1203
        %v1253 = vpop.f32.mrb[0].mxu0
        %v1254 = vadd.f32 0.0, %v1253
        %v1255 = vpop.f32.mrb[0].mxu0
        %v1256 = vpop.f32.mrb[0].mxu0
        %v1257 = vpop.f32.mrb[0].mxu0
        %1258 = vdwg.mxu0
        %v1259 = vmul.f32 %v1246, 0.35355338
        %v1260 = vmul.f32 %v1249, 0.35355338
        %v1261 = vmul.f32 %v1254, 0.35355338
        %v1262 = vsel %vm884, %v1259, -1e+30
        %v1263 = vsel %vm884, %v1260, -1e+30
        %v1264 = vsel %vm884, %v1261, -1e+30
        %v1265 = vsel %vm888, %v1262, -inf
        %1266 = vmax.xlane.f32.xlu0 %v1265
        %v1267 = vpop.xlane.xlu0 %1266
        %v1268 = vsel %vm888, %v1263, -inf
        %1269 = vmax.xlane.f32.xlu0 %v1268
        %v1270 = vpop.xlane.xlu0 %1269
        %v1271 = vsel %vm888, %v1264, -inf
        %1272 = vmax.xlane.f32.xlu0 %v1271
        %v1273 = vpop.xlane.xlu0 %1272
        %v1274 = vsub.f32 %v1262, %v1267
        %v1275 = vsub.f32 %v1263, %v1270
        %v1276 = vsub.f32 %v1264, %v1273
        %v1277 = vmul.f32 %v1274, 1.442695
        %v1278 = vpow.pop %v1277
        %v1279 = vmul.f32 %v1275, 1.442695
        %v1280 = vpow.pop %v1279
        %v1281 = vmul.f32 %v1276, 1.442695
        %v1282 = vpow.pop %v1281
        %v1283 = vsel %vm888, %v1278, 0.0
        %1284 = vadd.xlane.f32.xlu0 %v1283
        %v1285 = vpop.xlane.xlu0 %1284
        %v1286 = vsel %vm888, %v1280, 0.0
        %1287 = vadd.xlane.f32.xlu0 %v1286
        %v1288 = vpop.xlane.xlu0 %1287
        %v1289 = vsel %vm888, %v1282, 0.0
        %1290 = vadd.xlane.f32.xlu0 %v1289
        %v1291 = vpop.xlane.xlu0 %1290
        %v1292 = vrcp.pop %v1285
        %v1293 = vrcp.pop %v1288
        %v1294 = vrcp.pop %v1291
        %v1295 = vmul.f32 %v1278, %v1292
        %v1296 = vmul.f32 %v1280, %v1293
        %v1297 = vmul.f32 %v1282, %v1294
        %v1298 = vpack.c.bf16 %v1296, %v1295
        %v1299 = vpack.c.bf16 %v1297, %v1297
        %1300 = vrot.lane.b32.xlu0 %v1187, 48
        %v1301 = vpop.permute.xlu0 %1300
        %1302 = vrot.lane.b32.xlu0 %v1188, 48
        %v1303 = vpop.permute.xlu0 %1302
        %v1306 = vsel %vm888, %v1298, 0
        %v1309 = vsel %vm888, %v1299, 0
        %v1312 = vsel %vm935, %v1303, 0
        %1314 = vmatprep.subr.bf16.mxu0 0
        %1315 = vmatpush1.bf16.msra.mxu0 %v1301
        %1316 = vmatprep.subr.bf16.mxu0 0
        %1317 = vmatpush1.bf16.msra.mxu0 %v1312
        %1318 = vmatprep.subr.bf16.mxu0 0
        %1319 = vmatpush1.bf16.msra.mxu0 0
        %1320 = vmatprep.subr.bf16.mxu0 0
        %1321 = vmatpush1.bf16.msra.mxu0 0
        %1322 = vmatprep.subr.bf16.mxu0 0
        %1323 = vmatpush1.bf16.msra.mxu0 0
        %1324 = vmatprep.subr.bf16.mxu0 0
        %1325 = vmatpush1.bf16.msra.mxu0 0
        %1326 = vmatprep.subr.bf16.mxu0 0
        %1327 = vmatpush1.bf16.msra.mxu0 0
        %1328 = vmatprep.subr.bf16.mxu0 0
        %1329 = vmatpush1.bf16.msra.mxu0 0
        %1330 = vmatprep.subr.bf16.mxu0 0
        %1331 = vmatpush1.bf16.msra.mxu0 0
        %1332 = vmatprep.subr.bf16.mxu0 0
        %1333 = vmatpush1.bf16.msra.mxu0 0
        %1334 = vmatprep.subr.bf16.mxu0 0
        %1335 = vmatpush1.bf16.msra.mxu0 0
        %1336 = vmatprep.subr.bf16.mxu0 0
        %1337 = vmatpush1.bf16.msra.mxu0 0
        %1338 = vmatprep.subr.bf16.mxu0 0
        %1339 = vmatpush1.bf16.msra.mxu0 0
        %1340 = vmatprep.subr.bf16.mxu0 0
        %1341 = vmatpush1.bf16.msra.mxu0 0
        %1342 = vmatprep.subr.bf16.mxu0 0
        %1343 = vmatpush1.bf16.msra.mxu0 0
        %1344 = vmatprep.subr.bf16.mxu0 0
        %1345 = vmatpush1.bf16.msra.mxu0 0
        %1346 = vmatprep.mubr.bf16.mxu0 0
        %1347 = vmatmul.mubr.bf16.gmra.mrb[0].mxu0 %v1306
        %v1348 = vpop.f32.mrb[0].mxu0
        %v1349 = vadd.f32 0.0, %v1348
        %v1350 = vpop.f32.mrb[0].mxu0
        %v1351 = vpop.f32.mrb[0].mxu0
        %v1352 = vadd.f32 0.0, %v1351
        %v1353 = vpop.f32.mrb[0].mxu0
        %1354 = vmatprep.mubr.bf16.mxu0 0
        %1355 = vmatmul.mubr.bf16.gmra.mrb[0].mxu0 %v1309
        %v1356 = vpop.f32.mrb[0].mxu0
        %v1357 = vadd.f32 0.0, %v1356
        %v1358 = vpop.f32.mrb[0].mxu0
        %v1359 = vpop.f32.mrb[0].mxu0
        %v1360 = vpop.f32.mrb[0].mxu0
        %1361 = vdwg.mxu0
        %1365 = vrot.lane.b32.xlu0 %v1349, 16
        %v1366 = vpop.permute.xlu0 %1365
        %1367 = vrot.lane.b32.xlu0 %v1352, 16
        %v1368 = vpop.permute.xlu0 %1367
        %1369 = vrot.lane.b32.xlu0 %v1357, 16
        %v1370 = vpop.permute.xlu0 %1369
        %vm1374 = vcmask 195712
        %1375 = vst.msk [vmem:[#allocation3] sm:$0xff] %vm1374, %v1366
        %1376 = vst.msk [vmem:[#allocation3 + $0x8] sm:$0xff] %vm1374, %v1368
        %1377 = vst.msk [vmem:[#allocation3 + $0x10] sm:$0xff] %vm1374, %v1370
        %v1378 = vld [vmem:[#allocation2] sm:$0xff]
        %v1379 = vld [vmem:[#allocation2 + $0x8] sm:$0xff]
        %v1380 = vld [vmem:[#allocation2 + $0x10] sm:$0xff]
        %v1381 = vpack.c.bf16 %v1379, %v1378
        %v1382 = vpack.c.bf16 %v1380, %v1380
        %1385 = vrot.lane.b32.xlu0 %v1381, 104
        %v1386 = vpop.permute.xlu0 %1385
        %1387 = vrot.lane.b32.xlu0 %v1382, 104
        %v1388 = vpop.permute.xlu0 %1387
        %1389 = vrot.lane.b32.xlu0 %v1381, 72
        %v1390 = vpop.permute.xlu0 %1389
        %1391 = vrot.lane.b32.xlu0 %v1382, 72
        %v1392 = vpop.permute.xlu0 %1391
        %v1394 = vsel %vm819, %v1386, 0
        %v1397 = vsel %vm819, %v1388, 0
        %v1400 = vsel %vm819, %v1390, 0
        %v1403 = vsel %vm819, %v1392, 0
        %1405 = vmatprep.subr.bf16.mxu0 0
        %1406 = vmatpush1.bf16.xpose.msra.mxu0 %v1400
        %1407 = vmatprep.subr.bf16.mxu0 0
        %1408 = vmatpush1.bf16.xpose.msra.mxu0 %v1403
        %1409 = vmatprep.subr.bf16.mxu0 0
        %1410 = vmatpush1.bf16.xpose.msra.mxu0 0
        %1411 = vmatprep.subr.bf16.mxu0 0
        %1412 = vmatpush1.bf16.xpose.msra.mxu0 0
        %1413 = vmatprep.subr.bf16.mxu0 0
        %1414 = vmatpush1.bf16.xpose.msra.mxu0 0
        %1415 = vmatprep.subr.bf16.mxu0 0
        %1416 = vmatpush1.bf16.xpose.msra.mxu0 0
        %1417 = vmatprep.subr.bf16.mxu0 0
        %1418 = vmatpush1.bf16.xpose.msra.mxu0 0
        %1419 = vmatprep.subr.bf16.mxu0 0
        %1420 = vmatpush1.bf16.xpose.msra.mxu0 0
        %1421 = vmatprep.subr.bf16.mxu0 0
        %1422 = vmatpush1.bf16.xpose.msra.mxu0 0
        %1423 = vmatprep.subr.bf16.mxu0 0
        %1424 = vmatpush1.bf16.xpose.msra.mxu0 0
        %1425 = vmatprep.subr.bf16.mxu0 0
        %1426 = vmatpush1.bf16.xpose.msra.mxu0 0
        %1427 = vmatprep.subr.bf16.mxu0 0
        %1428 = vmatpush1.bf16.xpose.msra.mxu0 0
        %1429 = vmatprep.subr.bf16.mxu0 0
        %1430 = vmatpush1.bf16.xpose.msra.mxu0 0
        %1431 = vmatprep.subr.bf16.mxu0 0
        %1432 = vmatpush1.bf16.xpose.msra.mxu0 0
        %1433 = vmatprep.subr.bf16.mxu0 0
        %1434 = vmatpush1.bf16.xpose.msra.mxu0 0
        %1435 = vmatprep.subr.bf16.mxu0 0
        %1436 = vmatpush1.bf16.xpose.msra.mxu0 0
        %1437 = vmatprep.mubr.bf16.mxu0 0
        %1438 = vmatmul.mubr.bf16.gmra.mrb[0].mxu0 %v1394
        %v1439 = vpop.f32.mrb[0].mxu0
        %v1440 = vadd.f32 0.0, %v1439
        %v1441 = vpop.f32.mrb[0].mxu0
        %v1442 = vpop.f32.mrb[0].mxu0
        %v1443 = vadd.f32 0.0, %v1442
        %v1444 = vpop.f32.mrb[0].mxu0
        %1445 = vmatprep.mubr.bf16.mxu0 0
        %1446 = vmatmul.mubr.bf16.gmra.mrb[0].mxu0 %v1397
        %v1447 = vpop.f32.mrb[0].mxu0
        %v1448 = vadd.f32 0.0, %v1447
        %v1449 = vpop.f32.mrb[0].mxu0
        %v1450 = vpop.f32.mrb[0].mxu0
        %v1451 = vpop.f32.mrb[0].mxu0
        %1452 = vdwg.mxu0
        %v1453 = vmul.f32 %v1440, 0.35355338
        %v1454 = vmul.f32 %v1443, 0.35355338
        %v1455 = vmul.f32 %v1448, 0.35355338
        %v1456 = vsel %vm884, %v1453, -1e+30
        %v1457 = vsel %vm884, %v1454, -1e+30
        %v1458 = vsel %vm884, %v1455, -1e+30
        %v1459 = vsel %vm888, %v1456, -inf
        %1460 = vmax.xlane.f32.xlu0 %v1459
        %v1461 = vpop.xlane.xlu0 %1460
        %v1462 = vsel %vm888, %v1457, -inf
        %1463 = vmax.xlane.f32.xlu0 %v1462
        %v1464 = vpop.xlane.xlu0 %1463
        %v1465 = vsel %vm888, %v1458, -inf
        %1466 = vmax.xlane.f32.xlu0 %v1465
        %v1467 = vpop.xlane.xlu0 %1466
        %v1468 = vsub.f32 %v1456, %v1461
        %v1469 = vsub.f32 %v1457, %v1464
        %v1470 = vsub.f32 %v1458, %v1467
        %v1471 = vmul.f32 %v1468, 1.442695
        %v1472 = vpow.pop %v1471
        %v1473 = vmul.f32 %v1469, 1.442695
        %v1474 = vpow.pop %v1473
        %v1475 = vmul.f32 %v1470, 1.442695
        %v1476 = vpow.pop %v1475
        %v1477 = vsel %vm888, %v1472, 0.0
        %1478 = vadd.xlane.f32.xlu0 %v1477
        %v1479 = vpop.xlane.xlu0 %1478
        %v1480 = vsel %vm888, %v1474, 0.0
        %1481 = vadd.xlane.f32.xlu0 %v1480
        %v1482 = vpop.xlane.xlu0 %1481
        %v1483 = vsel %vm888, %v1476, 0.0
        %1484 = vadd.xlane.f32.xlu0 %v1483
        %v1485 = vpop.xlane.xlu0 %1484
        %v1486 = vrcp.pop %v1479
        %v1487 = vrcp.pop %v1482
        %v1488 = vrcp.pop %v1485
        %v1489 = vmul.f32 %v1472, %v1486
        %v1490 = vmul.f32 %v1474, %v1487
        %v1491 = vmul.f32 %v1476, %v1488
        %v1492 = vpack.c.bf16 %v1490, %v1489
        %v1493 = vpack.c.bf16 %v1491, %v1491
        %1494 = vrot.lane.b32.xlu0 %v1381, 40
        %v1495 = vpop.permute.xlu0 %1494
        %1496 = vrot.lane.b32.xlu0 %v1382, 40
        %v1497 = vpop.permute.xlu0 %1496
        %v1500 = vsel %vm888, %v1492, 0
        %v1503 = vsel %vm888, %v1493, 0
        %v1506 = vsel %vm935, %v1497, 0
        %1508 = vmatprep.subr.bf16.mxu0 0
        %1509 = vmatpush1.bf16.msra.mxu0 %v1495
        %1510 = vmatprep.subr.bf16.mxu0 0
        %1511 = vmatpush1.bf16.msra.mxu0 %v1506
        %1512 = vmatprep.subr.bf16.mxu0 0
        %1513 = vmatpush1.bf16.msra.mxu0 0
        %1514 = vmatprep.subr.bf16.mxu0 0
        %1515 = vmatpush1.bf16.msra.mxu0 0
        %1516 = vmatprep.subr.bf16.mxu0 0
        %1517 = vmatpush1.bf16.msra.mxu0 0
        %1518 = vmatprep.subr.bf16.mxu0 0
        %1519 = vmatpush1.bf16.msra.mxu0 0
        %1520 = vmatprep.subr.bf16.mxu0 0
        %1521 = vmatpush1.bf16.msra.mxu0 0
        %1522 = vmatprep.subr.bf16.mxu0 0
        %1523 = vmatpush1.bf16.msra.mxu0 0
        %1524 = vmatprep.subr.bf16.mxu0 0
        %1525 = vmatpush1.bf16.msra.mxu0 0
        %1526 = vmatprep.subr.bf16.mxu0 0
        %1527 = vmatpush1.bf16.msra.mxu0 0
        %1528 = vmatprep.subr.bf16.mxu0 0
        %1529 = vmatpush1.bf16.msra.mxu0 0
        %1530 = vmatprep.subr.bf16.mxu0 0
        %1531 = vmatpush1.bf16.msra.mxu0 0
        %1532 = vmatprep.subr.bf16.mxu0 0
        %1533 = vmatpush1.bf16.msra.mxu0 0
        %1534 = vmatprep.subr.bf16.mxu0 0
        %1535 = vmatpush1.bf16.msra.mxu0 0
        %1536 = vmatprep.subr.bf16.mxu0 0
        %1537 = vmatpush1.bf16.msra.mxu0 0
        %1538 = vmatprep.subr.bf16.mxu0 0
        %1539 = vmatpush1.bf16.msra.mxu0 0
        %1540 = vmatprep.mubr.bf16.mxu0 0
        %1541 = vmatmul.mubr.bf16.gmra.mrb[0].mxu0 %v1500
        %v1542 = vpop.f32.mrb[0].mxu0
        %v1543 = vadd.f32 0.0, %v1542
        %v1544 = vpop.f32.mrb[0].mxu0
        %v1545 = vpop.f32.mrb[0].mxu0
        %v1546 = vadd.f32 0.0, %v1545
        %v1547 = vpop.f32.mrb[0].mxu0
        %1548 = vmatprep.mubr.bf16.mxu0 0
        %1549 = vmatmul.mubr.bf16.gmra.mrb[0].mxu0 %v1503
        %v1550 = vpop.f32.mrb[0].mxu0
        %v1551 = vadd.f32 0.0, %v1550
        %v1552 = vpop.f32.mrb[0].mxu0
        %v1553 = vpop.f32.mrb[0].mxu0
        %v1554 = vpop.f32.mrb[0].mxu0
        %1555 = vdwg.mxu0
        %1559 = vrot.lane.b32.xlu0 %v1543, 24
        %v1560 = vpop.permute.xlu0 %1559
        %1561 = vrot.lane.b32.xlu0 %v1546, 24
        %v1562 = vpop.permute.xlu0 %1561
        %1563 = vrot.lane.b32.xlu0 %v1551, 24
        %v1564 = vpop.permute.xlu0 %1563
        %vm1568 = vcmask 261312
        %1569 = vst.msk [vmem:[#allocation3] sm:$0xff] %vm1568, %v1560
        %1570 = vst.msk [vmem:[#allocation3 + $0x8] sm:$0xff] %vm1568, %v1562
        %1571 = vst.msk [vmem:[#allocation3 + $0x10] sm:$0xff] %vm1568, %v1564
        %v1572 = vld [vmem:[#allocation3] sm:$0xff]
        %v1573 = vld [vmem:[#allocation3 + $0x8] sm:$0xff]
        %v1574 = vld [vmem:[#allocation3 + $0x10] sm:$0xff]
        %v1575 = vpack.c.bf16 %v1573, %v1572
        %v1576 = vpack.c.bf16 %v1574, %v1574
        %v1577 = vld [vmem:[#allocation13] sm:$0xf]
        %v1578 = vld [vmem:[#allocation13 + $0x4] sm:$0xf]
        %v1579 = vld [vmem:[#allocation13 + $0x8] sm:$0xf]
        %v1580 = vld [vmem:[#allocation13 + $0xc] sm:$0xf]
        %v1581 = vld [vmem:[#allocation15] sm:$0x1]
        %v1583 = vlaneseq
        %v1584 = vshrl.u32 %v1583, 7
        %v1585 = vsub.s32 0, %v1584
        %v1586 = vrot.slane %v1581, %v1585
        %v1592 = vunpack.c.l.b16 %v1577
        %v1593 = vunpack.c.l.b16 %v1578
        %v1594 = vunpack.c.l.b16 %v1579
        %v1595 = vunpack.c.l.b16 %v1580
        %v1596 = vpack.c.b16 %v1593, %v1592
        %v1597 = vpack.c.b16 %v1595, %v1594
        %vm1600 = vcmask 261120
        %v1602 = vsel %vm1600, %v1575, 0
        %v1605 = vsel %vm1600, %v1576, 0
        %1607 = vmatprep.subr.bf16.mxu0 0
        %1608 = vmatpush1.bf16.msra.mxu0 %v1596
        %1609 = vmatprep.subr.bf16.mxu0 0
        %1610 = vmatpush1.bf16.msra.mxu0 %v1597
        %1611 = vmatprep.subr.bf16.mxu0 0
        %1612 = vmatpush1.bf16.msra.mxu0 0
        %1613 = vmatprep.subr.bf16.mxu0 0
        %1614 = vmatpush1.bf16.msra.mxu0 0
        %1615 = vmatprep.subr.bf16.mxu0 0
        %1616 = vmatpush1.bf16.msra.mxu0 0
        %1617 = vmatprep.subr.bf16.mxu0 0
        %1618 = vmatpush1.bf16.msra.mxu0 0
        %1619 = vmatprep.subr.bf16.mxu0 0
        %1620 = vmatpush1.bf16.msra.mxu0 0
        %1621 = vmatprep.subr.bf16.mxu0 0
        %1622 = vmatpush1.bf16.msra.mxu0 0
        %1623 = vmatprep.subr.bf16.mxu0 0
        %1624 = vmatpush1.bf16.msra.mxu0 0
        %1625 = vmatprep.subr.bf16.mxu0 0
        %1626 = vmatpush1.bf16.msra.mxu0 0
        %1627 = vmatprep.subr.bf16.mxu0 0
        %1628 = vmatpush1.bf16.msra.mxu0 0
        %1629 = vmatprep.subr.bf16.mxu0 0
        %1630 = vmatpush1.bf16.msra.mxu0 0
        %1631 = vmatprep.subr.bf16.mxu0 0
        %1632 = vmatpush1.bf16.msra.mxu0 0
        %1633 = vmatprep.subr.bf16.mxu0 0
        %1634 = vmatpush1.bf16.msra.mxu0 0
        %1635 = vmatprep.subr.bf16.mxu0 0
        %1636 = vmatpush1.bf16.msra.mxu0 0
        %1637 = vmatprep.subr.bf16.mxu0 0
        %1638 = vmatpush1.bf16.msra.mxu0 0
        %1639 = vmatprep.mubr.bf16.mxu0 0
        %1640 = vmatmul.mubr.bf16.gmra.mrb[0].mxu0 %v1602
        %v1641 = vpop.f32.mrb[0].mxu0
        %v1642 = vadd.f32 %v1586, %v1641
        %v1643 = vpop.f32.mrb[0].mxu0
        %v1644 = vpop.f32.mrb[0].mxu0
        %v1645 = vadd.f32 %v1586, %v1644
        %v1646 = vpop.f32.mrb[0].mxu0
        %1647 = vmatprep.mubr.bf16.mxu0 0
        %1648 = vmatmul.mubr.bf16.gmra.mrb[0].mxu0 %v1605
        %v1649 = vpop.f32.mrb[0].mxu0
        %v1650 = vadd.f32 %v1586, %v1649
        %v1651 = vpop.f32.mrb[0].mxu0
        %v1652 = vpop.f32.mrb[0].mxu0
        %v1653 = vpop.f32.mrb[0].mxu0
        %1654 = vdwg.mxu0
        %v1655 = vadd.f32 %v618, %v1642
        %v1656 = vadd.f32 %v619, %v1645
        %v1657 = vadd.f32 %v620, %v1650
        %v1658 = vld [vmem:[#allocation16] sm:$0x1]
        %v1659 = vld [vmem:[#allocation18] sm:$0x1]
        %1660 = vadd.xlane.f32.xlu0 %v1655
        %v1661 = vpop.xlane.xlu0 %1660
        %1662 = vadd.xlane.f32.xlu0 %v1656
        %v1663 = vpop.xlane.xlu0 %1662
        %1664 = vadd.xlane.f32.xlu0 %v1657
        %v1665 = vpop.xlane.xlu0 %1664
        %v1666 = vmul.f32 %v1661, 0.03125
        %v1667 = vmul.f32 %v1663, 0.03125
        %v1668 = vmul.f32 %v1665, 0.03125
        %v1669 = vsub.f32 %v1655, %v1666
        %v1670 = vsub.f32 %v1656, %v1667
        %v1671 = vsub.f32 %v1657, %v1668
        %v1672 = vmul.f32 %v1669, %v627
        %v1673 = vmul.f32 %v1670, %v627
        %v1674 = vmul.f32 %v1671, %v627
        %v1675 = vmul.f32 %v1672, %v1672
        %v1676 = vmul.f32 %v1673, %v1673
        %v1677 = vmul.f32 %v1674, %v1674
        %1678 = vadd.xlane.f32.xlu0 %v1675
        %v1679 = vpop.xlane.xlu0 %1678
        %1680 = vadd.xlane.f32.xlu0 %v1676
        %v1681 = vpop.xlane.xlu0 %1680
        %1682 = vadd.xlane.f32.xlu0 %v1677
        %v1683 = vpop.xlane.xlu0 %1682
        %v1684 = vmul.f32 %v1679, 0.03125
        %v1685 = vmul.f32 %v1681, 0.03125
        %v1686 = vmul.f32 %v1683, 0.03125
        %v1687 = vadd.f32 %v1684, 1e-05
        %v1688 = vadd.f32 %v1685, 1e-05
        %v1689 = vadd.f32 %v1686, 1e-05
        %v1690 = vrsqrt.pop %v1687
        %v1691 = vrsqrt.pop %v1688
        %v1692 = vrsqrt.pop %v1689
        %v1693 = vmul.f32 %v1672, %v1690
        %v1694 = vmul.f32 %v1673, %v1691
        %v1695 = vmul.f32 %v1674, %v1692
        %v1697 = vlaneseq
        %v1698 = vshrl.u32 %v1697, 7
        %v1699 = vsub.s32 0, %v1698
        %v1700 = vrot.slane %v1658, %v1699
        %v1702 = vmul.f32 %v1693, %v1700
        %v1703 = vmul.f32 %v1694, %v1700
        %v1704 = vmul.f32 %v1695, %v1700
        %v1706 = vlaneseq
        %v1707 = vshrl.u32 %v1706, 7
        %v1708 = vsub.s32 0, %v1707
        %v1709 = vrot.slane %v1659, %v1708
        %v1711 = vadd.f32 %v1702, %v1709
        %v1712 = vadd.f32 %v1703, %v1709
        %v1713 = vadd.f32 %v1704, %v1709
        %v1714 = vpack.c.bf16 %v1712, %v1711
        %v1715 = vpack.c.bf16 %v1713, %v1713
        %v1716 = vld [vmem:[#allocation19] sm:$0xf]
        %v1717 = vld [vmem:[#allocation19 + $0x4] sm:$0xf]
        %v1718 = vld [vmem:[#allocation19 + $0x8] sm:$0xf]
        %v1719 = vld [vmem:[#allocation19 + $0xc] sm:$0xf]
        %v1720 = vld [vmem:[#allocation19 + $0x10] sm:$0xf]
        %v1721 = vld [vmem:[#allocation19 + $0x14] sm:$0xf]
        %v1722 = vld [vmem:[#allocation19 + $0x18] sm:$0xf]
        %v1723 = vld [vmem:[#allocation19 + $0x1c] sm:$0xf]
        %v1724 = vld [vmem:[#allocation19 + $0x20] sm:$0xf]
        %v1725 = vld [vmem:[#allocation19 + $0x24] sm:$0xf]
        %v1726 = vld [vmem:[#allocation19 + $0x28] sm:$0xf]
        %v1727 = vld [vmem:[#allocation19 + $0x2c] sm:$0xf]
        %v1728 = vld [vmem:[#allocation19 + $0x30] sm:$0xf]
        %v1729 = vld [vmem:[#allocation19 + $0x34] sm:$0xf]
        %v1730 = vld [vmem:[#allocation19 + $0x38] sm:$0xf]
        %v1731 = vld [vmem:[#allocation19 + $0x3c] sm:$0xf]
        %v1732 = vld [vmem:[#allocation21] sm:$0x1]
        %v1734 = vlaneseq
        %v1735 = vshrl.u32 %v1734, 7
        %v1736 = vsub.s32 0, %v1735
        %v1737 = vrot.slane %v1732, %v1736
        %v1755 = vunpack.c.l.b16 %v1716
        %v1756 = vunpack.c.l.b16 %v1717
        %v1757 = vunpack.c.l.b16 %v1718
        %v1758 = vunpack.c.l.b16 %v1719
        %v1759 = vunpack.c.l.b16 %v1720
        %v1760 = vunpack.c.l.b16 %v1721
        %v1761 = vunpack.c.l.b16 %v1722
        %v1762 = vunpack.c.l.b16 %v1723
        %v1763 = vunpack.c.l.b16 %v1724
        %v1764 = vunpack.c.l.b16 %v1725
        %v1765 = vunpack.c.l.b16 %v1726
        %v1766 = vunpack.c.l.b16 %v1727
        %v1767 = vunpack.c.l.b16 %v1728
        %v1768 = vunpack.c.l.b16 %v1729
        %v1769 = vunpack.c.l.b16 %v1730
        %v1770 = vunpack.c.l.b16 %v1731
        %v1771 = vpack.c.b16 %v1756, %v1755
        %v1772 = vpack.c.b16 %v1758, %v1757
        %v1773 = vpack.c.b16 %v1760, %v1759
        %v1774 = vpack.c.b16 %v1762, %v1761
        %v1775 = vpack.c.b16 %v1764, %v1763
        %v1776 = vpack.c.b16 %v1766, %v1765
        %v1777 = vpack.c.b16 %v1768, %v1767
        %v1778 = vpack.c.b16 %v1770, %v1769
        %1787 = vmatprep.subr.bf16.mxu0 0
        %1788 = vmatpush1.bf16.msra.mxu0 %v1771
        %1789 = vmatprep.subr.bf16.mxu0 0
        %1790 = vmatpush1.bf16.msra.mxu0 %v1772
        %1791 = vmatprep.subr.bf16.mxu0 0
        %1792 = vmatpush1.bf16.msra.mxu0 %v1773
        %1793 = vmatprep.subr.bf16.mxu0 0
        %1794 = vmatpush1.bf16.msra.mxu0 %v1774
        %1795 = vmatprep.subr.bf16.mxu0 0
        %1796 = vmatpush1.bf16.msra.mxu0 %v1775
        %1797 = vmatprep.subr.bf16.mxu0 0
        %1798 = vmatpush1.bf16.msra.mxu0 %v1776
        %1799 = vmatprep.subr.bf16.mxu0 0
        %1800 = vmatpush1.bf16.msra.mxu0 %v1777
        %1801 = vmatprep.subr.bf16.mxu0 0
        %1802 = vmatpush1.bf16.msra.mxu0 %v1778
        %1803 = vmatprep.subr.bf16.mxu0 0
        %1804 = vmatpush1.bf16.msra.mxu0 0
        %1805 = vmatprep.subr.bf16.mxu0 0
        %1806 = vmatpush1.bf16.msra.mxu0 0
        %1807 = vmatprep.subr.bf16.mxu0 0
        %1808 = vmatpush1.bf16.msra.mxu0 0
        %1809 = vmatprep.subr.bf16.mxu0 0
        %1810 = vmatpush1.bf16.msra.mxu0 0
        %1811 = vmatprep.subr.bf16.mxu0 0
        %1812 = vmatpush1.bf16.msra.mxu0 0
        %1813 = vmatprep.subr.bf16.mxu0 0
        %1814 = vmatpush1.bf16.msra.mxu0 0
        %1815 = vmatprep.subr.bf16.mxu0 0
        %1816 = vmatpush1.bf16.msra.mxu0 0
        %1817 = vmatprep.subr.bf16.mxu0 0
        %1818 = vmatpush1.bf16.msra.mxu0 0
        %1819 = vmatprep.mubr.bf16.mxu0 0
        %1820 = vmatmul.mubr.bf16.gmra.mrb[0].mxu0 %v1714
        %v1821 = vpop.f32.mrb[0].mxu0
        %v1822 = vadd.f32 %v1737, %v1821
        %v1823 = vpop.f32.mrb[0].mxu0
        %v1824 = vpop.f32.mrb[0].mxu0
        %v1825 = vadd.f32 %v1737, %v1824
        %v1826 = vpop.f32.mrb[0].mxu0
        %1827 = vmatprep.mubr.bf16.mxu0 0
        %1828 = vmatmul.mubr.bf16.gmra.mrb[0].mxu0 %v1715
        %v1829 = vpop.f32.mrb[0].mxu0
        %v1830 = vadd.f32 %v1737, %v1829
        %v1831 = vpop.f32.mrb[0].mxu0
        %v1832 = vpop.f32.mrb[0].mxu0
        %v1833 = vpop.f32.mrb[0].mxu0
        %1834 = vdwg.mxu0
        %v1835 = vmul.f32 %v1822, %v1822
        %v1836 = vmul.f32 %v1825, %v1825
        %v1837 = vmul.f32 %v1830, %v1830
        %v1838 = vmul.f32 %v1822, %v1835
        %v1839 = vmul.f32 %v1825, %v1836
        %v1840 = vmul.f32 %v1830, %v1837
        %v1841 = vmul.f32 %v1838, 0.044715
        %v1842 = vmul.f32 %v1839, 0.044715
        %v1843 = vmul.f32 %v1840, 0.044715
        %v1844 = vadd.f32 %v1822, %v1841
        %v1845 = vadd.f32 %v1825, %v1842
        %v1846 = vadd.f32 %v1830, %v1843
        %v1847 = vmul.f32 %v1844, 0.7978846
        %v1848 = vmul.f32 %v1845, 0.7978846
        %v1849 = vmul.f32 %v1846, 0.7978846
        %v1850 = vtanh.pop %v1847
        %v1851 = vtanh.pop %v1848
        %v1852 = vtanh.pop %v1849
        %v1853 = vadd.f32 %v1850, 1.0
        %v1854 = vadd.f32 %v1851, 1.0
        %v1855 = vadd.f32 %v1852, 1.0
        %v1856 = vmul.f32 %v1853, 0.5
        %v1857 = vmul.f32 %v1854, 0.5
        %v1858 = vmul.f32 %v1855, 0.5
        %v1859 = vmul.f32 %v1822, %v1856
        %v1860 = vmul.f32 %v1825, %v1857
        %v1861 = vmul.f32 %v1830, %v1858
        %v1862 = vpack.c.bf16 %v1860, %v1859
        %v1863 = vpack.c.bf16 %v1861, %v1861
        %v1864 = vld [vmem:[#allocation22] sm:$0xf]
        %v1865 = vld [vmem:[#allocation22 + $0x4] sm:$0xf]
        %v1866 = vld [vmem:[#allocation22 + $0x8] sm:$0xf]
        %v1867 = vld [vmem:[#allocation22 + $0xc] sm:$0xf]
        %v1868 = vld [vmem:[#allocation22 + $0x10] sm:$0xf]
        %v1869 = vld [vmem:[#allocation22 + $0x14] sm:$0xf]
        %v1870 = vld [vmem:[#allocation22 + $0x18] sm:$0xf]
        %v1871 = vld [vmem:[#allocation22 + $0x1c] sm:$0xf]
        %v1872 = vld [vmem:[#allocation22 + $0x20] sm:$0xf]
        %v1873 = vld [vmem:[#allocation22 + $0x24] sm:$0xf]
        %v1874 = vld [vmem:[#allocation22 + $0x28] sm:$0xf]
        %v1875 = vld [vmem:[#allocation22 + $0x2c] sm:$0xf]
        %v1876 = vld [vmem:[#allocation22 + $0x30] sm:$0xf]
        %v1877 = vld [vmem:[#allocation22 + $0x34] sm:$0xf]
        %v1878 = vld [vmem:[#allocation22 + $0x38] sm:$0xf]
        %v1879 = vld [vmem:[#allocation22 + $0x3c] sm:$0xf]
        %v1880 = vld [vmem:[#allocation24] sm:$0x1]
        %v1882 = vlaneseq
        %v1883 = vshrl.u32 %v1882, 7
        %v1884 = vsub.s32 0, %v1883
        %v1885 = vrot.slane %v1880, %v1884
        %v1903 = vunpack.c.l.b16 %v1864
        %v1904 = vunpack.c.l.b16 %v1865
        %v1905 = vunpack.c.l.b16 %v1866
        %v1906 = vunpack.c.l.b16 %v1867
        %v1907 = vunpack.c.l.b16 %v1868
        %v1908 = vunpack.c.l.b16 %v1869
        %v1909 = vunpack.c.l.b16 %v1870
        %v1910 = vunpack.c.l.b16 %v1871
        %v1911 = vunpack.c.l.b16 %v1872
        %v1912 = vunpack.c.l.b16 %v1873
        %v1913 = vunpack.c.l.b16 %v1874
        %v1914 = vunpack.c.l.b16 %v1875
        %v1915 = vunpack.c.l.b16 %v1876
        %v1916 = vunpack.c.l.b16 %v1877
        %v1917 = vunpack.c.l.b16 %v1878
        %v1918 = vunpack.c.l.b16 %v1879
        %v1919 = vpack.c.b16 %v1904, %v1903
        %v1920 = vpack.c.b16 %v1906, %v1905
        %v1921 = vpack.c.b16 %v1908, %v1907
        %v1922 = vpack.c.b16 %v1910, %v1909
        %v1923 = vpack.c.b16 %v1912, %v1911
        %v1924 = vpack.c.b16 %v1914, %v1913
        %v1925 = vpack.c.b16 %v1916, %v1915
        %v1926 = vpack.c.b16 %v1918, %v1917
        %1935 = vmatprep.subr.bf16.mxu0 0
        %1936 = vmatpush1.bf16.msra.mxu0 %v1919
        %1937 = vmatprep.subr.bf16.mxu0 0
        %1938 = vmatpush1.bf16.msra.mxu0 %v1920
        %1939 = vmatprep.subr.bf16.mxu0 0
        %1940 = vmatpush1.bf16.msra.mxu0 %v1921
        %1941 = vmatprep.subr.bf16.mxu0 0
        %1942 = vmatpush1.bf16.msra.mxu0 %v1922
        %1943 = vmatprep.subr.bf16.mxu0 0
        %1944 = vmatpush1.bf16.msra.mxu0 %v1923
        %1945 = vmatprep.subr.bf16.mxu0 0
        %1946 = vmatpush1.bf16.msra.mxu0 %v1924
        %1947 = vmatprep.subr.bf16.mxu0 0
        %1948 = vmatpush1.bf16.msra.mxu0 %v1925
        %1949 = vmatprep.subr.bf16.mxu0 0
        %1950 = vmatpush1.bf16.msra.mxu0 %v1926
        %1951 = vmatprep.subr.bf16.mxu0 0
        %1952 = vmatpush1.bf16.msra.mxu0 0
        %1953 = vmatprep.subr.bf16.mxu0 0
        %1954 = vmatpush1.bf16.msra.mxu0 0
        %1955 = vmatprep.subr.bf16.mxu0 0
        %1956 = vmatpush1.bf16.msra.mxu0 0
        %1957 = vmatprep.subr.bf16.mxu0 0
        %1958 = vmatpush1.bf16.msra.mxu0 0
        %1959 = vmatprep.subr.bf16.mxu0 0
        %1960 = vmatpush1.bf16.msra.mxu0 0
        %1961 = vmatprep.subr.bf16.mxu0 0
        %1962 = vmatpush1.bf16.msra.mxu0 0
        %1963 = vmatprep.subr.bf16.mxu0 0
        %1964 = vmatpush1.bf16.msra.mxu0 0
        %1965 = vmatprep.subr.bf16.mxu0 0
        %1966 = vmatpush1.bf16.msra.mxu0 0
        %1967 = vmatprep.mubr.bf16.mxu0 0
        %1968 = vmatmul.mubr.bf16.gmra.mrb[0].mxu0 %v1862
        %v1969 = vpop.f32.mrb[0].mxu0
        %v1970 = vadd.f32 %v1885, %v1969
        %v1971 = vpop.f32.mrb[0].mxu0
        %v1972 = vpop.f32.mrb[0].mxu0
        %v1973 = vadd.f32 %v1885, %v1972
        %v1974 = vpop.f32.mrb[0].mxu0
        %1975 = vmatprep.mubr.bf16.mxu0 0
        %1976 = vmatmul.mubr.bf16.gmra.mrb[0].mxu0 %v1863
        %v1977 = vpop.f32.mrb[0].mxu0
        %v1978 = vadd.f32 %v1885, %v1977
        %v1979 = vpop.f32.mrb[0].mxu0
        %v1980 = vpop.f32.mrb[0].mxu0
        %v1981 = vpop.f32.mrb[0].mxu0
        %1982 = vdwg.mxu0
        %v1983 = vadd.f32 %v1655, %v1970
        %v1984 = vadd.f32 %v1656, %v1973
        %v1985 = vadd.f32 %v1657, %v1978
        %1986 = vst [vmem:[%s616] sm:$0xff] %v1983
        %1987 = vst [vmem:[%s616 + $0x8] sm:$0xff] %v1984
        %1988 = vst [vmem:[%s616 + $0x10] sm:$0xff] %v1985
        %s1989 = sand.u32 %s322, 1
        %s1990 = scalar_lea.sflag [#allocation6], %s1989
        %s1991 = sand.u32 %s322, 1
        %s1992 = smul.addr %s1991, 24
        %s1993 = scalar_lea.vmem [#allocation25], %s1992
        // Predicated region
        $region125: #{vit_forward.5} parent=71 // pred_check
          %p1994 = pneg %p332
        $region126: #{vit_forward.5} parent=71 // pred_check_branch
          %1996 = sbr.rel (%p1994) target = $region128
        $region127: #{vit_forward.5} parent=71 // pred_region
          %s1998 = ssub.s32 384, 384
          %1999 = vsyncadd %s1990, %s1998
          %s2000 = smul.addr %s36, 3
          %s2001 = smul.addr %s2000, 128
          %s2002 = scalar_lea.hbm %s13, %s2001
          %s2003 = sshll.u32 %s1993, 4
          %s2004 = int_to_ptr.vmem [resolvable:$true] %s2003
          %2009 = dma.vmem_to_hbm [thread:$0]  %s2004, 384, %s2002, %s1990, 128, 128, 8
        $region128: #{vit_forward.5} parent=71 // pred_fallthru
          _
      $region72: #{vit_forward.5} parent=5 // pred_fallthru
        _
      %p2010 = scmp.le.s32.totalorder 2, %s31
      // Predicated region
      $region129: #{vit_forward.5} parent=5 // pred_check
        %p2011 = pneg %p2010
      $region130: #{vit_forward.5} parent=5 // pred_check_branch
        %2013 = sbr.rel (%p2011) target = $region132
      $region131: #{vit_forward.5} parent=5 // pred_region
        %s2014 = ssub.s32 %s31, 2
        // Predicated region
        $region133: #{vit_forward.5} parent=131 // pred_check
          %p2015 = pneg %p338
        $region134: #{vit_forward.5} parent=131 // pred_check_branch
          %2017 = sbr.rel (%p2015) target = $region136
        $region135: #{vit_forward.5} parent=131 // pred_region
          %s2018 = sand.u32 %s323, 1
          %s2019 = scalar_lea.sflag [#allocation6], %s2018
          %s2020 = sand.u32 %s323, 1
          %s2021 = smul.addr %s2020, 24
          %s2022 = scalar_lea.vmem [#allocation25], %s2021
          %2023 = dma.done %s2019, 384
        $region136: #{vit_forward.5} parent=131 // pred_fallthru
          _
      $region132: #{vit_forward.5} parent=5 // pred_fallthru
        _
    $region6: #{vit_forward.5} parent=1 // loop_footer
      %s35 = sadd.s32 1, %s31
    $region7: #{vit_forward.5} parent=1 // loop_footer_branch
      %30 = sbr.rel target = $region3
    $region8: #{vit_forward.5} parent=1 // loop_exit
      _
    %2024 = vsyncpa [#allocation5], 1
    %s2025 = scalar_lea.sflag [#allocation5], 1
    %2026 = vsyncpa %s2025, 1
    %2027 = vsyncpa [#allocation8], 1
    %2028 = vsyncpa [#allocation11], 1
    %2029 = vsyncpa [#allocation14], 1
    %2030 = vsyncpa [#allocation17], 1
    %2031 = vsyncpa [#allocation20], 1
    %2032 = vsyncpa [#allocation23], 1
    %2033 = vsyncpa [#allocation6], 1
    %s2034 = scalar_lea.sflag [#allocation6], 1
    %2035 = vsyncpa %s2034, 1

</llo_original>
